<compile_context>
chip_gen: v7x
topology: tpu7x:2x2x1
jax: 0.10.0
libtpu: 0.0.40
codegen_flags: <defaults>
</compile_context>

<pallas_src>
import jax
import jax.numpy as jnp
import numpy as np
from jax.experimental import pallas as pl
from jax.experimental.pallas import tpu as pltpu

E = 4      # embedding_dim
T = 8      # user-behavior sequence length
H1 = 64    # hidden_unit[0]
H2 = 16    # hidden_unit[1]
EPS = 1e-8
LANE = 128
CHUNK = 128   # lanes per inner-loop iteration (bounds vreg pressure)


def _round_up(x, m):
    return (x + m - 1) // m * m


def _attn_pool_kernel(q_ref, ub_ref, w1q_ref, w1x_ref, d1_ref, w2_ref, d2_ref,
                      fc2_ref, out_ref, x_ref):
    """One grid block = `n_chunks` chunks of 128 batch lanes.

    q_ref  : (n_chunks, E, 128)      stream dtype (bf16/f32)
    ub_ref : (n_chunks, T*E, 128)    stream dtype
    w1q_ref: (H1, E)    (Wq + Wdiff)^T
    w1x_ref: (H1, 2E)   [(Wub - Wdiff)^T | Wprod^T]
    d1_ref : (H1, 5)    cols [b1, a1'=.5(1+alpha), c1'=.5(1-alpha), s1', t1']
    w2_ref : (H2, H1)   W2^T
    d2_ref : (H2, 5)    same layout for layer 2
    fc2_ref: (H2, 2)    cols [w3, b3 (replicated)]
    out_ref: (n_chunks, E, 128)
    x_ref  : (2, 2E, 128) f32 scratch, double-buffered fused layer-1 operand
    """
    n_chunks = q_ref.shape[0]

    def chunk_body(ci, carry):
        q_c = q_ref[ci].astype(jnp.float32)                           # (E, 128)

        # Layer-1 q-term (shared across all T behavior steps) + bias b1.
        qterm = (jnp.dot(w1q_ref[...], q_c, preferred_element_type=jnp.float32)
                 + d1_ref[:, 0:1])                                    # (H1, 128)

        # Hoist the layer-1 Dice parameter lane-broadcasts out of the T loop
        # (JAX does not CSE broadcast_in_dim; at chunk=128 this is 8 vregs).
        a1 = jnp.broadcast_to(d1_ref[:, 1:2], (H1, CHUNK))
        c1 = jnp.broadcast_to(d1_ref[:, 2:3], (H1, CHUNK))
        s1 = jnp.broadcast_to(d1_ref[:, 3:4], (H1, CHUNK))
        t1 = jnp.broadcast_to(d1_ref[:, 4:5], (H1, CHUNK))
        # Layer-2 params are tiny; leave as (H2, 1) columns.
        b2 = d2_ref[:, 0:1]
        a2 = d2_ref[:, 1:2]
        c2 = d2_ref[:, 2:3]
        s2 = d2_ref[:, 3:4]
        t2 = d2_ref[:, 4:5]
        w3 = fc2_ref[:, 0:1]                                          # (H2, 1)
        b3 = fc2_ref[0:1, 1:2]                                        # (1, 1)

        out_acc = jnp.zeros((E, CHUNK), jnp.float32)

        for t in range(T):
            slot = t % 2
            ub_t = ub_ref[ci, pl.ds(t * E, E), :].astype(jnp.float32)  # (E, 128)

            # Fused layer-1 operand [ub_t ; q*ub_t] -> single K=2E MXU dot
            # (one push/pop instead of two per step).
            x_ref[slot, 0:E, :] = ub_t
            x_ref[slot, E:2 * E, :] = q_c * ub_t
            z1 = qterm + jnp.dot(w1x_ref[...], x_ref[slot],
                                 preferred_element_type=jnp.float32)   # (H1, 128)

            # Dice: BN affine, alpha-mix and the sigmoid->tanh constants are
            # all folded wrapper-side; exactly one EUP tanh + 5 VALU ops.
            h1 = z1 * (jnp.tanh(z1 * s1 + t1) * c1 + a1)

            z2 = jnp.dot(w2_ref[...], h1,
                         preferred_element_type=jnp.float32) + b2      # (H2, 128)
            h2 = z2 * (jnp.tanh(z2 * s2 + t2) * c2 + a2)

            # fc2 (16 -> 1): VPU multiply + sublane reduce (no N=1 MXU push).
            score = jnp.sum(w3 * h2, axis=0, keepdims=True) + b3       # (1, 128)
            # TODO(synk): optional attention mask -> jnp.where on `score` here.
            out_acc = out_acc + score * ub_t

        out_ref[ci] = out_acc.astype(out_ref.dtype)
        return carry

    jax.lax.fori_loop(0, n_chunks, chunk_body, 0)


def attention_sequence_pooling(query, user_behavior, params, *,
                               block_b=2048, stream_dtype=jnp.bfloat16):
    """query: [B,1,E], user_behavior: [B,T,E] -> [B,1,E]."""
    B, one, e = query.shape
    _, t_len, _ = user_behavior.shape
    assert e == E and t_len == T and one == 1

    # ---- fold parameters (all static, wrapper-side, f32) ----
    W1 = params["W1"].astype(jnp.float32)                      # (4E, H1)
    w_q, w_ub, w_diff, w_prod = (W1[0:E], W1[E:2 * E],
                                 W1[2 * E:3 * E], W1[3 * E:4 * E])
    w1q = (w_q + w_diff).T                                     # (H1, E)
    w1x = jnp.concatenate([(w_ub - w_diff).T, w_prod.T], axis=1)  # (H1, 2E)

    def fold_dice(dice, bias):
        alpha, gamma, beta, mean, var = dice                   # each (H,)
        scale = gamma * jax.lax.rsqrt(var + EPS)
        shift = beta - mean * scale
        # sigmoid(u) == 0.5*tanh(0.5*u)+0.5; fold the 0.5's + (1-alpha) here.
        return jnp.stack([bias,
                          0.5 * (1.0 + alpha),
                          0.5 * (1.0 - alpha),
                          0.5 * scale,
                          0.5 * shift], axis=1).astype(jnp.float32)   # (H, 5)

    d1p = fold_dice(params["dice1"], params["b1"])             # (H1, 5)
    d2p = fold_dice(params["dice2"], params["b2"])             # (H2, 5)
    w2T = params["W2"].T.astype(jnp.float32)                   # (H2, H1)
    fc2p = jnp.stack(
        [params["W3"][:, 0],
         jnp.broadcast_to(params["b3"].reshape(()), (H2,))], axis=1
    ).astype(jnp.float32)                                      # (H2, 2)

    # ---- block / grid selection (batch on lanes) ----
    block_b = max(LANE, block_b // LANE * LANE)
    bp = _round_up(max(B, 1), LANE)
    if bp >= 2 * LANE:
        # Keep at least 2 grid steps so both v7x TensorCores get work.
        blk = min(block_b, max(LANE, (bp // 2) // LANE * LANE))
    else:
        blk = bp
    bp = _round_up(bp, blk)
    grid = (bp // blk,)
    nchunk_blk = blk // CHUNK
    nchunk_tot = bp // CHUNK

    # ---- input layout: (num_chunks, rows, 128); cast to bf16 BEFORE the
    #      transpose so the layout pass only moves half the bytes. ----
    qs = query.reshape(B, E).astype(stream_dtype)
    us = user_behavior.reshape(B, T * E).astype(stream_dtype)
    qs = jnp.pad(qs, ((0, bp - B), (0, 0)))
    us = jnp.pad(us, ((0, bp - B), (0, 0)))
    q3 = qs.reshape(nchunk_tot, CHUNK, E).transpose(0, 2, 1)        # (nc, E, 128)
    u3 = us.reshape(nchunk_tot, CHUNK, T * E).transpose(0, 2, 1)    # (nc, T*E, 128)

    sd_bytes = np.dtype(stream_dtype).itemsize
    od_bytes = np.dtype(query.dtype).itemsize
    flops = int(bp) * (2 * H1 * E
                       + T * (2 * H1 * 2 * E + 2 * H2 * H1
                              + 7 * (H1 + H2) + 3 * H2 + 6 * E))
    transcendentals = int(bp) * T * (H1 + H2)
    bytes_accessed = (int(bp) * (E * sd_bytes + T * E * sd_bytes + E * od_bytes)
                      + 4 * int(w1q.size + w1x.size + d1p.size
                                + w2T.size + d2p.size + fc2p.size))

    full = lambda shape: pl.BlockSpec(shape, lambda i: tuple(0 for _ in shape))

    out3 = pl.pallas_call(
        _attn_pool_kernel,
        out_shape=jax.ShapeDtypeStruct((nchunk_tot, E, CHUNK), query.dtype),
        grid=grid,
        in_specs=[
            pl.BlockSpec((nchunk_blk, E, CHUNK), lambda i: (i, 0, 0)),      # q
            pl.BlockSpec((nchunk_blk, T * E, CHUNK), lambda i: (i, 0, 0)),  # ub
            full((H1, E)),        # (Wq+Wdiff)^T
            full((H1, 2 * E)),    # [(Wub-Wdiff)^T | Wprod^T]
            full((H1, 5)),        # dice1 (+ b1)
            full((H2, H1)),       # W2^T
            full((H2, 5)),        # dice2 (+ b2)
            full((H2, 2)),        # W3 + b3
        ],
        out_specs=pl.BlockSpec((nchunk_blk, E, CHUNK), lambda i: (i, 0, 0)),
        scratch_shapes=[pltpu.VMEM((2, 2 * E, CHUNK), jnp.float32)],
        compiler_params=pltpu.CompilerParams(
            dimension_semantics=("parallel",)),
        cost_estimate=pl.CostEstimate(
            flops=flops, bytes_accessed=bytes_accessed,
            transcendentals=transcendentals),
    )(q3, u3, w1q, w1x, d1p, w2T, d2p, fc2p)

    out2 = out3.transpose(0, 2, 1).reshape(bp, E)[:B]
    return out2.reshape(B, 1, E)


# ----------------------------- reference -----------------------------------

def _dice_ref(x, d):
    """Dice activation, eval mode. d rows: [alpha, gamma, beta, mean, var]."""
    alpha, gamma, beta, mean, var = d[0], d[1], d[2], d[3], d[4]
    x_norm = (x - mean) * jax.lax.rsqrt(var + EPS) * gamma + beta
    x_p = jax.nn.sigmoid(x_norm)
    return alpha * (1.0 - x_p) * x + x_p * x


def _reference(query, ub, params):
    """Pure-JAX reference mirroring the PyTorch module (eval, mask=None)."""
    qx = jnp.broadcast_to(query, ub.shape)
    att = jnp.concatenate([qx, ub, qx - ub, qx * ub], axis=-1)      # [B,T,4E]
    h1 = _dice_ref(att @ params["W1"] + params["b1"], params["dice1"])
    h2 = _dice_ref(h1 @ params["W2"] + params["b2"], params["dice2"])
    score = h2 @ params["W3"] + params["b3"]                        # [B,T,1]
    score = jnp.swapaxes(score, 1, 2)                               # [B,1,T]
    return jnp.matmul(score, ub)                                    # [B,1,E]


def _init_params(key):
    ks = jax.random.split(key, 8)

    def linear(kw, kb, fan_in, fan_out):
        bound = 1.0 / np.sqrt(fan_in)
        w = jax.random.uniform(kw, (fan_in, fan_out), jnp.float32, -bound, bound)
        b = jax.random.uniform(kb, (fan_out,), jnp.float32, -bound, bound)
        return w, b

    W1, b1 = linear(ks[0], ks[1], 4 * E, H1)
    W2, b2 = linear(ks[2], ks[3], H1, H2)
    W3, b3 = linear(ks[4], ks[5], H2, 1)

    def dice_params(k, h):
        alpha = 0.25 * jax.random.normal(k, (h,), jnp.float32)
        gamma = jnp.ones((h,), jnp.float32)        # BN weight
        beta = jnp.zeros((h,), jnp.float32)        # BN bias
        mean = jnp.zeros((h,), jnp.float32)        # BN running_mean (eval)
        var = jnp.ones((h,), jnp.float32)          # BN running_var  (eval)
        return jnp.stack([alpha, gamma, beta, mean, var], axis=0)   # (5, h)

    return {
        "W1": W1, "b1": b1, "dice1": dice_params(ks[6], H1),
        "W2": W2, "b2": b2, "dice2": dice_params(ks[7], H2),
        "W3": W3, "b3": b3,
    }


if __name__ == "__main__":
    key = jax.random.PRNGKey(0)
    kq, kub, kp = jax.random.split(key, 3)

    B = 2
    query_ad = jax.random.normal(kq, (B, 1, E), jnp.float32)
    user_behavior = jax.random.normal(kub, (B, T, E), jnp.float32)
    params = _init_params(kp)

    # f32 streaming: tight check against the pure-JAX reference.
    out_f32 = attention_sequence_pooling(query_ad, user_behavior, params,
                                         stream_dtype=jnp.float32)
    out_f32 = jax.block_until_ready(out_f32)
    ref = _reference(query_ad, user_behavior, params)
    np.testing.assert_allclose(np.asarray(out_f32), np.asarray(ref),
                               rtol=1e-4, atol=1e-4)

    # bf16 streaming (default; halves HBM/VMEM of the q/ub streams): compare
    # against the reference evaluated on the same bf16-rounded inputs, since
    # in-kernel math stays f32.
    out_bf16 = attention_sequence_pooling(query_ad, user_behavior, params)
    out_bf16 = jax.block_until_ready(out_bf16)
    ref_bf16 = _reference(
        query_ad.astype(jnp.bfloat16).astype(jnp.float32),
        user_behavior.astype(jnp.bfloat16).astype(jnp.float32), params)
    np.testing.assert_allclose(np.asarray(out_bf16), np.asarray(ref_bf16),
                               rtol=1e-3, atol=1e-3)

    print("KERNEL_OK")
</pallas_src>

<mosaic_0001>
module attributes {stable_mosaic.version = 11 : i64} {
  func.func @_attn_pool_kernel(%arg0: i32, %arg1: memref<1x4x128xf32, #tpu.memory_space<vmem>>, %arg2: memref<1x32x128xf32, #tpu.memory_space<vmem>>, %arg3: memref<64x4xf32, #tpu.memory_space<vmem>>, %arg4: memref<64x8xf32, #tpu.memory_space<vmem>>, %arg5: memref<64x5xf32, #tpu.memory_space<vmem>>, %arg6: memref<16x64xf32, #tpu.memory_space<vmem>>, %arg7: memref<16x5xf32, #tpu.memory_space<vmem>>, %arg8: memref<16x2xf32, #tpu.memory_space<vmem>>, %arg9: memref<1x4x128xf32, #tpu.memory_space<vmem>>, %arg10: memref<2x8x128xf32, #tpu.memory_space<vmem>>) attributes {dimension_semantics = [#tpu.dimension_semantics<parallel>], iteration_bounds = array<i64: 1>, scalar_prefetch = 0 : i64, scratch_operands = 1 : i64, tpu.core_type = #tpu.core_type<tc>, window_params = [{transform_indices = @transform_0, window_bounds = array<i64: 1, 4, 128>}, {transform_indices = @transform_1, window_bounds = array<i64: 1, 32, 128>}, {pipeline_mode = #tpu.pipeline_mode<synchronous>, transform_indices = @transform_2, window_bounds = array<i64: 64, 4>}, {pipeline_mode = #tpu.pipeline_mode<synchronous>, transform_indices = @transform_3, window_bounds = array<i64: 64, 8>}, {pipeline_mode = #tpu.pipeline_mode<synchronous>, transform_indices = @transform_4, window_bounds = array<i64: 64, 5>}, {pipeline_mode = #tpu.pipeline_mode<synchronous>, transform_indices = @transform_5, window_bounds = array<i64: 16, 64>}, {pipeline_mode = #tpu.pipeline_mode<synchronous>, transform_indices = @transform_6, window_bounds = array<i64: 16, 5>}, {pipeline_mode = #tpu.pipeline_mode<synchronous>, transform_indices = @transform_7, window_bounds = array<i64: 16, 2>}, {transform_indices = @transform_8, window_bounds = array<i64: 1, 4, 128>}]} {
    %c0_i32 = arith.constant 0 : i32
    %0 = arith.index_cast %c0_i32 : i32 to index
    %c0 = arith.constant 0 : index
    %c0_0 = arith.constant 0 : index
    %1 = vector.load %arg1[%0, %c0, %c0_0] : memref<1x4x128xf32, #tpu.memory_space<vmem>>, vector<1x4x128xf32>
    %2 = vector.shape_cast %1 : vector<1x4x128xf32> to vector<4x128xf32>
    %c0_1 = arith.constant 0 : index
    %c0_2 = arith.constant 0 : index
    %3 = vector.load %arg3[%c0_1, %c0_2] : memref<64x4xf32, #tpu.memory_space<vmem>>, vector<64x4xf32>
    %cst = arith.constant dense<0.000000e+00> : vector<64x128xf32>
    %4 = tpu.matmul %3, %2, %cst {dimension_numbers = #tpu.dot_dimension_numbers<[1], [0], [0], [1], [0, 0, 1, 1], [], []>} : vector<64x4xf32>, vector<4x128xf32>, vector<64x128xf32> -> vector<64x128xf32>
    %c0_3 = arith.constant 0 : index
    %c0_4 = arith.constant 0 : index
    %5 = vector.load %arg5[%c0_3, %c0_4] : memref<64x5xf32, #tpu.memory_space<vmem>>, vector<64x1xf32>
    %6 = vector.broadcast %5 : vector<64x1xf32> to vector<64x128xf32>
    %7 = arith.addf %4, %6 : vector<64x128xf32>
    %c0_5 = arith.constant 0 : index
    %c1 = arith.constant 1 : index
    %8 = vector.load %arg5[%c0_5, %c1] : memref<64x5xf32, #tpu.memory_space<vmem>>, vector<64x1xf32>
    %9 = vector.shape_cast %8 : vector<64x1xf32> to vector<64x1xf32>
    %10 = vector.broadcast %9 : vector<64x1xf32> to vector<64x128xf32>
    %c0_6 = arith.constant 0 : index
    %c2 = arith.constant 2 : index
    %11 = vector.load %arg5[%c0_6, %c2] : memref<64x5xf32, #tpu.memory_space<vmem>>, vector<64x1xf32>
    %12 = vector.shape_cast %11 : vector<64x1xf32> to vector<64x1xf32>
    %13 = vector.broadcast %12 : vector<64x1xf32> to vector<64x128xf32>
    %c0_7 = arith.constant 0 : index
    %c3 = arith.constant 3 : index
    %14 = vector.load %arg5[%c0_7, %c3] : memref<64x5xf32, #tpu.memory_space<vmem>>, vector<64x1xf32>
    %15 = vector.shape_cast %14 : vector<64x1xf32> to vector<64x1xf32>
    %16 = vector.broadcast %15 : vector<64x1xf32> to vector<64x128xf32>
    %c0_8 = arith.constant 0 : index
    %c4 = arith.constant 4 : index
    %17 = vector.load %arg5[%c0_8, %c4] : memref<64x5xf32, #tpu.memory_space<vmem>>, vector<64x1xf32>
    %18 = vector.shape_cast %17 : vector<64x1xf32> to vector<64x1xf32>
    %19 = vector.broadcast %18 : vector<64x1xf32> to vector<64x128xf32>
    %c0_9 = arith.constant 0 : index
    %c0_10 = arith.constant 0 : index
    %20 = vector.load %arg7[%c0_9, %c0_10] : memref<16x5xf32, #tpu.memory_space<vmem>>, vector<16x1xf32>
    %c0_11 = arith.constant 0 : index
    %c1_12 = arith.constant 1 : index
    %21 = vector.load %arg7[%c0_11, %c1_12] : memref<16x5xf32, #tpu.memory_space<vmem>>, vector<16x1xf32>
    %c0_13 = arith.constant 0 : index
    %c2_14 = arith.constant 2 : index
    %22 = vector.load %arg7[%c0_13, %c2_14] : memref<16x5xf32, #tpu.memory_space<vmem>>, vector<16x1xf32>
    %c0_15 = arith.constant 0 : index
    %c3_16 = arith.constant 3 : index
    %23 = vector.load %arg7[%c0_15, %c3_16] : memref<16x5xf32, #tpu.memory_space<vmem>>, vector<16x1xf32>
    %c0_17 = arith.constant 0 : index
    %c4_18 = arith.constant 4 : index
    %24 = vector.load %arg7[%c0_17, %c4_18] : memref<16x5xf32, #tpu.memory_space<vmem>>, vector<16x1xf32>
    %c0_19 = arith.constant 0 : index
    %c0_20 = arith.constant 0 : index
    %25 = vector.load %arg8[%c0_19, %c0_20] : memref<16x2xf32, #tpu.memory_space<vmem>>, vector<16x1xf32>
    %c0_21 = arith.constant 0 : index
    %c1_22 = arith.constant 1 : index
    %26 = vector.load %arg8[%c0_21, %c1_22] : memref<16x2xf32, #tpu.memory_space<vmem>>, vector<1x1xf32>
    %cst_23 = arith.constant 0.000000e+00 : f32
    %27 = vector.broadcast %cst_23 : f32 to vector<4x128xf32>
    %28 = arith.index_cast %c0_i32 : i32 to index
    %c0_24 = arith.constant 0 : index
    %c0_25 = arith.constant 0 : index
    %29 = vector.load %arg2[%28, %c0_24, %c0_25] : memref<1x32x128xf32, #tpu.memory_space<vmem>>, vector<1x4x128xf32>
    %30 = vector.shape_cast %29 : vector<1x4x128xf32> to vector<4x128xf32>
    %c0_26 = arith.constant 0 : index
    %c0_27 = arith.constant 0 : index
    %c0_28 = arith.constant 0 : index
    %31 = vector.load %arg10[%c0_26, %c0_27, %c0_28] : memref<2x8x128xf32, #tpu.memory_space<vmem>>, vector<1x4x128xf32>
    %32 = vector.shape_cast %31 : vector<1x4x128xf32> to vector<4x128xf32>
    %33 = vector.shape_cast %30 : vector<4x128xf32> to vector<1x4x128xf32>
    tpu.vector_store %arg10[%c0_26, %c0_27, %c0_28], %33 {strides = array<i32>} : memref<2x8x128xf32, #tpu.memory_space<vmem>>, vector<1x4x128xf32>,
    %34 = arith.mulf %2, %30 : vector<4x128xf32>
    %c0_29 = arith.constant 0 : index
    %c4_30 = arith.constant 4 : index
    %c0_31 = arith.constant 0 : index
    %35 = vector.load %arg10[%c0_29, %c4_30, %c0_31] : memref<2x8x128xf32, #tpu.memory_space<vmem>>, vector<1x4x128xf32>
    %36 = vector.shape_cast %35 : vector<1x4x128xf32> to vector<4x128xf32>
    %37 = vector.shape_cast %34 : vector<4x128xf32> to vector<1x4x128xf32>
    tpu.vector_store %arg10[%c0_29, %c4_30, %c0_31], %37 {strides = array<i32>} : memref<2x8x128xf32, #tpu.memory_space<vmem>>, vector<1x4x128xf32>,
    %c0_32 = arith.constant 0 : index
    %c0_33 = arith.constant 0 : index
    %38 = vector.load %arg4[%c0_32, %c0_33] : memref<64x8xf32, #tpu.memory_space<vmem>>, vector<64x8xf32>
    %c0_34 = arith.constant 0 : index
    %c0_35 = arith.constant 0 : index
    %c0_36 = arith.constant 0 : index
    %39 = vector.load %arg10[%c0_34, %c0_35, %c0_36] : memref<2x8x128xf32, #tpu.memory_space<vmem>>, vector<1x8x128xf32>
    %40 = vector.shape_cast %39 : vector<1x8x128xf32> to vector<8x128xf32>
    %cst_37 = arith.constant dense<0.000000e+00> : vector<64x128xf32>
    %41 = tpu.matmul %38, %40, %cst_37 {dimension_numbers = #tpu.dot_dimension_numbers<[1], [0], [0], [1], [0, 0, 1, 1], [], []>} : vector<64x8xf32>, vector<8x128xf32>, vector<64x128xf32> -> vector<64x128xf32>
    %42 = arith.addf %7, %41 : vector<64x128xf32>
    %43 = arith.mulf %42, %16 : vector<64x128xf32>
    %44 = arith.addf %43, %19 : vector<64x128xf32>
    %45 = math.tanh %44 : vector<64x128xf32>
    %46 = arith.mulf %45, %13 : vector<64x128xf32>
    %47 = arith.addf %46, %10 : vector<64x128xf32>
    %48 = arith.mulf %42, %47 : vector<64x128xf32>
    %c0_38 = arith.constant 0 : index
    %c0_39 = arith.constant 0 : index
    %49 = vector.load %arg6[%c0_38, %c0_39] : memref<16x64xf32, #tpu.memory_space<vmem>>, vector<16x64xf32>
    %cst_40 = arith.constant dense<0.000000e+00> : vector<16x128xf32>
    %50 = tpu.matmul %49, %48, %cst_40 {dimension_numbers = #tpu.dot_dimension_numbers<[1], [0], [0], [1], [0, 0, 1, 1], [], []>} : vector<16x64xf32>, vector<64x128xf32>, vector<16x128xf32> -> vector<16x128xf32>
    %51 = vector.broadcast %20 : vector<16x1xf32> to vector<16x128xf32>
    %52 = arith.addf %50, %51 : vector<16x128xf32>
    %53 = vector.broadcast %23 : vector<16x1xf32> to vector<16x128xf32>
    %54 = arith.mulf %52, %53 : vector<16x128xf32>
    %55 = vector.broadcast %24 : vector<16x1xf32> to vector<16x128xf32>
    %56 = arith.addf %54, %55 : vector<16x128xf32>
    %57 = math.tanh %56 : vector<16x128xf32>
    %58 = vector.broadcast %22 : vector<16x1xf32> to vector<16x128xf32>
    %59 = arith.mulf %57, %58 : vector<16x128xf32>
    %60 = vector.broadcast %21 : vector<16x1xf32> to vector<16x128xf32>
    %61 = arith.addf %59, %60 : vector<16x128xf32>
    %62 = arith.mulf %52, %61 : vector<16x128xf32>
    %63 = vector.broadcast %25 : vector<16x1xf32> to vector<16x128xf32>
    %64 = arith.mulf %63, %62 : vector<16x128xf32>
    %cst_41 = arith.constant dense<0.000000e+00> : vector<128xf32>
    %65 = vector.multi_reduction <add>, %64, %cst_41 [0] : vector<16x128xf32> to vector<128xf32>
    %66 = vector.shape_cast %65 : vector<128xf32> to vector<1x128xf32>
    %67 = vector.broadcast %26 : vector<1x1xf32> to vector<1x128xf32>
    %68 = arith.addf %66, %67 : vector<1x128xf32>
    %69 = vector.broadcast %68 : vector<1x128xf32> to vector<4x128xf32>
    %70 = arith.mulf %69, %30 : vector<4x128xf32>
    %71 = arith.addf %27, %70 : vector<4x128xf32>
    %72 = arith.index_cast %c0_i32 : i32 to index
    %c4_42 = arith.constant 4 : index
    %c0_43 = arith.constant 0 : index
    %73 = vector.load %arg2[%72, %c4_42, %c0_43] : memref<1x32x128xf32, #tpu.memory_space<vmem>>, vector<1x4x128xf32>
    %74 = vector.shape_cast %73 : vector<1x4x128xf32> to vector<4x128xf32>
    %c1_44 = arith.constant 1 : index
    %c0_45 = arith.constant 0 : index
    %c0_46 = arith.constant 0 : index
    %75 = vector.load %arg10[%c1_44, %c0_45, %c0_46] : memref<2x8x128xf32, #tpu.memory_space<vmem>>, vector<1x4x128xf32>
    %76 = vector.shape_cast %75 : vector<1x4x128xf32> to vector<4x128xf32>
    %77 = vector.shape_cast %74 : vector<4x128xf32> to vector<1x4x128xf32>
    tpu.vector_store %arg10[%c1_44, %c0_45, %c0_46], %77 {strides = array<i32>} : memref<2x8x128xf32, #tpu.memory_space<vmem>>, vector<1x4x128xf32>,
    %78 = arith.mulf %2, %74 : vector<4x128xf32>
    %c1_47 = arith.constant 1 : index
    %c4_48 = arith.constant 4 : index
    %c0_49 = arith.constant 0 : index
    %79 = vector.load %arg10[%c1_47, %c4_48, %c0_49] : memref<2x8x128xf32, #tpu.memory_space<vmem>>, vector<1x4x128xf32>
    %80 = vector.shape_cast %79 : vector<1x4x128xf32> to vector<4x128xf32>
    %81 = vector.shape_cast %78 : vector<4x128xf32> to vector<1x4x128xf32>
    tpu.vector_store %arg10[%c1_47, %c4_48, %c0_49], %81 {strides = array<i32>} : memref<2x8x128xf32, #tpu.memory_space<vmem>>, vector<1x4x128xf32>,
    %c0_50 = arith.constant 0 : index
    %c0_51 = arith.constant 0 : index
    %82 = vector.load %arg4[%c0_50, %c0_51] : memref<64x8xf32, #tpu.memory_space<vmem>>, vector<64x8xf32>
    %c1_52 = arith.constant 1 : index
    %c0_53 = arith.constant 0 : index
    %c0_54 = arith.constant 0 : index
    %83 = vector.load %arg10[%c1_52, %c0_53, %c0_54] : memref<2x8x128xf32, #tpu.memory_space<vmem>>, vector<1x8x128xf32>
    %84 = vector.shape_cast %83 : vector<1x8x128xf32> to vector<8x128xf32>
    %cst_55 = arith.constant dense<0.000000e+00> : vector<64x128xf32>
    %85 = tpu.matmul %82, %84, %cst_55 {dimension_numbers = #tpu.dot_dimension_numbers<[1], [0], [0], [1], [0, 0, 1, 1], [], []>} : vector<64x8xf32>, vector<8x128xf32>, vector<64x128xf32> -> vector<64x128xf32>
    %86 = arith.addf %7, %85 : vector<64x128xf32>
    %87 = arith.mulf %86, %16 : vector<64x128xf32>
    %88 = arith.addf %87, %19 : vector<64x128xf32>
    %89 = math.tanh %88 : vector<64x128xf32>
    %90 = arith.mulf %89, %13 : vector<64x128xf32>
    %91 = arith.addf %90, %10 : vector<64x128xf32>
    %92 = arith.mulf %86, %91 : vector<64x128xf32>
    %c0_56 = arith.constant 0 : index
    %c0_57 = arith.constant 0 : index
    %93 = vector.load %arg6[%c0_56, %c0_57] : memref<16x64xf32, #tpu.memory_space<vmem>>, vector<16x64xf32>
    %cst_58 = arith.constant dense<0.000000e+00> : vector<16x128xf32>
    %94 = tpu.matmul %93, %92, %cst_58 {dimension_numbers = #tpu.dot_dimension_numbers<[1], [0], [0], [1], [0, 0, 1, 1], [], []>} : vector<16x64xf32>, vector<64x128xf32>, vector<16x128xf32> -> vector<16x128xf32>
    %95 = vector.broadcast %20 : vector<16x1xf32> to vector<16x128xf32>
    %96 = arith.addf %94, %95 : vector<16x128xf32>
    %97 = vector.broadcast %23 : vector<16x1xf32> to vector<16x128xf32>
    %98 = arith.mulf %96, %97 : vector<16x128xf32>
    %99 = vector.broadcast %24 : vector<16x1xf32> to vector<16x128xf32>
    %100 = arith.addf %98, %99 : vector<16x128xf32>
    %101 = math.tanh %100 : vector<16x128xf32>
    %102 = vector.broadcast %22 : vector<16x1xf32> to vector<16x128xf32>
    %103 = arith.mulf %101, %102 : vector<16x128xf32>
    %104 = vector.broadcast %21 : vector<16x1xf32> to vector<16x128xf32>
    %105 = arith.addf %103, %104 : vector<16x128xf32>
    %106 = arith.mulf %96, %105 : vector<16x128xf32>
    %107 = vector.broadcast %25 : vector<16x1xf32> to vector<16x128xf32>
    %108 = arith.mulf %107, %106 : vector<16x128xf32>
    %cst_59 = arith.constant dense<0.000000e+00> : vector<128xf32>
    %109 = vector.multi_reduction <add>, %108, %cst_59 [0] : vector<16x128xf32> to vector<128xf32>
    %110 = vector.shape_cast %109 : vector<128xf32> to vector<1x128xf32>
    %111 = vector.broadcast %26 : vector<1x1xf32> to vector<1x128xf32>
    %112 = arith.addf %110, %111 : vector<1x128xf32>
    %113 = vector.broadcast %112 : vector<1x128xf32> to vector<4x128xf32>
    %114 = arith.mulf %113, %74 : vector<4x128xf32>
    %115 = arith.addf %71, %114 : vector<4x128xf32>
    %116 = arith.index_cast %c0_i32 : i32 to index
    %c8 = arith.constant 8 : index
    %c0_60 = arith.constant 0 : index
    %117 = vector.load %arg2[%116, %c8, %c0_60] : memref<1x32x128xf32, #tpu.memory_space<vmem>>, vector<1x4x128xf32>
    %118 = vector.shape_cast %117 : vector<1x4x128xf32> to vector<4x128xf32>
    %c0_61 = arith.constant 0 : index
    %c0_62 = arith.constant 0 : index
    %c0_63 = arith.constant 0 : index
    %119 = vector.load %arg10[%c0_61, %c0_62, %c0_63] : memref<2x8x128xf32, #tpu.memory_space<vmem>>, vector<1x4x128xf32>
    %120 = vector.shape_cast %119 : vector<1x4x128xf32> to vector<4x128xf32>
    %121 = vector.shape_cast %118 : vector<4x128xf32> to vector<1x4x128xf32>
    tpu.vector_store %arg10[%c0_61, %c0_62, %c0_63], %121 {strides = array<i32>} : memref<2x8x128xf32, #tpu.memory_space<vmem>>, vector<1x4x128xf32>,
    %122 = arith.mulf %2, %118 : vector<4x128xf32>
    %c0_64 = arith.constant 0 : index
    %c4_65 = arith.constant 4 : index
    %c0_66 = arith.constant 0 : index
    %123 = vector.load %arg10[%c0_64, %c4_65, %c0_66] : memref<2x8x128xf32, #tpu.memory_space<vmem>>, vector<1x4x128xf32>
    %124 = vector.shape_cast %123 : vector<1x4x128xf32> to vector<4x128xf32>
    %125 = vector.shape_cast %122 : vector<4x128xf32> to vector<1x4x128xf32>
    tpu.vector_store %arg10[%c0_64, %c4_65, %c0_66], %125 {strides = array<i32>} : memref<2x8x128xf32, #tpu.memory_space<vmem>>, vector<1x4x128xf32>,
    %c0_67 = arith.constant 0 : index
    %c0_68 = arith.constant 0 : index
    %126 = vector.load %arg4[%c0_67, %c0_68] : memref<64x8xf32, #tpu.memory_space<vmem>>, vector<64x8xf32>
    %c0_69 = arith.constant 0 : index
    %c0_70 = arith.constant 0 : index
    %c0_71 = arith.constant 0 : index
    %127 = vector.load %arg10[%c0_69, %c0_70, %c0_71] : memref<2x8x128xf32, #tpu.memory_space<vmem>>, vector<1x8x128xf32>
    %128 = vector.shape_cast %127 : vector<1x8x128xf32> to vector<8x128xf32>
    %cst_72 = arith.constant dense<0.000000e+00> : vector<64x128xf32>
    %129 = tpu.matmul %126, %128, %cst_72 {dimension_numbers = #tpu.dot_dimension_numbers<[1], [0], [0], [1], [0, 0, 1, 1], [], []>} : vector<64x8xf32>, vector<8x128xf32>, vector<64x128xf32> -> vector<64x128xf32>
    %130 = arith.addf %7, %129 : vector<64x128xf32>
    %131 = arith.mulf %130, %16 : vector<64x128xf32>
    %132 = arith.addf %131, %19 : vector<64x128xf32>
    %133 = math.tanh %132 : vector<64x128xf32>
    %134 = arith.mulf %133, %13 : vector<64x128xf32>
    %135 = arith.addf %134, %10 : vector<64x128xf32>
    %136 = arith.mulf %130, %135 : vector<64x128xf32>
    %c0_73 = arith.constant 0 : index
    %c0_74 = arith.constant 0 : index
    %137 = vector.load %arg6[%c0_73, %c0_74] : memref<16x64xf32, #tpu.memory_space<vmem>>, vector<16x64xf32>
    %cst_75 = arith.constant dense<0.000000e+00> : vector<16x128xf32>
    %138 = tpu.matmul %137, %136, %cst_75 {dimension_numbers = #tpu.dot_dimension_numbers<[1], [0], [0], [1], [0, 0, 1, 1], [], []>} : vector<16x64xf32>, vector<64x128xf32>, vector<16x128xf32> -> vector<16x128xf32>
    %139 = vector.broadcast %20 : vector<16x1xf32> to vector<16x128xf32>
    %140 = arith.addf %138, %139 : vector<16x128xf32>
    %141 = vector.broadcast %23 : vector<16x1xf32> to vector<16x128xf32>
    %142 = arith.mulf %140, %141 : vector<16x128xf32>
    %143 = vector.broadcast %24 : vector<16x1xf32> to vector<16x128xf32>
    %144 = arith.addf %142, %143 : vector<16x128xf32>
    %145 = math.tanh %144 : vector<16x128xf32>
    %146 = vector.broadcast %22 : vector<16x1xf32> to vector<16x128xf32>
    %147 = arith.mulf %145, %146 : vector<16x128xf32>
    %148 = vector.broadcast %21 : vector<16x1xf32> to vector<16x128xf32>
    %149 = arith.addf %147, %148 : vector<16x128xf32>
    %150 = arith.mulf %140, %149 : vector<16x128xf32>
    %151 = vector.broadcast %25 : vector<16x1xf32> to vector<16x128xf32>
    %152 = arith.mulf %151, %150 : vector<16x128xf32>
    %cst_76 = arith.constant dense<0.000000e+00> : vector<128xf32>
    %153 = vector.multi_reduction <add>, %152, %cst_76 [0] : vector<16x128xf32> to vector<128xf32>
    %154 = vector.shape_cast %153 : vector<128xf32> to vector<1x128xf32>
    %155 = vector.broadcast %26 : vector<1x1xf32> to vector<1x128xf32>
    %156 = arith.addf %154, %155 : vector<1x128xf32>
    %157 = vector.broadcast %156 : vector<1x128xf32> to vector<4x128xf32>
    %158 = arith.mulf %157, %118 : vector<4x128xf32>
    %159 = arith.addf %115, %158 : vector<4x128xf32>
    %160 = arith.index_cast %c0_i32 : i32 to index
    %c12 = arith.constant 12 : index
    %c0_77 = arith.constant 0 : index
    %161 = vector.load %arg2[%160, %c12, %c0_77] : memref<1x32x128xf32, #tpu.memory_space<vmem>>, vector<1x4x128xf32>
    %162 = vector.shape_cast %161 : vector<1x4x128xf32> to vector<4x128xf32>
    %c1_78 = arith.constant 1 : index
    %c0_79 = arith.constant 0 : index
    %c0_80 = arith.constant 0 : index
    %163 = vector.load %arg10[%c1_78, %c0_79, %c0_80] : memref<2x8x128xf32, #tpu.memory_space<vmem>>, vector<1x4x128xf32>
    %164 = vector.shape_cast %163 : vector<1x4x128xf32> to vector<4x128xf32>
    %165 = vector.shape_cast %162 : vector<4x128xf32> to vector<1x4x128xf32>
    tpu.vector_store %arg10[%c1_78, %c0_79, %c0_80], %165 {strides = array<i32>} : memref<2x8x128xf32, #tpu.memory_space<vmem>>, vector<1x4x128xf32>,
    %166 = arith.mulf %2, %162 : vector<4x128xf32>
    %c1_81 = arith.constant 1 : index
    %c4_82 = arith.constant 4 : index
    %c0_83 = arith.constant 0 : index
    %167 = vector.load %arg10[%c1_81, %c4_82, %c0_83] : memref<2x8x128xf32, #tpu.memory_space<vmem>>, vector<1x4x128xf32>
    %168 = vector.shape_cast %167 : vector<1x4x128xf32> to vector<4x128xf32>
    %169 = vector.shape_cast %166 : vector<4x128xf32> to vector<1x4x128xf32>
    tpu.vector_store %arg10[%c1_81, %c4_82, %c0_83], %169 {strides = array<i32>} : memref<2x8x128xf32, #tpu.memory_space<vmem>>, vector<1x4x128xf32>,
    %c0_84 = arith.constant 0 : index
    %c0_85 = arith.constant 0 : index
    %170 = vector.load %arg4[%c0_84, %c0_85] : memref<64x8xf32, #tpu.memory_space<vmem>>, vector<64x8xf32>
    %c1_86 = arith.constant 1 : index
    %c0_87 = arith.constant 0 : index
    %c0_88 = arith.constant 0 : index
    %171 = vector.load %arg10[%c1_86, %c0_87, %c0_88] : memref<2x8x128xf32, #tpu.memory_space<vmem>>, vector<1x8x128xf32>
    %172 = vector.shape_cast %171 : vector<1x8x128xf32> to vector<8x128xf32>
    %cst_89 = arith.constant dense<0.000000e+00> : vector<64x128xf32>
    %173 = tpu.matmul %170, %172, %cst_89 {dimension_numbers = #tpu.dot_dimension_numbers<[1], [0], [0], [1], [0, 0, 1, 1], [], []>} : vector<64x8xf32>, vector<8x128xf32>, vector<64x128xf32> -> vector<64x128xf32>
    %174 = arith.addf %7, %173 : vector<64x128xf32>
    %175 = arith.mulf %174, %16 : vector<64x128xf32>
    %176 = arith.addf %175, %19 : vector<64x128xf32>
    %177 = math.tanh %176 : vector<64x128xf32>
    %178 = arith.mulf %177, %13 : vector<64x128xf32>
    %179 = arith.addf %178, %10 : vector<64x128xf32>
    %180 = arith.mulf %174, %179 : vector<64x128xf32>
    %c0_90 = arith.constant 0 : index
    %c0_91 = arith.constant 0 : index
    %181 = vector.load %arg6[%c0_90, %c0_91] : memref<16x64xf32, #tpu.memory_space<vmem>>, vector<16x64xf32>
    %cst_92 = arith.constant dense<0.000000e+00> : vector<16x128xf32>
    %182 = tpu.matmul %181, %180, %cst_92 {dimension_numbers = #tpu.dot_dimension_numbers<[1], [0], [0], [1], [0, 0, 1, 1], [], []>} : vector<16x64xf32>, vector<64x128xf32>, vector<16x128xf32> -> vector<16x128xf32>
    %183 = vector.broadcast %20 : vector<16x1xf32> to vector<16x128xf32>
    %184 = arith.addf %182, %183 : vector<16x128xf32>
    %185 = vector.broadcast %23 : vector<16x1xf32> to vector<16x128xf32>
    %186 = arith.mulf %184, %185 : vector<16x128xf32>
    %187 = vector.broadcast %24 : vector<16x1xf32> to vector<16x128xf32>
    %188 = arith.addf %186, %187 : vector<16x128xf32>
    %189 = math.tanh %188 : vector<16x128xf32>
    %190 = vector.broadcast %22 : vector<16x1xf32> to vector<16x128xf32>
    %191 = arith.mulf %189, %190 : vector<16x128xf32>
    %192 = vector.broadcast %21 : vector<16x1xf32> to vector<16x128xf32>
    %193 = arith.addf %191, %192 : vector<16x128xf32>
    %194 = arith.mulf %184, %193 : vector<16x128xf32>
    %195 = vector.broadcast %25 : vector<16x1xf32> to vector<16x128xf32>
    %196 = arith.mulf %195, %194 : vector<16x128xf32>
    %cst_93 = arith.constant dense<0.000000e+00> : vector<128xf32>
    %197 = vector.multi_reduction <add>, %196, %cst_93 [0] : vector<16x128xf32> to vector<128xf32>
    %198 = vector.shape_cast %197 : vector<128xf32> to vector<1x128xf32>
    %199 = vector.broadcast %26 : vector<1x1xf32> to vector<1x128xf32>
    %200 = arith.addf %198, %199 : vector<1x128xf32>
    %201 = vector.broadcast %200 : vector<1x128xf32> to vector<4x128xf32>
    %202 = arith.mulf %201, %162 : vector<4x128xf32>
    %203 = arith.addf %159, %202 : vector<4x128xf32>
    %204 = arith.index_cast %c0_i32 : i32 to index
    %c16 = arith.constant 16 : index
    %c0_94 = arith.constant 0 : index
    %205 = vector.load %arg2[%204, %c16, %c0_94] : memref<1x32x128xf32, #tpu.memory_space<vmem>>, vector<1x4x128xf32>
    %206 = vector.shape_cast %205 : vector<1x4x128xf32> to vector<4x128xf32>
    %c0_95 = arith.constant 0 : index
    %c0_96 = arith.constant 0 : index
    %c0_97 = arith.constant 0 : index
    %207 = vector.load %arg10[%c0_95, %c0_96, %c0_97] : memref<2x8x128xf32, #tpu.memory_space<vmem>>, vector<1x4x128xf32>
    %208 = vector.shape_cast %207 : vector<1x4x128xf32> to vector<4x128xf32>
    %209 = vector.shape_cast %206 : vector<4x128xf32> to vector<1x4x128xf32>
    tpu.vector_store %arg10[%c0_95, %c0_96, %c0_97], %209 {strides = array<i32>} : memref<2x8x128xf32, #tpu.memory_space<vmem>>, vector<1x4x128xf32>,
    %210 = arith.mulf %2, %206 : vector<4x128xf32>
    %c0_98 = arith.constant 0 : index
    %c4_99 = arith.constant 4 : index
    %c0_100 = arith.constant 0 : index
    %211 = vector.load %arg10[%c0_98, %c4_99, %c0_100] : memref<2x8x128xf32, #tpu.memory_space<vmem>>, vector<1x4x128xf32>
    %212 = vector.shape_cast %211 : vector<1x4x128xf32> to vector<4x128xf32>
    %213 = vector.shape_cast %210 : vector<4x128xf32> to vector<1x4x128xf32>
    tpu.vector_store %arg10[%c0_98, %c4_99, %c0_100], %213 {strides = array<i32>} : memref<2x8x128xf32, #tpu.memory_space<vmem>>, vector<1x4x128xf32>,
    %c0_101 = arith.constant 0 : index
    %c0_102 = arith.constant 0 : index
    %214 = vector.load %arg4[%c0_101, %c0_102] : memref<64x8xf32, #tpu.memory_space<vmem>>, vector<64x8xf32>
    %c0_103 = arith.constant 0 : index
    %c0_104 = arith.constant 0 : index
    %c0_105 = arith.constant 0 : index
    %215 = vector.load %arg10[%c0_103, %c0_104, %c0_105] : memref<2x8x128xf32, #tpu.memory_space<vmem>>, vector<1x8x128xf32>
    %216 = vector.shape_cast %215 : vector<1x8x128xf32> to vector<8x128xf32>
    %cst_106 = arith.constant dense<0.000000e+00> : vector<64x128xf32>
    %217 = tpu.matmul %214, %216, %cst_106 {dimension_numbers = #tpu.dot_dimension_numbers<[1], [0], [0], [1], [0, 0, 1, 1], [], []>} : vector<64x8xf32>, vector<8x128xf32>, vector<64x128xf32> -> vector<64x128xf32>
    %218 = arith.addf %7, %217 : vector<64x128xf32>
    %219 = arith.mulf %218, %16 : vector<64x128xf32>
    %220 = arith.addf %219, %19 : vector<64x128xf32>
    %221 = math.tanh %220 : vector<64x128xf32>
    %222 = arith.mulf %221, %13 : vector<64x128xf32>
    %223 = arith.addf %222, %10 : vector<64x128xf32>
    %224 = arith.mulf %218, %223 : vector<64x128xf32>
    %c0_107 = arith.constant 0 : index
    %c0_108 = arith.constant 0 : index
    %225 = vector.load %arg6[%c0_107, %c0_108] : memref<16x64xf32, #tpu.memory_space<vmem>>, vector<16x64xf32>
    %cst_109 = arith.constant dense<0.000000e+00> : vector<16x128xf32>
    %226 = tpu.matmul %225, %224, %cst_109 {dimension_numbers = #tpu.dot_dimension_numbers<[1], [0], [0], [1], [0, 0, 1, 1], [], []>} : vector<16x64xf32>, vector<64x128xf32>, vector<16x128xf32> -> vector<16x128xf32>
    %227 = vector.broadcast %20 : vector<16x1xf32> to vector<16x128xf32>
    %228 = arith.addf %226, %227 : vector<16x128xf32>
    %229 = vector.broadcast %23 : vector<16x1xf32> to vector<16x128xf32>
    %230 = arith.mulf %228, %229 : vector<16x128xf32>
    %231 = vector.broadcast %24 : vector<16x1xf32> to vector<16x128xf32>
    %232 = arith.addf %230, %231 : vector<16x128xf32>
    %233 = math.tanh %232 : vector<16x128xf32>
    %234 = vector.broadcast %22 : vector<16x1xf32> to vector<16x128xf32>
    %235 = arith.mulf %233, %234 : vector<16x128xf32>
    %236 = vector.broadcast %21 : vector<16x1xf32> to vector<16x128xf32>
    %237 = arith.addf %235, %236 : vector<16x128xf32>
    %238 = arith.mulf %228, %237 : vector<16x128xf32>
    %239 = vector.broadcast %25 : vector<16x1xf32> to vector<16x128xf32>
    %240 = arith.mulf %239, %238 : vector<16x128xf32>
    %cst_110 = arith.constant dense<0.000000e+00> : vector<128xf32>
    %241 = vector.multi_reduction <add>, %240, %cst_110 [0] : vector<16x128xf32> to vector<128xf32>
    %242 = vector.shape_cast %241 : vector<128xf32> to vector<1x128xf32>
    %243 = vector.broadcast %26 : vector<1x1xf32> to vector<1x128xf32>
    %244 = arith.addf %242, %243 : vector<1x128xf32>
    %245 = vector.broadcast %244 : vector<1x128xf32> to vector<4x128xf32>
    %246 = arith.mulf %245, %206 : vector<4x128xf32>
    %247 = arith.addf %203, %246 : vector<4x128xf32>
    %248 = arith.index_cast %c0_i32 : i32 to index
    %c20 = arith.constant 20 : index
    %c0_111 = arith.constant 0 : index
    %249 = vector.load %arg2[%248, %c20, %c0_111] : memref<1x32x128xf32, #tpu.memory_space<vmem>>, vector<1x4x128xf32>
    %250 = vector.shape_cast %249 : vector<1x4x128xf32> to vector<4x128xf32>
    %c1_112 = arith.constant 1 : index
    %c0_113 = arith.constant 0 : index
    %c0_114 = arith.constant 0 : index
    %251 = vector.load %arg10[%c1_112, %c0_113, %c0_114] : memref<2x8x128xf32, #tpu.memory_space<vmem>>, vector<1x4x128xf32>
    %252 = vector.shape_cast %251 : vector<1x4x128xf32> to vector<4x128xf32>
    %253 = vector.shape_cast %250 : vector<4x128xf32> to vector<1x4x128xf32>
    tpu.vector_store %arg10[%c1_112, %c0_113, %c0_114], %253 {strides = array<i32>} : memref<2x8x128xf32, #tpu.memory_space<vmem>>, vector<1x4x128xf32>,
    %254 = arith.mulf %2, %250 : vector<4x128xf32>
    %c1_115 = arith.constant 1 : index
    %c4_116 = arith.constant 4 : index
    %c0_117 = arith.constant 0 : index
    %255 = vector.load %arg10[%c1_115, %c4_116, %c0_117] : memref<2x8x128xf32, #tpu.memory_space<vmem>>, vector<1x4x128xf32>
    %256 = vector.shape_cast %255 : vector<1x4x128xf32> to vector<4x128xf32>
    %257 = vector.shape_cast %254 : vector<4x128xf32> to vector<1x4x128xf32>
    tpu.vector_store %arg10[%c1_115, %c4_116, %c0_117], %257 {strides = array<i32>} : memref<2x8x128xf32, #tpu.memory_space<vmem>>, vector<1x4x128xf32>,
    %c0_118 = arith.constant 0 : index
    %c0_119 = arith.constant 0 : index
    %258 = vector.load %arg4[%c0_118, %c0_119] : memref<64x8xf32, #tpu.memory_space<vmem>>, vector<64x8xf32>
    %c1_120 = arith.constant 1 : index
    %c0_121 = arith.constant 0 : index
    %c0_122 = arith.constant 0 : index
    %259 = vector.load %arg10[%c1_120, %c0_121, %c0_122] : memref<2x8x128xf32, #tpu.memory_space<vmem>>, vector<1x8x128xf32>
    %260 = vector.shape_cast %259 : vector<1x8x128xf32> to vector<8x128xf32>
    %cst_123 = arith.constant dense<0.000000e+00> : vector<64x128xf32>
    %261 = tpu.matmul %258, %260, %cst_123 {dimension_numbers = #tpu.dot_dimension_numbers<[1], [0], [0], [1], [0, 0, 1, 1], [], []>} : vector<64x8xf32>, vector<8x128xf32>, vector<64x128xf32> -> vector<64x128xf32>
    %262 = arith.addf %7, %261 : vector<64x128xf32>
    %263 = arith.mulf %262, %16 : vector<64x128xf32>
    %264 = arith.addf %263, %19 : vector<64x128xf32>
    %265 = math.tanh %264 : vector<64x128xf32>
    %266 = arith.mulf %265, %13 : vector<64x128xf32>
    %267 = arith.addf %266, %10 : vector<64x128xf32>
    %268 = arith.mulf %262, %267 : vector<64x128xf32>
    %c0_124 = arith.constant 0 : index
    %c0_125 = arith.constant 0 : index
    %269 = vector.load %arg6[%c0_124, %c0_125] : memref<16x64xf32, #tpu.memory_space<vmem>>, vector<16x64xf32>
    %cst_126 = arith.constant dense<0.000000e+00> : vector<16x128xf32>
    %270 = tpu.matmul %269, %268, %cst_126 {dimension_numbers = #tpu.dot_dimension_numbers<[1], [0], [0], [1], [0, 0, 1, 1], [], []>} : vector<16x64xf32>, vector<64x128xf32>, vector<16x128xf32> -> vector<16x128xf32>
    %271 = vector.broadcast %20 : vector<16x1xf32> to vector<16x128xf32>
    %272 = arith.addf %270, %271 : vector<16x128xf32>
    %273 = vector.broadcast %23 : vector<16x1xf32> to vector<16x128xf32>
    %274 = arith.mulf %272, %273 : vector<16x128xf32>
    %275 = vector.broadcast %24 : vector<16x1xf32> to vector<16x128xf32>
    %276 = arith.addf %274, %275 : vector<16x128xf32>
    %277 = math.tanh %276 : vector<16x128xf32>
    %278 = vector.broadcast %22 : vector<16x1xf32> to vector<16x128xf32>
    %279 = arith.mulf %277, %278 : vector<16x128xf32>
    %280 = vector.broadcast %21 : vector<16x1xf32> to vector<16x128xf32>
    %281 = arith.addf %279, %280 : vector<16x128xf32>
    %282 = arith.mulf %272, %281 : vector<16x128xf32>
    %283 = vector.broadcast %25 : vector<16x1xf32> to vector<16x128xf32>
    %284 = arith.mulf %283, %282 : vector<16x128xf32>
    %cst_127 = arith.constant dense<0.000000e+00> : vector<128xf32>
    %285 = vector.multi_reduction <add>, %284, %cst_127 [0] : vector<16x128xf32> to vector<128xf32>
    %286 = vector.shape_cast %285 : vector<128xf32> to vector<1x128xf32>
    %287 = vector.broadcast %26 : vector<1x1xf32> to vector<1x128xf32>
    %288 = arith.addf %286, %287 : vector<1x128xf32>
    %289 = vector.broadcast %288 : vector<1x128xf32> to vector<4x128xf32>
    %290 = arith.mulf %289, %250 : vector<4x128xf32>
    %291 = arith.addf %247, %290 : vector<4x128xf32>
    %292 = arith.index_cast %c0_i32 : i32 to index
    %c24 = arith.constant 24 : index
    %c0_128 = arith.constant 0 : index
    %293 = vector.load %arg2[%292, %c24, %c0_128] : memref<1x32x128xf32, #tpu.memory_space<vmem>>, vector<1x4x128xf32>
    %294 = vector.shape_cast %293 : vector<1x4x128xf32> to vector<4x128xf32>
    %c0_129 = arith.constant 0 : index
    %c0_130 = arith.constant 0 : index
    %c0_131 = arith.constant 0 : index
    %295 = vector.load %arg10[%c0_129, %c0_130, %c0_131] : memref<2x8x128xf32, #tpu.memory_space<vmem>>, vector<1x4x128xf32>
    %296 = vector.shape_cast %295 : vector<1x4x128xf32> to vector<4x128xf32>
    %297 = vector.shape_cast %294 : vector<4x128xf32> to vector<1x4x128xf32>
    tpu.vector_store %arg10[%c0_129, %c0_130, %c0_131], %297 {strides = array<i32>} : memref<2x8x128xf32, #tpu.memory_space<vmem>>, vector<1x4x128xf32>,
    %298 = arith.mulf %2, %294 : vector<4x128xf32>
    %c0_132 = arith.constant 0 : index
    %c4_133 = arith.constant 4 : index
    %c0_134 = arith.constant 0 : index
    %299 = vector.load %arg10[%c0_132, %c4_133, %c0_134] : memref<2x8x128xf32, #tpu.memory_space<vmem>>, vector<1x4x128xf32>
    %300 = vector.shape_cast %299 : vector<1x4x128xf32> to vector<4x128xf32>
    %301 = vector.shape_cast %298 : vector<4x128xf32> to vector<1x4x128xf32>
    tpu.vector_store %arg10[%c0_132, %c4_133, %c0_134], %301 {strides = array<i32>} : memref<2x8x128xf32, #tpu.memory_space<vmem>>, vector<1x4x128xf32>,
    %c0_135 = arith.constant 0 : index
    %c0_136 = arith.constant 0 : index
    %302 = vector.load %arg4[%c0_135, %c0_136] : memref<64x8xf32, #tpu.memory_space<vmem>>, vector<64x8xf32>
    %c0_137 = arith.constant 0 : index
    %c0_138 = arith.constant 0 : index
    %c0_139 = arith.constant 0 : index
    %303 = vector.load %arg10[%c0_137, %c0_138, %c0_139] : memref<2x8x128xf32, #tpu.memory_space<vmem>>, vector<1x8x128xf32>
    %304 = vector.shape_cast %303 : vector<1x8x128xf32> to vector<8x128xf32>
    %cst_140 = arith.constant dense<0.000000e+00> : vector<64x128xf32>
    %305 = tpu.matmul %302, %304, %cst_140 {dimension_numbers = #tpu.dot_dimension_numbers<[1], [0], [0], [1], [0, 0, 1, 1], [], []>} : vector<64x8xf32>, vector<8x128xf32>, vector<64x128xf32> -> vector<64x128xf32>
    %306 = arith.addf %7, %305 : vector<64x128xf32>
    %307 = arith.mulf %306, %16 : vector<64x128xf32>
    %308 = arith.addf %307, %19 : vector<64x128xf32>
    %309 = math.tanh %308 : vector<64x128xf32>
    %310 = arith.mulf %309, %13 : vector<64x128xf32>
    %311 = arith.addf %310, %10 : vector<64x128xf32>
    %312 = arith.mulf %306, %311 : vector<64x128xf32>
    %c0_141 = arith.constant 0 : index
    %c0_142 = arith.constant 0 : index
    %313 = vector.load %arg6[%c0_141, %c0_142] : memref<16x64xf32, #tpu.memory_space<vmem>>, vector<16x64xf32>
    %cst_143 = arith.constant dense<0.000000e+00> : vector<16x128xf32>
    %314 = tpu.matmul %313, %312, %cst_143 {dimension_numbers = #tpu.dot_dimension_numbers<[1], [0], [0], [1], [0, 0, 1, 1], [], []>} : vector<16x64xf32>, vector<64x128xf32>, vector<16x128xf32> -> vector<16x128xf32>
    %315 = vector.broadcast %20 : vector<16x1xf32> to vector<16x128xf32>
    %316 = arith.addf %314, %315 : vector<16x128xf32>
    %317 = vector.broadcast %23 : vector<16x1xf32> to vector<16x128xf32>
    %318 = arith.mulf %316, %317 : vector<16x128xf32>
    %319 = vector.broadcast %24 : vector<16x1xf32> to vector<16x128xf32>
    %320 = arith.addf %318, %319 : vector<16x128xf32>
    %321 = math.tanh %320 : vector<16x128xf32>
    %322 = vector.broadcast %22 : vector<16x1xf32> to vector<16x128xf32>
    %323 = arith.mulf %321, %322 : vector<16x128xf32>
    %324 = vector.broadcast %21 : vector<16x1xf32> to vector<16x128xf32>
    %325 = arith.addf %323, %324 : vector<16x128xf32>
    %326 = arith.mulf %316, %325 : vector<16x128xf32>
    %327 = vector.broadcast %25 : vector<16x1xf32> to vector<16x128xf32>
    %328 = arith.mulf %327, %326 : vector<16x128xf32>
    %cst_144 = arith.constant dense<0.000000e+00> : vector<128xf32>
    %329 = vector.multi_reduction <add>, %328, %cst_144 [0] : vector<16x128xf32> to vector<128xf32>
    %330 = vector.shape_cast %329 : vector<128xf32> to vector<1x128xf32>
    %331 = vector.broadcast %26 : vector<1x1xf32> to vector<1x128xf32>
    %332 = arith.addf %330, %331 : vector<1x128xf32>
    %333 = vector.broadcast %332 : vector<1x128xf32> to vector<4x128xf32>
    %334 = arith.mulf %333, %294 : vector<4x128xf32>
    %335 = arith.addf %291, %334 : vector<4x128xf32>
    %336 = arith.index_cast %c0_i32 : i32 to index
    %c28 = arith.constant 28 : index
    %c0_145 = arith.constant 0 : index
    %337 = vector.load %arg2[%336, %c28, %c0_145] : memref<1x32x128xf32, #tpu.memory_space<vmem>>, vector<1x4x128xf32>
    %338 = vector.shape_cast %337 : vector<1x4x128xf32> to vector<4x128xf32>
    %c1_146 = arith.constant 1 : index
    %c0_147 = arith.constant 0 : index
    %c0_148 = arith.constant 0 : index
    %339 = vector.load %arg10[%c1_146, %c0_147, %c0_148] : memref<2x8x128xf32, #tpu.memory_space<vmem>>, vector<1x4x128xf32>
    %340 = vector.shape_cast %339 : vector<1x4x128xf32> to vector<4x128xf32>
    %341 = vector.shape_cast %338 : vector<4x128xf32> to vector<1x4x128xf32>
    tpu.vector_store %arg10[%c1_146, %c0_147, %c0_148], %341 {strides = array<i32>} : memref<2x8x128xf32, #tpu.memory_space<vmem>>, vector<1x4x128xf32>,
    %342 = arith.mulf %2, %338 : vector<4x128xf32>
    %c1_149 = arith.constant 1 : index
    %c4_150 = arith.constant 4 : index
    %c0_151 = arith.constant 0 : index
    %343 = vector.load %arg10[%c1_149, %c4_150, %c0_151] : memref<2x8x128xf32, #tpu.memory_space<vmem>>, vector<1x4x128xf32>
    %344 = vector.shape_cast %343 : vector<1x4x128xf32> to vector<4x128xf32>
    %345 = vector.shape_cast %342 : vector<4x128xf32> to vector<1x4x128xf32>
    tpu.vector_store %arg10[%c1_149, %c4_150, %c0_151], %345 {strides = array<i32>} : memref<2x8x128xf32, #tpu.memory_space<vmem>>, vector<1x4x128xf32>,
    %c0_152 = arith.constant 0 : index
    %c0_153 = arith.constant 0 : index
    %346 = vector.load %arg4[%c0_152, %c0_153] : memref<64x8xf32, #tpu.memory_space<vmem>>, vector<64x8xf32>
    %c1_154 = arith.constant 1 : index
    %c0_155 = arith.constant 0 : index
    %c0_156 = arith.constant 0 : index
    %347 = vector.load %arg10[%c1_154, %c0_155, %c0_156] : memref<2x8x128xf32, #tpu.memory_space<vmem>>, vector<1x8x128xf32>
    %348 = vector.shape_cast %347 : vector<1x8x128xf32> to vector<8x128xf32>
    %cst_157 = arith.constant dense<0.000000e+00> : vector<64x128xf32>
    %349 = tpu.matmul %346, %348, %cst_157 {dimension_numbers = #tpu.dot_dimension_numbers<[1], [0], [0], [1], [0, 0, 1, 1], [], []>} : vector<64x8xf32>, vector<8x128xf32>, vector<64x128xf32> -> vector<64x128xf32>
    %350 = arith.addf %7, %349 : vector<64x128xf32>
    %351 = arith.mulf %350, %16 : vector<64x128xf32>
    %352 = arith.addf %351, %19 : vector<64x128xf32>
    %353 = math.tanh %352 : vector<64x128xf32>
    %354 = arith.mulf %353, %13 : vector<64x128xf32>
    %355 = arith.addf %354, %10 : vector<64x128xf32>
    %356 = arith.mulf %350, %355 : vector<64x128xf32>
    %c0_158 = arith.constant 0 : index
    %c0_159 = arith.constant 0 : index
    %357 = vector.load %arg6[%c0_158, %c0_159] : memref<16x64xf32, #tpu.memory_space<vmem>>, vector<16x64xf32>
    %cst_160 = arith.constant dense<0.000000e+00> : vector<16x128xf32>
    %358 = tpu.matmul %357, %356, %cst_160 {dimension_numbers = #tpu.dot_dimension_numbers<[1], [0], [0], [1], [0, 0, 1, 1], [], []>} : vector<16x64xf32>, vector<64x128xf32>, vector<16x128xf32> -> vector<16x128xf32>
    %359 = vector.broadcast %20 : vector<16x1xf32> to vector<16x128xf32>
    %360 = arith.addf %358, %359 : vector<16x128xf32>
    %361 = vector.broadcast %23 : vector<16x1xf32> to vector<16x128xf32>
    %362 = arith.mulf %360, %361 : vector<16x128xf32>
    %363 = vector.broadcast %24 : vector<16x1xf32> to vector<16x128xf32>
    %364 = arith.addf %362, %363 : vector<16x128xf32>
    %365 = math.tanh %364 : vector<16x128xf32>
    %366 = vector.broadcast %22 : vector<16x1xf32> to vector<16x128xf32>
    %367 = arith.mulf %365, %366 : vector<16x128xf32>
    %368 = vector.broadcast %21 : vector<16x1xf32> to vector<16x128xf32>
    %369 = arith.addf %367, %368 : vector<16x128xf32>
    %370 = arith.mulf %360, %369 : vector<16x128xf32>
    %371 = vector.broadcast %25 : vector<16x1xf32> to vector<16x128xf32>
    %372 = arith.mulf %371, %370 : vector<16x128xf32>
    %cst_161 = arith.constant dense<0.000000e+00> : vector<128xf32>
    %373 = vector.multi_reduction <add>, %372, %cst_161 [0] : vector<16x128xf32> to vector<128xf32>
    %374 = vector.shape_cast %373 : vector<128xf32> to vector<1x128xf32>
    %375 = vector.broadcast %26 : vector<1x1xf32> to vector<1x128xf32>
    %376 = arith.addf %374, %375 : vector<1x128xf32>
    %377 = vector.broadcast %376 : vector<1x128xf32> to vector<4x128xf32>
    %378 = arith.mulf %377, %338 : vector<4x128xf32>
    %379 = arith.addf %335, %378 : vector<4x128xf32>
    %380 = arith.index_cast %c0_i32 : i32 to index
    %c0_162 = arith.constant 0 : index
    %c0_163 = arith.constant 0 : index
    %381 = vector.load %arg9[%380, %c0_162, %c0_163] : memref<1x4x128xf32, #tpu.memory_space<vmem>>, vector<1x4x128xf32>
    %382 = vector.shape_cast %381 : vector<1x4x128xf32> to vector<4x128xf32>
    %383 = vector.shape_cast %379 : vector<4x128xf32> to vector<1x4x128xf32>
    tpu.vector_store %arg9[%380, %c0_162, %c0_163], %383 {strides = array<i32>} : memref<1x4x128xf32, #tpu.memory_space<vmem>>, vector<1x4x128xf32>,
    %c1_i32 = arith.constant 1 : i32
    return
  }
  func.func @transform_0(%arg0: i32) -> (i32, i32, i32) {
    %c0_i32 = arith.constant 0 : i32
    %c0_i32_0 = arith.constant 0 : i32
    %c0_i32_1 = arith.constant 0 : i32
    return %arg0, %c0_i32, %c0_i32_0 : i32, i32, i32
  }
  func.func @transform_1(%arg0: i32) -> (i32, i32, i32) {
    %c0_i32 = arith.constant 0 : i32
    %c0_i32_0 = arith.constant 0 : i32
    %c0_i32_1 = arith.constant 0 : i32
    return %arg0, %c0_i32, %c0_i32_0 : i32, i32, i32
  }
  func.func @transform_2(%arg0: i32) -> (i32, i32) {
    %c0_i32 = arith.constant 0 : i32
    %c0_i32_0 = arith.constant 0 : i32
    %c0_i32_1 = arith.constant 0 : i32
    return %c0_i32, %c0_i32_0 : i32, i32
  }
  func.func @transform_3(%arg0: i32) -> (i32, i32) {
    %c0_i32 = arith.constant 0 : i32
    %c0_i32_0 = arith.constant 0 : i32
    %c0_i32_1 = arith.constant 0 : i32
    return %c0_i32, %c0_i32_0 : i32, i32
  }
  func.func @transform_4(%arg0: i32) -> (i32, i32) {
    %c0_i32 = arith.constant 0 : i32
    %c0_i32_0 = arith.constant 0 : i32
    %c0_i32_1 = arith.constant 0 : i32
    return %c0_i32, %c0_i32_0 : i32, i32
  }
  func.func @transform_5(%arg0: i32) -> (i32, i32) {
    %c0_i32 = arith.constant 0 : i32
    %c0_i32_0 = arith.constant 0 : i32
    %c0_i32_1 = arith.constant 0 : i32
    return %c0_i32, %c0_i32_0 : i32, i32
  }
  func.func @transform_6(%arg0: i32) -> (i32, i32) {
    %c0_i32 = arith.constant 0 : i32
    %c0_i32_0 = arith.constant 0 : i32
    %c0_i32_1 = arith.constant 0 : i32
    return %c0_i32, %c0_i32_0 : i32, i32
  }
  func.func @transform_7(%arg0: i32) -> (i32, i32) {
    %c0_i32 = arith.constant 0 : i32
    %c0_i32_0 = arith.constant 0 : i32
    %c0_i32_1 = arith.constant 0 : i32
    return %c0_i32, %c0_i32_0 : i32, i32
  }
  func.func @transform_8(%arg0: i32) -> (i32, i32, i32) {
    %c0_i32 = arith.constant 0 : i32
    %c0_i32_0 = arith.constant 0 : i32
    %c0_i32_1 = arith.constant 0 : i32
    return %arg0, %c0_i32, %c0_i32_0 : i32, i32, i32
  }
}

</mosaic_0001>

<llo_original>
// kernel: tpu_custom_call.1
$region0: #{tpu_custom_call.1}
  #allocation0 [shape = 'u32[]', space=smem, size = 0x4, offset = 0x4, fixed_abs, tag = 'smem constant byte address 0x4 - core index']
  #allocation1 [shape = 'u32[144,128]{1,0:T(1,128)}', space=vmem, size = 0x12000, scoped, tag = 'internal scratch']
  #allocation2 [shape = 'f32[2,8,128]{2,1,0:T(8,128)}', space=vmem, size = 0x2000, scoped, tag = 'scratch operand']
  %s0 = inlined_call_operand.vmem [shape: f32[1,4,128], index: 0, kind: input, shape index: {}]
  %s1 = inlined_call_operand.vmem [shape: f32[1,32,128], index: 1, kind: input, shape index: {}]
  %s2 = inlined_call_operand.vmem [shape: f32[64,4], index: 2, kind: input, shape index: {}]
  %s3 = inlined_call_operand.vmem [shape: f32[64,8], index: 3, kind: input, shape index: {}]
  %s4 = inlined_call_operand.vmem [shape: f32[64,5], index: 4, kind: input, shape index: {}]
  %s5 = inlined_call_operand.vmem [shape: f32[16,64], index: 5, kind: input, shape index: {}]
  %s6 = inlined_call_operand.vmem [shape: f32[16,5], index: 6, kind: input, shape index: {}]
  %s7 = inlined_call_operand.vmem [shape: f32[16,2], index: 7, kind: input, shape index: {}]
  %s8 = inlined_call_operand.hbm [shape: f32[1,4,128], index: 8, kind: output, shape index: {}]
  %s9 = sld [smem:[#allocation0]]
  $region42: #{tpu_custom_call.1} parent=0
    _
  %s11 = ssub.s32 1, %s9
  %s12 = scalar_select 0, %s11, %s9
  $region1: #{tpu_custom_call.1} parent=0
    #allocation3 [shape = 'u8[2048]{0}', space=vmem, size = 0x800, scoped, tag = 'output window, operand 0, single buffered']
    #allocation4 [shape = 's32[1]{0}', space=sflag, size = 0x4, scoped, tag = 'scoped memory for tpu_custom_call.1']
    %13 = vsyncpa [#allocation4], 0
    // Predicated region
    $region2: #{tpu_custom_call.1} parent=1 // pred_check
      _
    $region3: #{tpu_custom_call.1} parent=1 // pred_check_branch
      %15 = sbr.rel (0) target = $region5
    $region4: #{tpu_custom_call.1} parent=1 // pred_region
      _
    $region5: #{tpu_custom_call.1} parent=1 // pred_fallthru
      _
    // Predicated region
    $region6: #{tpu_custom_call.1} parent=1 // pred_check
      _
    $region7: #{tpu_custom_call.1} parent=1 // pred_check_branch
      %17 = sbr.rel (0) target = $region9
    $region8: #{tpu_custom_call.1} parent=1 // pred_region
      _
    $region9: #{tpu_custom_call.1} parent=1 // pred_fallthru
      _
    // Predicated region
    $region10: #{tpu_custom_call.1} parent=1 // pred_check
      _
    $region11: #{tpu_custom_call.1} parent=1 // pred_check_branch
      %19 = sbr.rel (0) target = $region13
    $region12: #{tpu_custom_call.1} parent=1 // pred_region
      _
    $region13: #{tpu_custom_call.1} parent=1 // pred_fallthru
      _
    // Predicated region
    $region14: #{tpu_custom_call.1} parent=1 // pred_check
      _
    $region15: #{tpu_custom_call.1} parent=1 // pred_check_branch
      %21 = sbr.rel (0) target = $region17
    $region16: #{tpu_custom_call.1} parent=1 // pred_region
      _
    $region17: #{tpu_custom_call.1} parent=1 // pred_fallthru
      _
    // Predicated region
    $region18: #{tpu_custom_call.1} parent=1 // pred_check
      _
    $region19: #{tpu_custom_call.1} parent=1 // pred_check_branch
      %23 = sbr.rel (0) target = $region21
    $region20: #{tpu_custom_call.1} parent=1 // pred_region
      _
    $region21: #{tpu_custom_call.1} parent=1 // pred_fallthru
      _
    // Predicated region
    $region22: #{tpu_custom_call.1} parent=1 // pred_check
      _
    $region23: #{tpu_custom_call.1} parent=1 // pred_check_branch
      %25 = sbr.rel (0) target = $region25
    $region24: #{tpu_custom_call.1} parent=1 // pred_region
      _
    $region25: #{tpu_custom_call.1} parent=1 // pred_fallthru
      _
    // Predicated region
    $region26: #{tpu_custom_call.1} parent=1 // pred_check
      _
    $region27: #{tpu_custom_call.1} parent=1 // pred_check_branch
      %27 = sbr.rel (0) target = $region29
    $region28: #{tpu_custom_call.1} parent=1 // pred_region
      _
    $region29: #{tpu_custom_call.1} parent=1 // pred_fallthru
      _
    // Predicated region
    $region30: #{tpu_custom_call.1} parent=1 // pred_check
      _
    $region31: #{tpu_custom_call.1} parent=1 // pred_check_branch
      %29 = sbr.rel (0) target = $region33
    $region32: #{tpu_custom_call.1} parent=1 // pred_region
      _
    $region33: #{tpu_custom_call.1} parent=1 // pred_fallthru
      _
    %v30 = vld [vmem:[%s0] sm:$0xf]
    %v31 = vld [vmem:[%s2] sm:$0xff]
    %v32 = vld [vmem:[%s2 + $0x8] sm:$0xff]
    %v33 = vld [vmem:[%s2 + $0x10] sm:$0xff]
    %v34 = vld [vmem:[%s2 + $0x18] sm:$0xff]
    %v35 = vld [vmem:[%s2 + $0x20] sm:$0xff]
    %v36 = vld [vmem:[%s2 + $0x28] sm:$0xff]
    %v37 = vld [vmem:[%s2 + $0x30] sm:$0xff]
    %v38 = vld [vmem:[%s2 + $0x38] sm:$0xff]
    %v39 = vld [vmem:[%s4] sm:$0xff]
    %v40 = vld [vmem:[%s4 + $0x8] sm:$0xff]
    %v41 = vld [vmem:[%s4 + $0x10] sm:$0xff]
    %v42 = vld [vmem:[%s4 + $0x18] sm:$0xff]
    %v43 = vld [vmem:[%s4 + $0x20] sm:$0xff]
    %v44 = vld [vmem:[%s4 + $0x28] sm:$0xff]
    %v45 = vld [vmem:[%s4 + $0x30] sm:$0xff]
    %v46 = vld [vmem:[%s4 + $0x38] sm:$0xff]
    %48 = vset.pattern.permute.xlu0 0
    %49 = vperm.xlu0 %48, %v39
    %v50 = vpop.permute.xlu0 %49
    %53 = vset.pattern.permute.xlu0 0
    %54 = vperm.xlu0 %53, %v40
    %v55 = vpop.permute.xlu0 %54
    %58 = vset.pattern.permute.xlu0 0
    %59 = vperm.xlu0 %58, %v41
    %v60 = vpop.permute.xlu0 %59
    %63 = vset.pattern.permute.xlu0 0
    %64 = vperm.xlu0 %63, %v42
    %v65 = vpop.permute.xlu0 %64
    %68 = vset.pattern.permute.xlu0 0
    %69 = vperm.xlu0 %68, %v43
    %v70 = vpop.permute.xlu0 %69
    %73 = vset.pattern.permute.xlu0 0
    %74 = vperm.xlu0 %73, %v44
    %v75 = vpop.permute.xlu0 %74
    %78 = vset.pattern.permute.xlu0 0
    %79 = vperm.xlu0 %78, %v45
    %v80 = vpop.permute.xlu0 %79
    %83 = vset.pattern.permute.xlu0 0
    %84 = vperm.xlu0 %83, %v46
    %v85 = vpop.permute.xlu0 %84
    %vm87 = vcmask 31744
    %v89 = vsel %vm87, %v31, 0
    %v92 = vsel %vm87, %v32, 0
    %v95 = vsel %vm87, %v33, 0
    %v98 = vsel %vm87, %v34, 0
    %v101 = vsel %vm87, %v35, 0
    %v104 = vsel %vm87, %v36, 0
    %v107 = vsel %vm87, %v37, 0
    %v110 = vsel %vm87, %v38, 0
    %vm112 = vcmask 1043456
    %v114 = vsel %vm112, %v30, 0
    %116 = vmatprep.subr.mxu0 0.0
    %117 = vmatpush1.msra.mxu0 %v114
    %118 = vmatprep.subr.mxu0 0.0
    %119 = vmatpush1.msra.mxu0 0.0
    %120 = vmatprep.subr.mxu0 0.0
    %121 = vmatpush1.msra.mxu0 0.0
    %122 = vmatprep.subr.mxu0 0.0
    %123 = vmatpush1.msra.mxu0 0.0
    %124 = vmatprep.subr.mxu0 0.0
    %125 = vmatpush1.msra.mxu0 0.0
    %126 = vmatprep.subr.mxu0 0.0
    %127 = vmatpush1.msra.mxu0 0.0
    %128 = vmatprep.subr.mxu0 0.0
    %129 = vmatpush1.msra.mxu0 0.0
    %130 = vmatprep.subr.mxu0 0.0
    %131 = vmatpush1.msra.mxu0 0.0
    %132 = vmatprep.subr.mxu0 0.0
    %133 = vmatpush1.msra.mxu0 0.0
    %134 = vmatprep.subr.mxu0 0.0
    %135 = vmatpush1.msra.mxu0 0.0
    %136 = vmatprep.subr.mxu0 0.0
    %137 = vmatpush1.msra.mxu0 0.0
    %138 = vmatprep.subr.mxu0 0.0
    %139 = vmatpush1.msra.mxu0 0.0
    %140 = vmatprep.subr.mxu0 0.0
    %141 = vmatpush1.msra.mxu0 0.0
    %142 = vmatprep.subr.mxu0 0.0
    %143 = vmatpush1.msra.mxu0 0.0
    %144 = vmatprep.subr.mxu0 0.0
    %145 = vmatpush1.msra.mxu0 0.0
    %146 = vmatprep.subr.mxu0 0.0
    %147 = vmatpush1.msra.mxu0 0.0
    %148 = vmatprep.subr.mxu0 0.0
    %149 = vmatpush1.msra.mxu0 0.0
    %150 = vmatprep.subr.mxu0 0.0
    %151 = vmatpush1.msra.mxu0 0.0
    %152 = vmatprep.subr.mxu0 0.0
    %153 = vmatpush1.msra.mxu0 0.0
    %154 = vmatprep.subr.mxu0 0.0
    %155 = vmatpush1.msra.mxu0 0.0
    %156 = vmatprep.subr.mxu0 0.0
    %157 = vmatpush1.msra.mxu0 0.0
    %158 = vmatprep.subr.mxu0 0.0
    %159 = vmatpush1.msra.mxu0 0.0
    %160 = vmatprep.subr.mxu0 0.0
    %161 = vmatpush1.msra.mxu0 0.0
    %162 = vmatprep.subr.mxu0 0.0
    %163 = vmatpush1.msra.mxu0 0.0
    %164 = vmatprep.subr.mxu0 0.0
    %165 = vmatpush1.msra.mxu0 0.0
    %166 = vmatprep.subr.mxu0 0.0
    %167 = vmatpush1.msra.mxu0 0.0
    %168 = vmatprep.subr.mxu0 0.0
    %169 = vmatpush1.msra.mxu0 0.0
    %170 = vmatprep.subr.mxu0 0.0
    %171 = vmatpush1.msra.mxu0 0.0
    %172 = vmatprep.subr.mxu0 0.0
    %173 = vmatpush1.msra.mxu0 0.0
    %174 = vmatprep.subr.mxu0 0.0
    %175 = vmatpush1.msra.mxu0 0.0
    %176 = vmatprep.subr.mxu0 0.0
    %177 = vmatpush1.msra.mxu0 0.0
    %178 = vmatprep.subr.mxu0 0.0
    %179 = vmatpush1.msra.mxu0 0.0
    %180 = vmatprep.mubr.f32.mxu0 0.0
    %181 = vmatmul.mubr.f32.gmra.mrb[0].mxu0 %v89
    %v182 = vpop.f32.mrb[0].mxu0
    %v183 = vadd.f32 %v50, %v182
    %v184 = vpop.f32.mrb[0].mxu0
    %185 = vmatprep.mubr.f32.mxu0 0.0
    %186 = vmatmul.mubr.f32.gmra.mrb[0].mxu0 %v92
    %v187 = vpop.f32.mrb[0].mxu0
    %v188 = vadd.f32 %v55, %v187
    %v189 = vpop.f32.mrb[0].mxu0
    %190 = vmatprep.mubr.f32.mxu0 0.0
    %191 = vmatmul.mubr.f32.gmra.mrb[0].mxu0 %v95
    %v192 = vpop.f32.mrb[0].mxu0
    %v193 = vadd.f32 %v60, %v192
    %v194 = vpop.f32.mrb[0].mxu0
    %195 = vmatprep.mubr.f32.mxu0 0.0
    %196 = vmatmul.mubr.f32.gmra.mrb[0].mxu0 %v98
    %v197 = vpop.f32.mrb[0].mxu0
    %v198 = vadd.f32 %v65, %v197
    %v199 = vpop.f32.mrb[0].mxu0
    %200 = vmatprep.mubr.f32.mxu0 0.0
    %201 = vmatmul.mubr.f32.gmra.mrb[0].mxu0 %v101
    %v202 = vpop.f32.mrb[0].mxu0
    %v203 = vadd.f32 %v70, %v202
    %v204 = vpop.f32.mrb[0].mxu0
    %205 = vmatprep.mubr.f32.mxu0 0.0
    %206 = vmatmul.mubr.f32.gmra.mrb[0].mxu0 %v104
    %v207 = vpop.f32.mrb[0].mxu0
    %v208 = vadd.f32 %v75, %v207
    %v209 = vpop.f32.mrb[0].mxu0
    %210 = vmatprep.mubr.f32.mxu0 0.0
    %211 = vmatmul.mubr.f32.gmra.mrb[0].mxu0 %v107
    %v212 = vpop.f32.mrb[0].mxu0
    %v213 = vadd.f32 %v80, %v212
    %v214 = vpop.f32.mrb[0].mxu0
    %215 = vmatprep.mubr.f32.mxu0 0.0
    %216 = vmatmul.mubr.f32.gmra.mrb[0].mxu0 %v110
    %v217 = vpop.f32.mrb[0].mxu0
    %v218 = vadd.f32 %v85, %v217
    %v219 = vpop.f32.mrb[0].mxu0
    %220 = vdwg.mxu0
    %221 = vset.pattern.permute.xlu0 1
    %222 = vperm.xlu0 %221, %v39
    %v223 = vpop.permute.xlu0 %222
    %225 = vset.pattern.permute.xlu0 1
    %226 = vperm.xlu0 %225, %v40
    %v227 = vpop.permute.xlu0 %226
    %229 = vset.pattern.permute.xlu0 1
    %230 = vperm.xlu0 %229, %v41
    %v231 = vpop.permute.xlu0 %230
    %233 = vset.pattern.permute.xlu0 1
    %234 = vperm.xlu0 %233, %v42
    %v235 = vpop.permute.xlu0 %234
    %237 = vset.pattern.permute.xlu0 1
    %238 = vperm.xlu0 %237, %v43
    %v239 = vpop.permute.xlu0 %238
    %241 = vset.pattern.permute.xlu0 1
    %242 = vperm.xlu0 %241, %v44
    %v243 = vpop.permute.xlu0 %242
    %245 = vset.pattern.permute.xlu0 1
    %246 = vperm.xlu0 %245, %v45
    %v247 = vpop.permute.xlu0 %246
    %249 = vset.pattern.permute.xlu0 1
    %250 = vperm.xlu0 %249, %v46
    %v251 = vpop.permute.xlu0 %250
    %253 = vset.pattern.permute.xlu0 2
    %254 = vperm.xlu0 %253, %v39
    %v255 = vpop.permute.xlu0 %254
    %257 = vset.pattern.permute.xlu0 2
    %258 = vperm.xlu0 %257, %v40
    %v259 = vpop.permute.xlu0 %258
    %261 = vset.pattern.permute.xlu0 2
    %262 = vperm.xlu0 %261, %v41
    %v263 = vpop.permute.xlu0 %262
    %265 = vset.pattern.permute.xlu0 2
    %266 = vperm.xlu0 %265, %v42
    %v267 = vpop.permute.xlu0 %266
    %269 = vset.pattern.permute.xlu0 2
    %270 = vperm.xlu0 %269, %v43
    %v271 = vpop.permute.xlu0 %270
    %273 = vset.pattern.permute.xlu0 2
    %274 = vperm.xlu0 %273, %v44
    %v275 = vpop.permute.xlu0 %274
    %277 = vset.pattern.permute.xlu0 2
    %278 = vperm.xlu0 %277, %v45
    %v279 = vpop.permute.xlu0 %278
    %281 = vset.pattern.permute.xlu0 2
    %282 = vperm.xlu0 %281, %v46
    %v283 = vpop.permute.xlu0 %282
    %285 = vset.pattern.permute.xlu0 3
    %286 = vperm.xlu0 %285, %v39
    %v287 = vpop.permute.xlu0 %286
    %289 = vset.pattern.permute.xlu0 3
    %290 = vperm.xlu0 %289, %v40
    %v291 = vpop.permute.xlu0 %290
    %293 = vset.pattern.permute.xlu0 3
    %294 = vperm.xlu0 %293, %v41
    %v295 = vpop.permute.xlu0 %294
    %297 = vset.pattern.permute.xlu0 3
    %298 = vperm.xlu0 %297, %v42
    %v299 = vpop.permute.xlu0 %298
    %301 = vset.pattern.permute.xlu0 3
    %302 = vperm.xlu0 %301, %v43
    %v303 = vpop.permute.xlu0 %302
    %305 = vset.pattern.permute.xlu0 3
    %306 = vperm.xlu0 %305, %v44
    %v307 = vpop.permute.xlu0 %306
    %309 = vset.pattern.permute.xlu0 3
    %310 = vperm.xlu0 %309, %v45
    %v311 = vpop.permute.xlu0 %310
    %313 = vset.pattern.permute.xlu0 3
    %314 = vperm.xlu0 %313, %v46
    %v315 = vpop.permute.xlu0 %314
    %317 = vset.pattern.permute.xlu0 4
    %318 = vperm.xlu0 %317, %v39
    %v319 = vpop.permute.xlu0 %318
    %321 = vset.pattern.permute.xlu0 4
    %322 = vperm.xlu0 %321, %v40
    %v323 = vpop.permute.xlu0 %322
    %325 = vset.pattern.permute.xlu0 4
    %326 = vperm.xlu0 %325, %v41
    %v327 = vpop.permute.xlu0 %326
    %329 = vset.pattern.permute.xlu0 4
    %330 = vperm.xlu0 %329, %v42
    %v331 = vpop.permute.xlu0 %330
    %333 = vset.pattern.permute.xlu0 4
    %334 = vperm.xlu0 %333, %v43
    %v335 = vpop.permute.xlu0 %334
    %337 = vset.pattern.permute.xlu0 4
    %338 = vperm.xlu0 %337, %v44
    %v339 = vpop.permute.xlu0 %338
    %341 = vset.pattern.permute.xlu0 4
    %342 = vperm.xlu0 %341, %v45
    %v343 = vpop.permute.xlu0 %342
    %345 = vset.pattern.permute.xlu0 4
    %346 = vperm.xlu0 %345, %v46
    %v347 = vpop.permute.xlu0 %346
    %v349 = vld [vmem:[%s6] sm:$0xff]
    %v350 = vld [vmem:[%s6 + $0x8] sm:$0xff]
    %v351 = vld [vmem:[%s7] sm:$0xff]
    %v352 = vld [vmem:[%s7 + $0x8] sm:$0xff]
    %v353 = vld [vmem:[%s7] sm:$0x1]
    %v354 = vld [vmem:[%s1] sm:$0xf]
    %355 = vst [vmem:[#allocation2] sm:$0xf] %v354
    %v356 = vmul.f32 %v30, %v354
    %357 = vst [vmem:[#allocation2 + $0x4] sm:$0xf] %v356
    %v358 = vld [vmem:[%s3] sm:$0xff]
    %v359 = vld [vmem:[%s3 + $0x8] sm:$0xff]
    %v360 = vld [vmem:[%s3 + $0x10] sm:$0xff]
    %v361 = vld [vmem:[%s3 + $0x18] sm:$0xff]
    %v362 = vld [vmem:[%s3 + $0x20] sm:$0xff]
    %v363 = vld [vmem:[%s3 + $0x28] sm:$0xff]
    %v364 = vld [vmem:[%s3 + $0x30] sm:$0xff]
    %v365 = vld [vmem:[%s3 + $0x38] sm:$0xff]
    %v366 = vld [vmem:[#allocation2] sm:$0xff]
    %vm367 = vcmask 64512
    %v369 = vsel %vm367, %v358, 0
    %v372 = vsel %vm367, %v359, 0
    %v375 = vsel %vm367, %v360, 0
    %v378 = vsel %vm367, %v361, 0
    %v381 = vsel %vm367, %v362, 0
    %v384 = vsel %vm367, %v363, 0
    %v387 = vsel %vm367, %v364, 0
    %v390 = vsel %vm367, %v365, 0
    %392 = vmatprep.subr.mxu0 0.0
    %393 = vmatpush1.msra.mxu0 %v366
    %394 = vmatprep.subr.mxu0 0.0
    %395 = vmatpush1.msra.mxu0 0.0
    %396 = vmatprep.subr.mxu0 0.0
    %397 = vmatpush1.msra.mxu0 0.0
    %398 = vmatprep.subr.mxu0 0.0
    %399 = vmatpush1.msra.mxu0 0.0
    %400 = vmatprep.subr.mxu0 0.0
    %401 = vmatpush1.msra.mxu0 0.0
    %402 = vmatprep.subr.mxu0 0.0
    %403 = vmatpush1.msra.mxu0 0.0
    %404 = vmatprep.subr.mxu0 0.0
    %405 = vmatpush1.msra.mxu0 0.0
    %406 = vmatprep.subr.mxu0 0.0
    %407 = vmatpush1.msra.mxu0 0.0
    %408 = vmatprep.subr.mxu0 0.0
    %409 = vmatpush1.msra.mxu0 0.0
    %410 = vmatprep.subr.mxu0 0.0
    %411 = vmatpush1.msra.mxu0 0.0
    %412 = vmatprep.subr.mxu0 0.0
    %413 = vmatpush1.msra.mxu0 0.0
    %414 = vmatprep.subr.mxu0 0.0
    %415 = vmatpush1.msra.mxu0 0.0
    %416 = vmatprep.subr.mxu0 0.0
    %417 = vmatpush1.msra.mxu0 0.0
    %418 = vmatprep.subr.mxu0 0.0
    %419 = vmatpush1.msra.mxu0 0.0
    %420 = vmatprep.subr.mxu0 0.0
    %421 = vmatpush1.msra.mxu0 0.0
    %422 = vmatprep.subr.mxu0 0.0
    %423 = vmatpush1.msra.mxu0 0.0
    %424 = vmatprep.subr.mxu0 0.0
    %425 = vmatpush1.msra.mxu0 0.0
    %426 = vmatprep.subr.mxu0 0.0
    %427 = vmatpush1.msra.mxu0 0.0
    %428 = vmatprep.subr.mxu0 0.0
    %429 = vmatpush1.msra.mxu0 0.0
    %430 = vmatprep.subr.mxu0 0.0
    %431 = vmatpush1.msra.mxu0 0.0
    %432 = vmatprep.subr.mxu0 0.0
    %433 = vmatpush1.msra.mxu0 0.0
    %434 = vmatprep.subr.mxu0 0.0
    %435 = vmatpush1.msra.mxu0 0.0
    %436 = vmatprep.subr.mxu0 0.0
    %437 = vmatpush1.msra.mxu0 0.0
    %438 = vmatprep.subr.mxu0 0.0
    %439 = vmatpush1.msra.mxu0 0.0
    %440 = vmatprep.subr.mxu0 0.0
    %441 = vmatpush1.msra.mxu0 0.0
    %442 = vmatprep.subr.mxu0 0.0
    %443 = vmatpush1.msra.mxu0 0.0
    %444 = vmatprep.subr.mxu0 0.0
    %445 = vmatpush1.msra.mxu0 0.0
    %446 = vmatprep.subr.mxu0 0.0
    %447 = vmatpush1.msra.mxu0 0.0
    %448 = vmatprep.subr.mxu0 0.0
    %449 = vmatpush1.msra.mxu0 0.0
    %450 = vmatprep.subr.mxu0 0.0
    %451 = vmatpush1.msra.mxu0 0.0
    %452 = vmatprep.subr.mxu0 0.0
    %453 = vmatpush1.msra.mxu0 0.0
    %454 = vmatprep.subr.mxu0 0.0
    %455 = vmatpush1.msra.mxu0 0.0
    %456 = vmatprep.mubr.f32.mxu0 0.0
    %457 = vmatmul.mubr.f32.gmra.mrb[0].mxu0 %v369
    %v458 = vpop.f32.mrb[0].mxu0
    %v459 = vadd.f32 0.0, %v458
    %v460 = vpop.f32.mrb[0].mxu0
    %461 = vmatprep.mubr.f32.mxu0 0.0
    %462 = vmatmul.mubr.f32.gmra.mrb[0].mxu0 %v372
    %v463 = vpop.f32.mrb[0].mxu0
    %v464 = vadd.f32 0.0, %v463
    %v465 = vpop.f32.mrb[0].mxu0
    %466 = vmatprep.mubr.f32.mxu0 0.0
    %467 = vmatmul.mubr.f32.gmra.mrb[0].mxu0 %v375
    %v468 = vpop.f32.mrb[0].mxu0
    %v469 = vadd.f32 0.0, %v468
    %v470 = vpop.f32.mrb[0].mxu0
    %471 = vmatprep.mubr.f32.mxu0 0.0
    %472 = vmatmul.mubr.f32.gmra.mrb[0].mxu0 %v378
    %v473 = vpop.f32.mrb[0].mxu0
    %v474 = vadd.f32 0.0, %v473
    %v475 = vpop.f32.mrb[0].mxu0
    %476 = vmatprep.mubr.f32.mxu0 0.0
    %477 = vmatmul.mubr.f32.gmra.mrb[0].mxu0 %v381
    %v478 = vpop.f32.mrb[0].mxu0
    %v479 = vadd.f32 0.0, %v478
    %v480 = vpop.f32.mrb[0].mxu0
    %481 = vmatprep.mubr.f32.mxu0 0.0
    %482 = vmatmul.mubr.f32.gmra.mrb[0].mxu0 %v384
    %v483 = vpop.f32.mrb[0].mxu0
    %v484 = vadd.f32 0.0, %v483
    %v485 = vpop.f32.mrb[0].mxu0
    %486 = vmatprep.mubr.f32.mxu0 0.0
    %487 = vmatmul.mubr.f32.gmra.mrb[0].mxu0 %v387
    %v488 = vpop.f32.mrb[0].mxu0
    %v489 = vadd.f32 0.0, %v488
    %v490 = vpop.f32.mrb[0].mxu0
    %491 = vmatprep.mubr.f32.mxu0 0.0
    %492 = vmatmul.mubr.f32.gmra.mrb[0].mxu0 %v390
    %v493 = vpop.f32.mrb[0].mxu0
    %v494 = vadd.f32 0.0, %v493
    %v495 = vpop.f32.mrb[0].mxu0
    %496 = vdwg.mxu0
    %v497 = vadd.f32 %v183, %v459
    %v498 = vadd.f32 %v188, %v464
    %v499 = vadd.f32 %v193, %v469
    %v500 = vadd.f32 %v198, %v474
    %v501 = vadd.f32 %v203, %v479
    %v502 = vadd.f32 %v208, %v484
    %v503 = vadd.f32 %v213, %v489
    %v504 = vadd.f32 %v218, %v494
    %v505 = vmul.f32 %v497, %v287
    %v506 = vmul.f32 %v498, %v291
    %v507 = vmul.f32 %v499, %v295
    %v508 = vmul.f32 %v500, %v299
    %v509 = vmul.f32 %v501, %v303
    %v510 = vmul.f32 %v502, %v307
    %v511 = vmul.f32 %v503, %v311
    %v512 = vmul.f32 %v504, %v315
    %v513 = vadd.f32 %v505, %v319
    %v514 = vadd.f32 %v506, %v323
    %v515 = vadd.f32 %v507, %v327
    %v516 = vadd.f32 %v508, %v331
    %v517 = vadd.f32 %v509, %v335
    %v518 = vadd.f32 %v510, %v339
    %v519 = vadd.f32 %v511, %v343
    %v520 = vadd.f32 %v512, %v347
    %v521 = vtanh.pop %v513
    %v522 = vtanh.pop %v514
    %v523 = vtanh.pop %v515
    %v524 = vtanh.pop %v516
    %v525 = vtanh.pop %v517
    %v526 = vtanh.pop %v518
    %v527 = vtanh.pop %v519
    %v528 = vtanh.pop %v520
    %v529 = vmul.f32 %v521, %v255
    %v530 = vmul.f32 %v522, %v259
    %v531 = vmul.f32 %v523, %v263
    %v532 = vmul.f32 %v524, %v267
    %v533 = vmul.f32 %v525, %v271
    %v534 = vmul.f32 %v526, %v275
    %v535 = vmul.f32 %v527, %v279
    %v536 = vmul.f32 %v528, %v283
    %v537 = vadd.f32 %v529, %v223
    %v538 = vadd.f32 %v530, %v227
    %v539 = vadd.f32 %v531, %v231
    %v540 = vadd.f32 %v532, %v235
    %v541 = vadd.f32 %v533, %v239
    %v542 = vadd.f32 %v534, %v243
    %v543 = vadd.f32 %v535, %v247
    %v544 = vadd.f32 %v536, %v251
    %v545 = vmul.f32 %v497, %v537
    %v546 = vmul.f32 %v498, %v538
    %v547 = vmul.f32 %v499, %v539
    %v548 = vmul.f32 %v500, %v540
    %v549 = vmul.f32 %v501, %v541
    %v550 = vmul.f32 %v502, %v542
    %v551 = vmul.f32 %v503, %v543
    %v552 = vmul.f32 %v504, %v544
    %v553 = vld [vmem:[%s5] sm:$0xff]
    %v554 = vld [vmem:[%s5 + $0x8] sm:$0xff]
    %556 = vset.pattern.permute.xlu0 0
    %557 = vperm.xlu0 %556, %v349
    %v558 = vpop.permute.xlu0 %557
    %561 = vset.pattern.permute.xlu0 0
    %562 = vperm.xlu0 %561, %v350
    %v563 = vpop.permute.xlu0 %562
    %vm565 = vcmask 523264
    %v567 = vsel %vm565, %v553, 0
    %v570 = vsel %vm565, %v554, 0
    %572 = vmatprep.subr.mxu0 0.0
    %573 = vmatpush1.msra.mxu0 %v545
    %574 = vmatprep.subr.mxu0 0.0
    %575 = vmatpush1.msra.mxu0 %v546
    %576 = vmatprep.subr.mxu0 0.0
    %577 = vmatpush1.msra.mxu0 %v547
    %578 = vmatprep.subr.mxu0 0.0
    %579 = vmatpush1.msra.mxu0 %v548
    %580 = vmatprep.subr.mxu0 0.0
    %581 = vmatpush1.msra.mxu0 %v549
    %582 = vmatprep.subr.mxu0 0.0
    %583 = vmatpush1.msra.mxu0 %v550
    %584 = vmatprep.subr.mxu0 0.0
    %585 = vmatpush1.msra.mxu0 %v551
    %586 = vmatprep.subr.mxu0 0.0
    %587 = vmatpush1.msra.mxu0 %v552
    %588 = vmatprep.subr.mxu0 0.0
    %589 = vmatpush1.msra.mxu0 0.0
    %590 = vmatprep.subr.mxu0 0.0
    %591 = vmatpush1.msra.mxu0 0.0
    %592 = vmatprep.subr.mxu0 0.0
    %593 = vmatpush1.msra.mxu0 0.0
    %594 = vmatprep.subr.mxu0 0.0
    %595 = vmatpush1.msra.mxu0 0.0
    %596 = vmatprep.subr.mxu0 0.0
    %597 = vmatpush1.msra.mxu0 0.0
    %598 = vmatprep.subr.mxu0 0.0
    %599 = vmatpush1.msra.mxu0 0.0
    %600 = vmatprep.subr.mxu0 0.0
    %601 = vmatpush1.msra.mxu0 0.0
    %602 = vmatprep.subr.mxu0 0.0
    %603 = vmatpush1.msra.mxu0 0.0
    %604 = vmatprep.subr.mxu0 0.0
    %605 = vmatpush1.msra.mxu0 0.0
    %606 = vmatprep.subr.mxu0 0.0
    %607 = vmatpush1.msra.mxu0 0.0
    %608 = vmatprep.subr.mxu0 0.0
    %609 = vmatpush1.msra.mxu0 0.0
    %610 = vmatprep.subr.mxu0 0.0
    %611 = vmatpush1.msra.mxu0 0.0
    %612 = vmatprep.subr.mxu0 0.0
    %613 = vmatpush1.msra.mxu0 0.0
    %614 = vmatprep.subr.mxu0 0.0
    %615 = vmatpush1.msra.mxu0 0.0
    %616 = vmatprep.subr.mxu0 0.0
    %617 = vmatpush1.msra.mxu0 0.0
    %618 = vmatprep.subr.mxu0 0.0
    %619 = vmatpush1.msra.mxu0 0.0
    %620 = vmatprep.subr.mxu0 0.0
    %621 = vmatpush1.msra.mxu0 0.0
    %622 = vmatprep.subr.mxu0 0.0
    %623 = vmatpush1.msra.mxu0 0.0
    %624 = vmatprep.subr.mxu0 0.0
    %625 = vmatpush1.msra.mxu0 0.0
    %626 = vmatprep.subr.mxu0 0.0
    %627 = vmatpush1.msra.mxu0 0.0
    %628 = vmatprep.subr.mxu0 0.0
    %629 = vmatpush1.msra.mxu0 0.0
    %630 = vmatprep.subr.mxu0 0.0
    %631 = vmatpush1.msra.mxu0 0.0
    %632 = vmatprep.subr.mxu0 0.0
    %633 = vmatpush1.msra.mxu0 0.0
    %634 = vmatprep.subr.mxu0 0.0
    %635 = vmatpush1.msra.mxu0 0.0
    %636 = vmatprep.mubr.f32.mxu0 0.0
    %637 = vmatmul.mubr.f32.gmra.mrb[0].mxu0 %v567
    %v638 = vpop.f32.mrb[0].mxu0
    %v639 = vadd.f32 %v558, %v638
    %v640 = vpop.f32.mrb[0].mxu0
    %641 = vmatprep.mubr.f32.mxu0 0.0
    %642 = vmatmul.mubr.f32.gmra.mrb[0].mxu0 %v570
    %v643 = vpop.f32.mrb[0].mxu0
    %v644 = vadd.f32 %v563, %v643
    %v645 = vpop.f32.mrb[0].mxu0
    %646 = vdwg.mxu0
    %647 = vset.pattern.permute.xlu0 3
    %648 = vperm.xlu0 %647, %v349
    %v649 = vpop.permute.xlu0 %648
    %651 = vset.pattern.permute.xlu0 3
    %652 = vperm.xlu0 %651, %v350
    %v653 = vpop.permute.xlu0 %652
    %v655 = vmul.f32 %v639, %v649
    %v656 = vmul.f32 %v644, %v653
    %657 = vset.pattern.permute.xlu0 4
    %658 = vperm.xlu0 %657, %v349
    %v659 = vpop.permute.xlu0 %658
    %661 = vset.pattern.permute.xlu0 4
    %662 = vperm.xlu0 %661, %v350
    %v663 = vpop.permute.xlu0 %662
    %v665 = vadd.f32 %v655, %v659
    %v666 = vadd.f32 %v656, %v663
    %v667 = vtanh.pop %v665
    %v668 = vtanh.pop %v666
    %669 = vset.pattern.permute.xlu0 2
    %670 = vperm.xlu0 %669, %v349
    %v671 = vpop.permute.xlu0 %670
    %673 = vset.pattern.permute.xlu0 2
    %674 = vperm.xlu0 %673, %v350
    %v675 = vpop.permute.xlu0 %674
    %v677 = vmul.f32 %v667, %v671
    %v678 = vmul.f32 %v668, %v675
    %679 = vset.pattern.permute.xlu0 1
    %680 = vperm.xlu0 %679, %v349
    %v681 = vpop.permute.xlu0 %680
    %683 = vset.pattern.permute.xlu0 1
    %684 = vperm.xlu0 %683, %v350
    %v685 = vpop.permute.xlu0 %684
    %v687 = vadd.f32 %v677, %v681
    %v688 = vadd.f32 %v678, %v685
    %v689 = vmul.f32 %v639, %v687
    %v690 = vmul.f32 %v644, %v688
    %692 = vset.pattern.permute.xlu0 0
    %693 = vperm.xlu0 %692, %v351
    %v694 = vpop.permute.xlu0 %693
    %697 = vset.pattern.permute.xlu0 0
    %698 = vperm.xlu0 %697, %v352
    %v699 = vpop.permute.xlu0 %698
    %v701 = vmul.f32 %v694, %v689
    %v702 = vmul.f32 %v699, %v690
    %v703 = vadd.f32 %v701, %v702
    %v704 = vrot.slane %v703, 4
    %v705 = vadd.f32 %v703, %v704
    %v706 = vrot.slane %v705, 2
    %v707 = vadd.f32 %v705, %v706
    %v708 = vrot.slane %v707, 1
    %v709 = vadd.f32 %v707, %v708
    %711 = vset.pattern.permute.xlu0 1
    %712 = vperm.xlu0 %711, %v353
    %v713 = vpop.permute.xlu0 %712
    %v715 = vadd.f32 %v709, %v713
    %v716 = vlaneseq
    %v717 = vshrl.u32 %v716, 7
    %v718 = vsub.s32 0, %v717
    %v719 = vrot.slane %v715, %v718
    %v720 = vmul.f32 %v719, %v354
    %v721 = vadd.f32 %v720, 0.0
    %v722 = vld [vmem:[%s1 + $0x4] sm:$0xf]
    %s723 = scalar_lea.vmem [#allocation2], 8
    %724 = vst [vmem:[%s723] sm:$0xf] %v722
    %v725 = vmul.f32 %v30, %v722
    %726 = vst [vmem:[%s723 + $0x4] sm:$0xf] %v725
    %v727 = vld [vmem:[%s3] sm:$0xff]
    %v728 = vld [vmem:[%s3 + $0x8] sm:$0xff]
    %v729 = vld [vmem:[%s3 + $0x10] sm:$0xff]
    %v730 = vld [vmem:[%s3 + $0x18] sm:$0xff]
    %v731 = vld [vmem:[%s3 + $0x20] sm:$0xff]
    %v732 = vld [vmem:[%s3 + $0x28] sm:$0xff]
    %v733 = vld [vmem:[%s3 + $0x30] sm:$0xff]
    %v734 = vld [vmem:[%s3 + $0x38] sm:$0xff]
    %v735 = vld [vmem:[%s723] sm:$0xff]
    %v737 = vsel %vm367, %v727, 0
    %v740 = vsel %vm367, %v728, 0
    %v743 = vsel %vm367, %v729, 0
    %v746 = vsel %vm367, %v730, 0
    %v749 = vsel %vm367, %v731, 0
    %v752 = vsel %vm367, %v732, 0
    %v755 = vsel %vm367, %v733, 0
    %v758 = vsel %vm367, %v734, 0
    %760 = vmatprep.subr.mxu0 0.0
    %761 = vmatpush1.msra.mxu0 %v735
    %762 = vmatprep.subr.mxu0 0.0
    %763 = vmatpush1.msra.mxu0 0.0
    %764 = vmatprep.subr.mxu0 0.0
    %765 = vmatpush1.msra.mxu0 0.0
    %766 = vmatprep.subr.mxu0 0.0
    %767 = vmatpush1.msra.mxu0 0.0
    %768 = vmatprep.subr.mxu0 0.0
    %769 = vmatpush1.msra.mxu0 0.0
    %770 = vmatprep.subr.mxu0 0.0
    %771 = vmatpush1.msra.mxu0 0.0
    %772 = vmatprep.subr.mxu0 0.0
    %773 = vmatpush1.msra.mxu0 0.0
    %774 = vmatprep.subr.mxu0 0.0
    %775 = vmatpush1.msra.mxu0 0.0
    %776 = vmatprep.subr.mxu0 0.0
    %777 = vmatpush1.msra.mxu0 0.0
    %778 = vmatprep.subr.mxu0 0.0
    %779 = vmatpush1.msra.mxu0 0.0
    %780 = vmatprep.subr.mxu0 0.0
    %781 = vmatpush1.msra.mxu0 0.0
    %782 = vmatprep.subr.mxu0 0.0
    %783 = vmatpush1.msra.mxu0 0.0
    %784 = vmatprep.subr.mxu0 0.0
    %785 = vmatpush1.msra.mxu0 0.0
    %786 = vmatprep.subr.mxu0 0.0
    %787 = vmatpush1.msra.mxu0 0.0
    %788 = vmatprep.subr.mxu0 0.0
    %789 = vmatpush1.msra.mxu0 0.0
    %790 = vmatprep.subr.mxu0 0.0
    %791 = vmatpush1.msra.mxu0 0.0
    %792 = vmatprep.subr.mxu0 0.0
    %793 = vmatpush1.msra.mxu0 0.0
    %794 = vmatprep.subr.mxu0 0.0
    %795 = vmatpush1.msra.mxu0 0.0
    %796 = vmatprep.subr.mxu0 0.0
    %797 = vmatpush1.msra.mxu0 0.0
    %798 = vmatprep.subr.mxu0 0.0
    %799 = vmatpush1.msra.mxu0 0.0
    %800 = vmatprep.subr.mxu0 0.0
    %801 = vmatpush1.msra.mxu0 0.0
    %802 = vmatprep.subr.mxu0 0.0
    %803 = vmatpush1.msra.mxu0 0.0
    %804 = vmatprep.subr.mxu0 0.0
    %805 = vmatpush1.msra.mxu0 0.0
    %806 = vmatprep.subr.mxu0 0.0
    %807 = vmatpush1.msra.mxu0 0.0
    %808 = vmatprep.subr.mxu0 0.0
    %809 = vmatpush1.msra.mxu0 0.0
    %810 = vmatprep.subr.mxu0 0.0
    %811 = vmatpush1.msra.mxu0 0.0
    %812 = vmatprep.subr.mxu0 0.0
    %813 = vmatpush1.msra.mxu0 0.0
    %814 = vmatprep.subr.mxu0 0.0
    %815 = vmatpush1.msra.mxu0 0.0
    %816 = vmatprep.subr.mxu0 0.0
    %817 = vmatpush1.msra.mxu0 0.0
    %818 = vmatprep.subr.mxu0 0.0
    %819 = vmatpush1.msra.mxu0 0.0
    %820 = vmatprep.subr.mxu0 0.0
    %821 = vmatpush1.msra.mxu0 0.0
    %822 = vmatprep.subr.mxu0 0.0
    %823 = vmatpush1.msra.mxu0 0.0
    %824 = vmatprep.mubr.f32.mxu0 0.0
    %825 = vmatmul.mubr.f32.gmra.mrb[0].mxu0 %v737
    %v826 = vpop.f32.mrb[0].mxu0
    %v827 = vadd.f32 0.0, %v826
    %v828 = vpop.f32.mrb[0].mxu0
    %829 = vmatprep.mubr.f32.mxu0 0.0
    %830 = vmatmul.mubr.f32.gmra.mrb[0].mxu0 %v740
    %v831 = vpop.f32.mrb[0].mxu0
    %v832 = vadd.f32 0.0, %v831
    %v833 = vpop.f32.mrb[0].mxu0
    %834 = vmatprep.mubr.f32.mxu0 0.0
    %835 = vmatmul.mubr.f32.gmra.mrb[0].mxu0 %v743
    %v836 = vpop.f32.mrb[0].mxu0
    %v837 = vadd.f32 0.0, %v836
    %v838 = vpop.f32.mrb[0].mxu0
    %839 = vmatprep.mubr.f32.mxu0 0.0
    %840 = vmatmul.mubr.f32.gmra.mrb[0].mxu0 %v746
    %v841 = vpop.f32.mrb[0].mxu0
    %v842 = vadd.f32 0.0, %v841
    %v843 = vpop.f32.mrb[0].mxu0
    %844 = vmatprep.mubr.f32.mxu0 0.0
    %845 = vmatmul.mubr.f32.gmra.mrb[0].mxu0 %v749
    %v846 = vpop.f32.mrb[0].mxu0
    %v847 = vadd.f32 0.0, %v846
    %v848 = vpop.f32.mrb[0].mxu0
    %849 = vmatprep.mubr.f32.mxu0 0.0
    %850 = vmatmul.mubr.f32.gmra.mrb[0].mxu0 %v752
    %v851 = vpop.f32.mrb[0].mxu0
    %v852 = vadd.f32 0.0, %v851
    %v853 = vpop.f32.mrb[0].mxu0
    %854 = vmatprep.mubr.f32.mxu0 0.0
    %855 = vmatmul.mubr.f32.gmra.mrb[0].mxu0 %v755
    %v856 = vpop.f32.mrb[0].mxu0
    %v857 = vadd.f32 0.0, %v856
    %v858 = vpop.f32.mrb[0].mxu0
    %859 = vmatprep.mubr.f32.mxu0 0.0
    %860 = vmatmul.mubr.f32.gmra.mrb[0].mxu0 %v758
    %v861 = vpop.f32.mrb[0].mxu0
    %v862 = vadd.f32 0.0, %v861
    %v863 = vpop.f32.mrb[0].mxu0
    %864 = vdwg.mxu0
    %v865 = vadd.f32 %v183, %v827
    %v866 = vadd.f32 %v188, %v832
    %v867 = vadd.f32 %v193, %v837
    %v868 = vadd.f32 %v198, %v842
    %v869 = vadd.f32 %v203, %v847
    %v870 = vadd.f32 %v208, %v852
    %v871 = vadd.f32 %v213, %v857
    %v872 = vadd.f32 %v218, %v862
    %v873 = vmul.f32 %v865, %v287
    %v874 = vmul.f32 %v866, %v291
    %v875 = vmul.f32 %v867, %v295
    %v876 = vmul.f32 %v868, %v299
    %v877 = vmul.f32 %v869, %v303
    %v878 = vmul.f32 %v870, %v307
    %v879 = vmul.f32 %v871, %v311
    %v880 = vmul.f32 %v872, %v315
    %v881 = vadd.f32 %v873, %v319
    %v882 = vadd.f32 %v874, %v323
    %v883 = vadd.f32 %v875, %v327
    %v884 = vadd.f32 %v876, %v331
    %v885 = vadd.f32 %v877, %v335
    %v886 = vadd.f32 %v878, %v339
    %v887 = vadd.f32 %v879, %v343
    %v888 = vadd.f32 %v880, %v347
    %v889 = vtanh.pop %v881
    %v890 = vtanh.pop %v882
    %v891 = vtanh.pop %v883
    %v892 = vtanh.pop %v884
    %v893 = vtanh.pop %v885
    %v894 = vtanh.pop %v886
    %v895 = vtanh.pop %v887
    %v896 = vtanh.pop %v888
    %v897 = vmul.f32 %v889, %v255
    %v898 = vmul.f32 %v890, %v259
    %v899 = vmul.f32 %v891, %v263
    %v900 = vmul.f32 %v892, %v267
    %v901 = vmul.f32 %v893, %v271
    %v902 = vmul.f32 %v894, %v275
    %v903 = vmul.f32 %v895, %v279
    %v904 = vmul.f32 %v896, %v283
    %v905 = vadd.f32 %v897, %v223
    %v906 = vadd.f32 %v898, %v227
    %v907 = vadd.f32 %v899, %v231
    %v908 = vadd.f32 %v900, %v235
    %v909 = vadd.f32 %v901, %v239
    %v910 = vadd.f32 %v902, %v243
    %v911 = vadd.f32 %v903, %v247
    %v912 = vadd.f32 %v904, %v251
    %v913 = vmul.f32 %v865, %v905
    %v914 = vmul.f32 %v866, %v906
    %v915 = vmul.f32 %v867, %v907
    %v916 = vmul.f32 %v868, %v908
    %v917 = vmul.f32 %v869, %v909
    %v918 = vmul.f32 %v870, %v910
    %v919 = vmul.f32 %v871, %v911
    %v920 = vmul.f32 %v872, %v912
    %v921 = vld [vmem:[%s5] sm:$0xff]
    %v922 = vld [vmem:[%s5 + $0x8] sm:$0xff]
    %v924 = vsel %vm565, %v921, 0
    %v927 = vsel %vm565, %v922, 0
    %929 = vmatprep.subr.mxu0 0.0
    %930 = vmatpush1.msra.mxu0 %v913
    %931 = vmatprep.subr.mxu0 0.0
    %932 = vmatpush1.msra.mxu0 %v914
    %933 = vmatprep.subr.mxu0 0.0
    %934 = vmatpush1.msra.mxu0 %v915
    %935 = vmatprep.subr.mxu0 0.0
    %936 = vmatpush1.msra.mxu0 %v916
    %937 = vmatprep.subr.mxu0 0.0
    %938 = vmatpush1.msra.mxu0 %v917
    %939 = vmatprep.subr.mxu0 0.0
    %940 = vmatpush1.msra.mxu0 %v918
    %941 = vmatprep.subr.mxu0 0.0
    %942 = vmatpush1.msra.mxu0 %v919
    %943 = vmatprep.subr.mxu0 0.0
    %944 = vmatpush1.msra.mxu0 %v920
    %945 = vmatprep.subr.mxu0 0.0
    %946 = vmatpush1.msra.mxu0 0.0
    %947 = vmatprep.subr.mxu0 0.0
    %948 = vmatpush1.msra.mxu0 0.0
    %949 = vmatprep.subr.mxu0 0.0
    %950 = vmatpush1.msra.mxu0 0.0
    %951 = vmatprep.subr.mxu0 0.0
    %952 = vmatpush1.msra.mxu0 0.0
    %953 = vmatprep.subr.mxu0 0.0
    %954 = vmatpush1.msra.mxu0 0.0
    %955 = vmatprep.subr.mxu0 0.0
    %956 = vmatpush1.msra.mxu0 0.0
    %957 = vmatprep.subr.mxu0 0.0
    %958 = vmatpush1.msra.mxu0 0.0
    %959 = vmatprep.subr.mxu0 0.0
    %960 = vmatpush1.msra.mxu0 0.0
    %961 = vmatprep.subr.mxu0 0.0
    %962 = vmatpush1.msra.mxu0 0.0
    %963 = vmatprep.subr.mxu0 0.0
    %964 = vmatpush1.msra.mxu0 0.0
    %965 = vmatprep.subr.mxu0 0.0
    %966 = vmatpush1.msra.mxu0 0.0
    %967 = vmatprep.subr.mxu0 0.0
    %968 = vmatpush1.msra.mxu0 0.0
    %969 = vmatprep.subr.mxu0 0.0
    %970 = vmatpush1.msra.mxu0 0.0
    %971 = vmatprep.subr.mxu0 0.0
    %972 = vmatpush1.msra.mxu0 0.0
    %973 = vmatprep.subr.mxu0 0.0
    %974 = vmatpush1.msra.mxu0 0.0
    %975 = vmatprep.subr.mxu0 0.0
    %976 = vmatpush1.msra.mxu0 0.0
    %977 = vmatprep.subr.mxu0 0.0
    %978 = vmatpush1.msra.mxu0 0.0
    %979 = vmatprep.subr.mxu0 0.0
    %980 = vmatpush1.msra.mxu0 0.0
    %981 = vmatprep.subr.mxu0 0.0
    %982 = vmatpush1.msra.mxu0 0.0
    %983 = vmatprep.subr.mxu0 0.0
    %984 = vmatpush1.msra.mxu0 0.0
    %985 = vmatprep.subr.mxu0 0.0
    %986 = vmatpush1.msra.mxu0 0.0
    %987 = vmatprep.subr.mxu0 0.0
    %988 = vmatpush1.msra.mxu0 0.0
    %989 = vmatprep.subr.mxu0 0.0
    %990 = vmatpush1.msra.mxu0 0.0
    %991 = vmatprep.subr.mxu0 0.0
    %992 = vmatpush1.msra.mxu0 0.0
    %993 = vmatprep.mubr.f32.mxu0 0.0
    %994 = vmatmul.mubr.f32.gmra.mrb[0].mxu0 %v924
    %v995 = vpop.f32.mrb[0].mxu0
    %v996 = vadd.f32 %v558, %v995
    %v997 = vpop.f32.mrb[0].mxu0
    %998 = vmatprep.mubr.f32.mxu0 0.0
    %999 = vmatmul.mubr.f32.gmra.mrb[0].mxu0 %v927
    %v1000 = vpop.f32.mrb[0].mxu0
    %v1001 = vadd.f32 %v563, %v1000
    %v1002 = vpop.f32.mrb[0].mxu0
    %1003 = vdwg.mxu0
    %v1004 = vmul.f32 %v996, %v649
    %v1005 = vmul.f32 %v1001, %v653
    %v1006 = vadd.f32 %v1004, %v659
    %v1007 = vadd.f32 %v1005, %v663
    %v1008 = vtanh.pop %v1006
    %v1009 = vtanh.pop %v1007
    %v1010 = vmul.f32 %v1008, %v671
    %v1011 = vmul.f32 %v1009, %v675
    %v1012 = vadd.f32 %v1010, %v681
    %v1013 = vadd.f32 %v1011, %v685
    %v1014 = vmul.f32 %v996, %v1012
    %v1015 = vmul.f32 %v1001, %v1013
    %v1016 = vmul.f32 %v694, %v1014
    %v1017 = vmul.f32 %v699, %v1015
    %v1018 = vadd.f32 %v1016, %v1017
    %v1019 = vrot.slane %v1018, 4
    %v1020 = vadd.f32 %v1018, %v1019
    %v1021 = vrot.slane %v1020, 2
    %v1022 = vadd.f32 %v1020, %v1021
    %v1023 = vrot.slane %v1022, 1
    %v1024 = vadd.f32 %v1022, %v1023
    %v1025 = vadd.f32 %v1024, %v713
    %v1026 = vlaneseq
    %v1027 = vshrl.u32 %v1026, 7
    %v1028 = vsub.s32 0, %v1027
    %v1029 = vrot.slane %v1025, %v1028
    %v1030 = vmul.f32 %v1029, %v722
    %v1031 = vadd.f32 %v721, %v1030
    %v1032 = vld [vmem:[%s1 + $0x8] sm:$0xf]
    %1033 = vst [vmem:[#allocation2] sm:$0xf] %v1032
    %v1034 = vmul.f32 %v30, %v1032
    %1035 = vst [vmem:[#allocation2 + $0x4] sm:$0xf] %v1034
    %v1036 = vld [vmem:[%s3] sm:$0xff]
    %v1037 = vld [vmem:[%s3 + $0x8] sm:$0xff]
    %v1038 = vld [vmem:[%s3 + $0x10] sm:$0xff]
    %v1039 = vld [vmem:[%s3 + $0x18] sm:$0xff]
    %v1040 = vld [vmem:[%s3 + $0x20] sm:$0xff]
    %v1041 = vld [vmem:[%s3 + $0x28] sm:$0xff]
    %v1042 = vld [vmem:[%s3 + $0x30] sm:$0xff]
    %v1043 = vld [vmem:[%s3 + $0x38] sm:$0xff]
    %v1044 = vld [vmem:[#allocation2] sm:$0xff]
    %v1046 = vsel %vm367, %v1036, 0
    %v1049 = vsel %vm367, %v1037, 0
    %v1052 = vsel %vm367, %v1038, 0
    %v1055 = vsel %vm367, %v1039, 0
    %v1058 = vsel %vm367, %v1040, 0
    %v1061 = vsel %vm367, %v1041, 0
    %v1064 = vsel %vm367, %v1042, 0
    %v1067 = vsel %vm367, %v1043, 0
    %1069 = vmatprep.subr.mxu0 0.0
    %1070 = vmatpush1.msra.mxu0 %v1044
    %1071 = vmatprep.subr.mxu0 0.0
    %1072 = vmatpush1.msra.mxu0 0.0
    %1073 = vmatprep.subr.mxu0 0.0
    %1074 = vmatpush1.msra.mxu0 0.0
    %1075 = vmatprep.subr.mxu0 0.0
    %1076 = vmatpush1.msra.mxu0 0.0
    %1077 = vmatprep.subr.mxu0 0.0
    %1078 = vmatpush1.msra.mxu0 0.0
    %1079 = vmatprep.subr.mxu0 0.0
    %1080 = vmatpush1.msra.mxu0 0.0
    %1081 = vmatprep.subr.mxu0 0.0
    %1082 = vmatpush1.msra.mxu0 0.0
    %1083 = vmatprep.subr.mxu0 0.0
    %1084 = vmatpush1.msra.mxu0 0.0
    %1085 = vmatprep.subr.mxu0 0.0
    %1086 = vmatpush1.msra.mxu0 0.0
    %1087 = vmatprep.subr.mxu0 0.0
    %1088 = vmatpush1.msra.mxu0 0.0
    %1089 = vmatprep.subr.mxu0 0.0
    %1090 = vmatpush1.msra.mxu0 0.0
    %1091 = vmatprep.subr.mxu0 0.0
    %1092 = vmatpush1.msra.mxu0 0.0
    %1093 = vmatprep.subr.mxu0 0.0
    %1094 = vmatpush1.msra.mxu0 0.0
    %1095 = vmatprep.subr.mxu0 0.0
    %1096 = vmatpush1.msra.mxu0 0.0
    %1097 = vmatprep.subr.mxu0 0.0
    %1098 = vmatpush1.msra.mxu0 0.0
    %1099 = vmatprep.subr.mxu0 0.0
    %1100 = vmatpush1.msra.mxu0 0.0
    %1101 = vmatprep.subr.mxu0 0.0
    %1102 = vmatpush1.msra.mxu0 0.0
    %1103 = vmatprep.subr.mxu0 0.0
    %1104 = vmatpush1.msra.mxu0 0.0
    %1105 = vmatprep.subr.mxu0 0.0
    %1106 = vmatpush1.msra.mxu0 0.0
    %1107 = vmatprep.subr.mxu0 0.0
    %1108 = vmatpush1.msra.mxu0 0.0
    %1109 = vmatprep.subr.mxu0 0.0
    %1110 = vmatpush1.msra.mxu0 0.0
    %1111 = vmatprep.subr.mxu0 0.0
    %1112 = vmatpush1.msra.mxu0 0.0
    %1113 = vmatprep.subr.mxu0 0.0
    %1114 = vmatpush1.msra.mxu0 0.0
    %1115 = vmatprep.subr.mxu0 0.0
    %1116 = vmatpush1.msra.mxu0 0.0
    %1117 = vmatprep.subr.mxu0 0.0
    %1118 = vmatpush1.msra.mxu0 0.0
    %1119 = vmatprep.subr.mxu0 0.0
    %1120 = vmatpush1.msra.mxu0 0.0
    %1121 = vmatprep.subr.mxu0 0.0
    %1122 = vmatpush1.msra.mxu0 0.0
    %1123 = vmatprep.subr.mxu0 0.0
    %1124 = vmatpush1.msra.mxu0 0.0
    %1125 = vmatprep.subr.mxu0 0.0
    %1126 = vmatpush1.msra.mxu0 0.0
    %1127 = vmatprep.subr.mxu0 0.0
    %1128 = vmatpush1.msra.mxu0 0.0
    %1129 = vmatprep.subr.mxu0 0.0
    %1130 = vmatpush1.msra.mxu0 0.0
    %1131 = vmatprep.subr.mxu0 0.0
    %1132 = vmatpush1.msra.mxu0 0.0
    %1133 = vmatprep.mubr.f32.mxu0 0.0
    %1134 = vmatmul.mubr.f32.gmra.mrb[0].mxu0 %v1046
    %v1135 = vpop.f32.mrb[0].mxu0
    %v1136 = vadd.f32 0.0, %v1135
    %v1137 = vpop.f32.mrb[0].mxu0
    %1138 = vmatprep.mubr.f32.mxu0 0.0
    %1139 = vmatmul.mubr.f32.gmra.mrb[0].mxu0 %v1049
    %v1140 = vpop.f32.mrb[0].mxu0
    %v1141 = vadd.f32 0.0, %v1140
    %v1142 = vpop.f32.mrb[0].mxu0
    %1143 = vmatprep.mubr.f32.mxu0 0.0
    %1144 = vmatmul.mubr.f32.gmra.mrb[0].mxu0 %v1052
    %v1145 = vpop.f32.mrb[0].mxu0
    %v1146 = vadd.f32 0.0, %v1145
    %v1147 = vpop.f32.mrb[0].mxu0
    %1148 = vmatprep.mubr.f32.mxu0 0.0
    %1149 = vmatmul.mubr.f32.gmra.mrb[0].mxu0 %v1055
    %v1150 = vpop.f32.mrb[0].mxu0
    %v1151 = vadd.f32 0.0, %v1150
    %v1152 = vpop.f32.mrb[0].mxu0
    %1153 = vmatprep.mubr.f32.mxu0 0.0
    %1154 = vmatmul.mubr.f32.gmra.mrb[0].mxu0 %v1058
    %v1155 = vpop.f32.mrb[0].mxu0
    %v1156 = vadd.f32 0.0, %v1155
    %v1157 = vpop.f32.mrb[0].mxu0
    %1158 = vmatprep.mubr.f32.mxu0 0.0
    %1159 = vmatmul.mubr.f32.gmra.mrb[0].mxu0 %v1061
    %v1160 = vpop.f32.mrb[0].mxu0
    %v1161 = vadd.f32 0.0, %v1160
    %v1162 = vpop.f32.mrb[0].mxu0
    %1163 = vmatprep.mubr.f32.mxu0 0.0
    %1164 = vmatmul.mubr.f32.gmra.mrb[0].mxu0 %v1064
    %v1165 = vpop.f32.mrb[0].mxu0
    %v1166 = vadd.f32 0.0, %v1165
    %v1167 = vpop.f32.mrb[0].mxu0
    %1168 = vmatprep.mubr.f32.mxu0 0.0
    %1169 = vmatmul.mubr.f32.gmra.mrb[0].mxu0 %v1067
    %v1170 = vpop.f32.mrb[0].mxu0
    %v1171 = vadd.f32 0.0, %v1170
    %v1172 = vpop.f32.mrb[0].mxu0
    %1173 = vdwg.mxu0
    %v1174 = vadd.f32 %v183, %v1136
    %v1175 = vadd.f32 %v188, %v1141
    %v1176 = vadd.f32 %v193, %v1146
    %v1177 = vadd.f32 %v198, %v1151
    %v1178 = vadd.f32 %v203, %v1156
    %v1179 = vadd.f32 %v208, %v1161
    %v1180 = vadd.f32 %v213, %v1166
    %v1181 = vadd.f32 %v218, %v1171
    %v1182 = vmul.f32 %v1174, %v287
    %v1183 = vmul.f32 %v1175, %v291
    %v1184 = vmul.f32 %v1176, %v295
    %v1185 = vmul.f32 %v1177, %v299
    %v1186 = vmul.f32 %v1178, %v303
    %v1187 = vmul.f32 %v1179, %v307
    %v1188 = vmul.f32 %v1180, %v311
    %v1189 = vmul.f32 %v1181, %v315
    %v1190 = vadd.f32 %v1182, %v319
    %v1191 = vadd.f32 %v1183, %v323
    %v1192 = vadd.f32 %v1184, %v327
    %v1193 = vadd.f32 %v1185, %v331
    %v1194 = vadd.f32 %v1186, %v335
    %v1195 = vadd.f32 %v1187, %v339
    %v1196 = vadd.f32 %v1188, %v343
    %v1197 = vadd.f32 %v1189, %v347
    %v1198 = vtanh.pop %v1190
    %v1199 = vtanh.pop %v1191
    %v1200 = vtanh.pop %v1192
    %v1201 = vtanh.pop %v1193
    %v1202 = vtanh.pop %v1194
    %v1203 = vtanh.pop %v1195
    %v1204 = vtanh.pop %v1196
    %v1205 = vtanh.pop %v1197
    %v1206 = vmul.f32 %v1198, %v255
    %v1207 = vmul.f32 %v1199, %v259
    %v1208 = vmul.f32 %v1200, %v263
    %v1209 = vmul.f32 %v1201, %v267
    %v1210 = vmul.f32 %v1202, %v271
    %v1211 = vmul.f32 %v1203, %v275
    %v1212 = vmul.f32 %v1204, %v279
    %v1213 = vmul.f32 %v1205, %v283
    %v1214 = vadd.f32 %v1206, %v223
    %v1215 = vadd.f32 %v1207, %v227
    %v1216 = vadd.f32 %v1208, %v231
    %v1217 = vadd.f32 %v1209, %v235
    %v1218 = vadd.f32 %v1210, %v239
    %v1219 = vadd.f32 %v1211, %v243
    %v1220 = vadd.f32 %v1212, %v247
    %v1221 = vadd.f32 %v1213, %v251
    %v1222 = vmul.f32 %v1174, %v1214
    %v1223 = vmul.f32 %v1175, %v1215
    %v1224 = vmul.f32 %v1176, %v1216
    %v1225 = vmul.f32 %v1177, %v1217
    %v1226 = vmul.f32 %v1178, %v1218
    %v1227 = vmul.f32 %v1179, %v1219
    %v1228 = vmul.f32 %v1180, %v1220
    %v1229 = vmul.f32 %v1181, %v1221
    %v1230 = vld [vmem:[%s5] sm:$0xff]
    %v1231 = vld [vmem:[%s5 + $0x8] sm:$0xff]
    %v1233 = vsel %vm565, %v1230, 0
    %v1236 = vsel %vm565, %v1231, 0
    %1238 = vmatprep.subr.mxu0 0.0
    %1239 = vmatpush1.msra.mxu0 %v1222
    %1240 = vmatprep.subr.mxu0 0.0
    %1241 = vmatpush1.msra.mxu0 %v1223
    %1242 = vmatprep.subr.mxu0 0.0
    %1243 = vmatpush1.msra.mxu0 %v1224
    %1244 = vmatprep.subr.mxu0 0.0
    %1245 = vmatpush1.msra.mxu0 %v1225
    %1246 = vmatprep.subr.mxu0 0.0
    %1247 = vmatpush1.msra.mxu0 %v1226
    %1248 = vmatprep.subr.mxu0 0.0
    %1249 = vmatpush1.msra.mxu0 %v1227
    %1250 = vmatprep.subr.mxu0 0.0
    %1251 = vmatpush1.msra.mxu0 %v1228
    %1252 = vmatprep.subr.mxu0 0.0
    %1253 = vmatpush1.msra.mxu0 %v1229
    %1254 = vmatprep.subr.mxu0 0.0
    %1255 = vmatpush1.msra.mxu0 0.0
    %1256 = vmatprep.subr.mxu0 0.0
    %1257 = vmatpush1.msra.mxu0 0.0
    %1258 = vmatprep.subr.mxu0 0.0
    %1259 = vmatpush1.msra.mxu0 0.0
    %1260 = vmatprep.subr.mxu0 0.0
    %1261 = vmatpush1.msra.mxu0 0.0
    %1262 = vmatprep.subr.mxu0 0.0
    %1263 = vmatpush1.msra.mxu0 0.0
    %1264 = vmatprep.subr.mxu0 0.0
    %1265 = vmatpush1.msra.mxu0 0.0
    %1266 = vmatprep.subr.mxu0 0.0
    %1267 = vmatpush1.msra.mxu0 0.0
    %1268 = vmatprep.subr.mxu0 0.0
    %1269 = vmatpush1.msra.mxu0 0.0
    %1270 = vmatprep.subr.mxu0 0.0
    %1271 = vmatpush1.msra.mxu0 0.0
    %1272 = vmatprep.subr.mxu0 0.0
    %1273 = vmatpush1.msra.mxu0 0.0
    %1274 = vmatprep.subr.mxu0 0.0
    %1275 = vmatpush1.msra.mxu0 0.0
    %1276 = vmatprep.subr.mxu0 0.0
    %1277 = vmatpush1.msra.mxu0 0.0
    %1278 = vmatprep.subr.mxu0 0.0
    %1279 = vmatpush1.msra.mxu0 0.0
    %1280 = vmatprep.subr.mxu0 0.0
    %1281 = vmatpush1.msra.mxu0 0.0
    %1282 = vmatprep.subr.mxu0 0.0
    %1283 = vmatpush1.msra.mxu0 0.0
    %1284 = vmatprep.subr.mxu0 0.0
    %1285 = vmatpush1.msra.mxu0 0.0
    %1286 = vmatprep.subr.mxu0 0.0
    %1287 = vmatpush1.msra.mxu0 0.0
    %1288 = vmatprep.subr.mxu0 0.0
    %1289 = vmatpush1.msra.mxu0 0.0
    %1290 = vmatprep.subr.mxu0 0.0
    %1291 = vmatpush1.msra.mxu0 0.0
    %1292 = vmatprep.subr.mxu0 0.0
    %1293 = vmatpush1.msra.mxu0 0.0
    %1294 = vmatprep.subr.mxu0 0.0
    %1295 = vmatpush1.msra.mxu0 0.0
    %1296 = vmatprep.subr.mxu0 0.0
    %1297 = vmatpush1.msra.mxu0 0.0
    %1298 = vmatprep.subr.mxu0 0.0
    %1299 = vmatpush1.msra.mxu0 0.0
    %1300 = vmatprep.subr.mxu0 0.0
    %1301 = vmatpush1.msra.mxu0 0.0
    %1302 = vmatprep.mubr.f32.mxu0 0.0
    %1303 = vmatmul.mubr.f32.gmra.mrb[0].mxu0 %v1233
    %v1304 = vpop.f32.mrb[0].mxu0
    %v1305 = vadd.f32 %v558, %v1304
    %v1306 = vpop.f32.mrb[0].mxu0
    %1307 = vmatprep.mubr.f32.mxu0 0.0
    %1308 = vmatmul.mubr.f32.gmra.mrb[0].mxu0 %v1236
    %v1309 = vpop.f32.mrb[0].mxu0
    %v1310 = vadd.f32 %v563, %v1309
    %v1311 = vpop.f32.mrb[0].mxu0
    %1312 = vdwg.mxu0
    %v1313 = vmul.f32 %v1305, %v649
    %v1314 = vmul.f32 %v1310, %v653
    %v1315 = vadd.f32 %v1313, %v659
    %v1316 = vadd.f32 %v1314, %v663
    %v1317 = vtanh.pop %v1315
    %v1318 = vtanh.pop %v1316
    %v1319 = vmul.f32 %v1317, %v671
    %v1320 = vmul.f32 %v1318, %v675
    %v1321 = vadd.f32 %v1319, %v681
    %v1322 = vadd.f32 %v1320, %v685
    %v1323 = vmul.f32 %v1305, %v1321
    %v1324 = vmul.f32 %v1310, %v1322
    %v1325 = vmul.f32 %v694, %v1323
    %v1326 = vmul.f32 %v699, %v1324
    %v1327 = vadd.f32 %v1325, %v1326
    %v1328 = vrot.slane %v1327, 4
    %v1329 = vadd.f32 %v1327, %v1328
    %v1330 = vrot.slane %v1329, 2
    %v1331 = vadd.f32 %v1329, %v1330
    %v1332 = vrot.slane %v1331, 1
    %v1333 = vadd.f32 %v1331, %v1332
    %v1334 = vadd.f32 %v1333, %v713
    %v1335 = vlaneseq
    %v1336 = vshrl.u32 %v1335, 7
    %v1337 = vsub.s32 0, %v1336
    %v1338 = vrot.slane %v1334, %v1337
    %v1339 = vmul.f32 %v1338, %v1032
    %v1340 = vadd.f32 %v1031, %v1339
    %v1341 = vld [vmem:[%s1 + $0xc] sm:$0xf]
    %1342 = vst [vmem:[%s723] sm:$0xf] %v1341
    %v1343 = vmul.f32 %v30, %v1341
    %1344 = vst [vmem:[%s723 + $0x4] sm:$0xf] %v1343
    %v1345 = vld [vmem:[%s3] sm:$0xff]
    %v1346 = vld [vmem:[%s3 + $0x8] sm:$0xff]
    %v1347 = vld [vmem:[%s3 + $0x10] sm:$0xff]
    %v1348 = vld [vmem:[%s3 + $0x18] sm:$0xff]
    %v1349 = vld [vmem:[%s3 + $0x20] sm:$0xff]
    %v1350 = vld [vmem:[%s3 + $0x28] sm:$0xff]
    %v1351 = vld [vmem:[%s3 + $0x30] sm:$0xff]
    %v1352 = vld [vmem:[%s3 + $0x38] sm:$0xff]
    %v1353 = vld [vmem:[%s723] sm:$0xff]
    %v1355 = vsel %vm367, %v1345, 0
    %v1358 = vsel %vm367, %v1346, 0
    %v1361 = vsel %vm367, %v1347, 0
    %v1364 = vsel %vm367, %v1348, 0
    %v1367 = vsel %vm367, %v1349, 0
    %v1370 = vsel %vm367, %v1350, 0
    %v1373 = vsel %vm367, %v1351, 0
    %v1376 = vsel %vm367, %v1352, 0
    %1378 = vmatprep.subr.mxu0 0.0
    %1379 = vmatpush1.msra.mxu0 %v1353
    %1380 = vmatprep.subr.mxu0 0.0
    %1381 = vmatpush1.msra.mxu0 0.0
    %1382 = vmatprep.subr.mxu0 0.0
    %1383 = vmatpush1.msra.mxu0 0.0
    %1384 = vmatprep.subr.mxu0 0.0
    %1385 = vmatpush1.msra.mxu0 0.0
    %1386 = vmatprep.subr.mxu0 0.0
    %1387 = vmatpush1.msra.mxu0 0.0
    %1388 = vmatprep.subr.mxu0 0.0
    %1389 = vmatpush1.msra.mxu0 0.0
    %1390 = vmatprep.subr.mxu0 0.0
    %1391 = vmatpush1.msra.mxu0 0.0
    %1392 = vmatprep.subr.mxu0 0.0
    %1393 = vmatpush1.msra.mxu0 0.0
    %1394 = vmatprep.subr.mxu0 0.0
    %1395 = vmatpush1.msra.mxu0 0.0
    %1396 = vmatprep.subr.mxu0 0.0
    %1397 = vmatpush1.msra.mxu0 0.0
    %1398 = vmatprep.subr.mxu0 0.0
    %1399 = vmatpush1.msra.mxu0 0.0
    %1400 = vmatprep.subr.mxu0 0.0
    %1401 = vmatpush1.msra.mxu0 0.0
    %1402 = vmatprep.subr.mxu0 0.0
    %1403 = vmatpush1.msra.mxu0 0.0
    %1404 = vmatprep.subr.mxu0 0.0
    %1405 = vmatpush1.msra.mxu0 0.0
    %1406 = vmatprep.subr.mxu0 0.0
    %1407 = vmatpush1.msra.mxu0 0.0
    %1408 = vmatprep.subr.mxu0 0.0
    %1409 = vmatpush1.msra.mxu0 0.0
    %1410 = vmatprep.subr.mxu0 0.0
    %1411 = vmatpush1.msra.mxu0 0.0
    %1412 = vmatprep.subr.mxu0 0.0
    %1413 = vmatpush1.msra.mxu0 0.0
    %1414 = vmatprep.subr.mxu0 0.0
    %1415 = vmatpush1.msra.mxu0 0.0
    %1416 = vmatprep.subr.mxu0 0.0
    %1417 = vmatpush1.msra.mxu0 0.0
    %1418 = vmatprep.subr.mxu0 0.0
    %1419 = vmatpush1.msra.mxu0 0.0
    %1420 = vmatprep.subr.mxu0 0.0
    %1421 = vmatpush1.msra.mxu0 0.0
    %1422 = vmatprep.subr.mxu0 0.0
    %1423 = vmatpush1.msra.mxu0 0.0
    %1424 = vmatprep.subr.mxu0 0.0
    %1425 = vmatpush1.msra.mxu0 0.0
    %1426 = vmatprep.subr.mxu0 0.0
    %1427 = vmatpush1.msra.mxu0 0.0
    %1428 = vmatprep.subr.mxu0 0.0
    %1429 = vmatpush1.msra.mxu0 0.0
    %1430 = vmatprep.subr.mxu0 0.0
    %1431 = vmatpush1.msra.mxu0 0.0
    %1432 = vmatprep.subr.mxu0 0.0
    %1433 = vmatpush1.msra.mxu0 0.0
    %1434 = vmatprep.subr.mxu0 0.0
    %1435 = vmatpush1.msra.mxu0 0.0
    %1436 = vmatprep.subr.mxu0 0.0
    %1437 = vmatpush1.msra.mxu0 0.0
    %1438 = vmatprep.subr.mxu0 0.0
    %1439 = vmatpush1.msra.mxu0 0.0
    %1440 = vmatprep.subr.mxu0 0.0
    %1441 = vmatpush1.msra.mxu0 0.0
    %1442 = vmatprep.mubr.f32.mxu0 0.0
    %1443 = vmatmul.mubr.f32.gmra.mrb[0].mxu0 %v1355
    %v1444 = vpop.f32.mrb[0].mxu0
    %v1445 = vadd.f32 0.0, %v1444
    %v1446 = vpop.f32.mrb[0].mxu0
    %1447 = vmatprep.mubr.f32.mxu0 0.0
    %1448 = vmatmul.mubr.f32.gmra.mrb[0].mxu0 %v1358
    %v1449 = vpop.f32.mrb[0].mxu0
    %v1450 = vadd.f32 0.0, %v1449
    %v1451 = vpop.f32.mrb[0].mxu0
    %1452 = vmatprep.mubr.f32.mxu0 0.0
    %1453 = vmatmul.mubr.f32.gmra.mrb[0].mxu0 %v1361
    %v1454 = vpop.f32.mrb[0].mxu0
    %v1455 = vadd.f32 0.0, %v1454
    %v1456 = vpop.f32.mrb[0].mxu0
    %1457 = vmatprep.mubr.f32.mxu0 0.0
    %1458 = vmatmul.mubr.f32.gmra.mrb[0].mxu0 %v1364
    %v1459 = vpop.f32.mrb[0].mxu0
    %v1460 = vadd.f32 0.0, %v1459
    %v1461 = vpop.f32.mrb[0].mxu0
    %1462 = vmatprep.mubr.f32.mxu0 0.0
    %1463 = vmatmul.mubr.f32.gmra.mrb[0].mxu0 %v1367
    %v1464 = vpop.f32.mrb[0].mxu0
    %v1465 = vadd.f32 0.0, %v1464
    %v1466 = vpop.f32.mrb[0].mxu0
    %1467 = vmatprep.mubr.f32.mxu0 0.0
    %1468 = vmatmul.mubr.f32.gmra.mrb[0].mxu0 %v1370
    %v1469 = vpop.f32.mrb[0].mxu0
    %v1470 = vadd.f32 0.0, %v1469
    %v1471 = vpop.f32.mrb[0].mxu0
    %1472 = vmatprep.mubr.f32.mxu0 0.0
    %1473 = vmatmul.mubr.f32.gmra.mrb[0].mxu0 %v1373
    %v1474 = vpop.f32.mrb[0].mxu0
    %v1475 = vadd.f32 0.0, %v1474
    %v1476 = vpop.f32.mrb[0].mxu0
    %1477 = vmatprep.mubr.f32.mxu0 0.0
    %1478 = vmatmul.mubr.f32.gmra.mrb[0].mxu0 %v1376
    %v1479 = vpop.f32.mrb[0].mxu0
    %v1480 = vadd.f32 0.0, %v1479
    %v1481 = vpop.f32.mrb[0].mxu0
    %1482 = vdwg.mxu0
    %v1483 = vadd.f32 %v183, %v1445
    %v1484 = vadd.f32 %v188, %v1450
    %v1485 = vadd.f32 %v193, %v1455
    %v1486 = vadd.f32 %v198, %v1460
    %v1487 = vadd.f32 %v203, %v1465
    %v1488 = vadd.f32 %v208, %v1470
    %v1489 = vadd.f32 %v213, %v1475
    %v1490 = vadd.f32 %v218, %v1480
    %v1491 = vmul.f32 %v1483, %v287
    %v1492 = vmul.f32 %v1484, %v291
    %v1493 = vmul.f32 %v1485, %v295
    %v1494 = vmul.f32 %v1486, %v299
    %v1495 = vmul.f32 %v1487, %v303
    %v1496 = vmul.f32 %v1488, %v307
    %v1497 = vmul.f32 %v1489, %v311
    %v1498 = vmul.f32 %v1490, %v315
    %v1499 = vadd.f32 %v1491, %v319
    %v1500 = vadd.f32 %v1492, %v323
    %v1501 = vadd.f32 %v1493, %v327
    %v1502 = vadd.f32 %v1494, %v331
    %v1503 = vadd.f32 %v1495, %v335
    %v1504 = vadd.f32 %v1496, %v339
    %v1505 = vadd.f32 %v1497, %v343
    %v1506 = vadd.f32 %v1498, %v347
    %v1507 = vtanh.pop %v1499
    %v1508 = vtanh.pop %v1500
    %v1509 = vtanh.pop %v1501
    %v1510 = vtanh.pop %v1502
    %v1511 = vtanh.pop %v1503
    %v1512 = vtanh.pop %v1504
    %v1513 = vtanh.pop %v1505
    %v1514 = vtanh.pop %v1506
    %v1515 = vmul.f32 %v1507, %v255
    %v1516 = vmul.f32 %v1508, %v259
    %v1517 = vmul.f32 %v1509, %v263
    %v1518 = vmul.f32 %v1510, %v267
    %v1519 = vmul.f32 %v1511, %v271
    %v1520 = vmul.f32 %v1512, %v275
    %v1521 = vmul.f32 %v1513, %v279
    %v1522 = vmul.f32 %v1514, %v283
    %v1523 = vadd.f32 %v1515, %v223
    %v1524 = vadd.f32 %v1516, %v227
    %v1525 = vadd.f32 %v1517, %v231
    %v1526 = vadd.f32 %v1518, %v235
    %v1527 = vadd.f32 %v1519, %v239
    %v1528 = vadd.f32 %v1520, %v243
    %v1529 = vadd.f32 %v1521, %v247
    %v1530 = vadd.f32 %v1522, %v251
    %v1531 = vmul.f32 %v1483, %v1523
    %v1532 = vmul.f32 %v1484, %v1524
    %v1533 = vmul.f32 %v1485, %v1525
    %v1534 = vmul.f32 %v1486, %v1526
    %v1535 = vmul.f32 %v1487, %v1527
    %v1536 = vmul.f32 %v1488, %v1528
    %v1537 = vmul.f32 %v1489, %v1529
    %v1538 = vmul.f32 %v1490, %v1530
    %v1539 = vld [vmem:[%s5] sm:$0xff]
    %v1540 = vld [vmem:[%s5 + $0x8] sm:$0xff]
    %v1542 = vsel %vm565, %v1539, 0
    %v1545 = vsel %vm565, %v1540, 0
    %1547 = vmatprep.subr.mxu0 0.0
    %1548 = vmatpush1.msra.mxu0 %v1531
    %1549 = vmatprep.subr.mxu0 0.0
    %1550 = vmatpush1.msra.mxu0 %v1532
    %1551 = vmatprep.subr.mxu0 0.0
    %1552 = vmatpush1.msra.mxu0 %v1533
    %1553 = vmatprep.subr.mxu0 0.0
    %1554 = vmatpush1.msra.mxu0 %v1534
    %1555 = vmatprep.subr.mxu0 0.0
    %1556 = vmatpush1.msra.mxu0 %v1535
    %1557 = vmatprep.subr.mxu0 0.0
    %1558 = vmatpush1.msra.mxu0 %v1536
    %1559 = vmatprep.subr.mxu0 0.0
    %1560 = vmatpush1.msra.mxu0 %v1537
    %1561 = vmatprep.subr.mxu0 0.0
    %1562 = vmatpush1.msra.mxu0 %v1538
    %1563 = vmatprep.subr.mxu0 0.0
    %1564 = vmatpush1.msra.mxu0 0.0
    %1565 = vmatprep.subr.mxu0 0.0
    %1566 = vmatpush1.msra.mxu0 0.0
    %1567 = vmatprep.subr.mxu0 0.0
    %1568 = vmatpush1.msra.mxu0 0.0
    %1569 = vmatprep.subr.mxu0 0.0
    %1570 = vmatpush1.msra.mxu0 0.0
    %1571 = vmatprep.subr.mxu0 0.0
    %1572 = vmatpush1.msra.mxu0 0.0
    %1573 = vmatprep.subr.mxu0 0.0
    %1574 = vmatpush1.msra.mxu0 0.0
    %1575 = vmatprep.subr.mxu0 0.0
    %1576 = vmatpush1.msra.mxu0 0.0
    %1577 = vmatprep.subr.mxu0 0.0
    %1578 = vmatpush1.msra.mxu0 0.0
    %1579 = vmatprep.subr.mxu0 0.0
    %1580 = vmatpush1.msra.mxu0 0.0
    %1581 = vmatprep.subr.mxu0 0.0
    %1582 = vmatpush1.msra.mxu0 0.0
    %1583 = vmatprep.subr.mxu0 0.0
    %1584 = vmatpush1.msra.mxu0 0.0
    %1585 = vmatprep.subr.mxu0 0.0
    %1586 = vmatpush1.msra.mxu0 0.0
    %1587 = vmatprep.subr.mxu0 0.0
    %1588 = vmatpush1.msra.mxu0 0.0
    %1589 = vmatprep.subr.mxu0 0.0
    %1590 = vmatpush1.msra.mxu0 0.0
    %1591 = vmatprep.subr.mxu0 0.0
    %1592 = vmatpush1.msra.mxu0 0.0
    %1593 = vmatprep.subr.mxu0 0.0
    %1594 = vmatpush1.msra.mxu0 0.0
    %1595 = vmatprep.subr.mxu0 0.0
    %1596 = vmatpush1.msra.mxu0 0.0
    %1597 = vmatprep.subr.mxu0 0.0
    %1598 = vmatpush1.msra.mxu0 0.0
    %1599 = vmatprep.subr.mxu0 0.0
    %1600 = vmatpush1.msra.mxu0 0.0
    %1601 = vmatprep.subr.mxu0 0.0
    %1602 = vmatpush1.msra.mxu0 0.0
    %1603 = vmatprep.subr.mxu0 0.0
    %1604 = vmatpush1.msra.mxu0 0.0
    %1605 = vmatprep.subr.mxu0 0.0
    %1606 = vmatpush1.msra.mxu0 0.0
    %1607 = vmatprep.subr.mxu0 0.0
    %1608 = vmatpush1.msra.mxu0 0.0
    %1609 = vmatprep.subr.mxu0 0.0
    %1610 = vmatpush1.msra.mxu0 0.0
    %1611 = vmatprep.mubr.f32.mxu0 0.0
    %1612 = vmatmul.mubr.f32.gmra.mrb[0].mxu0 %v1542
    %v1613 = vpop.f32.mrb[0].mxu0
    %v1614 = vadd.f32 %v558, %v1613
    %v1615 = vpop.f32.mrb[0].mxu0
    %1616 = vmatprep.mubr.f32.mxu0 0.0
    %1617 = vmatmul.mubr.f32.gmra.mrb[0].mxu0 %v1545
    %v1618 = vpop.f32.mrb[0].mxu0
    %v1619 = vadd.f32 %v563, %v1618
    %v1620 = vpop.f32.mrb[0].mxu0
    %1621 = vdwg.mxu0
    %v1622 = vmul.f32 %v1614, %v649
    %v1623 = vmul.f32 %v1619, %v653
    %v1624 = vadd.f32 %v1622, %v659
    %v1625 = vadd.f32 %v1623, %v663
    %v1626 = vtanh.pop %v1624
    %v1627 = vtanh.pop %v1625
    %v1628 = vmul.f32 %v1626, %v671
    %v1629 = vmul.f32 %v1627, %v675
    %v1630 = vadd.f32 %v1628, %v681
    %v1631 = vadd.f32 %v1629, %v685
    %v1632 = vmul.f32 %v1614, %v1630
    %v1633 = vmul.f32 %v1619, %v1631
    %v1634 = vmul.f32 %v694, %v1632
    %v1635 = vmul.f32 %v699, %v1633
    %v1636 = vadd.f32 %v1634, %v1635
    %v1637 = vrot.slane %v1636, 4
    %v1638 = vadd.f32 %v1636, %v1637
    %v1639 = vrot.slane %v1638, 2
    %v1640 = vadd.f32 %v1638, %v1639
    %v1641 = vrot.slane %v1640, 1
    %v1642 = vadd.f32 %v1640, %v1641
    %v1643 = vadd.f32 %v1642, %v713
    %v1644 = vlaneseq
    %v1645 = vshrl.u32 %v1644, 7
    %v1646 = vsub.s32 0, %v1645
    %v1647 = vrot.slane %v1643, %v1646
    %v1648 = vmul.f32 %v1647, %v1341
    %v1649 = vadd.f32 %v1340, %v1648
    %v1650 = vld [vmem:[%s1 + $0x10] sm:$0xf]
    %1651 = vst [vmem:[#allocation2] sm:$0xf] %v1650
    %v1652 = vmul.f32 %v30, %v1650
    %1653 = vst [vmem:[#allocation2 + $0x4] sm:$0xf] %v1652
    %v1654 = vld [vmem:[%s3] sm:$0xff]
    %v1655 = vld [vmem:[%s3 + $0x8] sm:$0xff]
    %v1656 = vld [vmem:[%s3 + $0x10] sm:$0xff]
    %v1657 = vld [vmem:[%s3 + $0x18] sm:$0xff]
    %v1658 = vld [vmem:[%s3 + $0x20] sm:$0xff]
    %v1659 = vld [vmem:[%s3 + $0x28] sm:$0xff]
    %v1660 = vld [vmem:[%s3 + $0x30] sm:$0xff]
    %v1661 = vld [vmem:[%s3 + $0x38] sm:$0xff]
    %v1662 = vld [vmem:[#allocation2] sm:$0xff]
    %v1664 = vsel %vm367, %v1654, 0
    %v1667 = vsel %vm367, %v1655, 0
    %v1670 = vsel %vm367, %v1656, 0
    %v1673 = vsel %vm367, %v1657, 0
    %v1676 = vsel %vm367, %v1658, 0
    %v1679 = vsel %vm367, %v1659, 0
    %v1682 = vsel %vm367, %v1660, 0
    %v1685 = vsel %vm367, %v1661, 0
    %1687 = vmatprep.subr.mxu0 0.0
    %1688 = vmatpush1.msra.mxu0 %v1662
    %1689 = vmatprep.subr.mxu0 0.0
    %1690 = vmatpush1.msra.mxu0 0.0
    %1691 = vmatprep.subr.mxu0 0.0
    %1692 = vmatpush1.msra.mxu0 0.0
    %1693 = vmatprep.subr.mxu0 0.0
    %1694 = vmatpush1.msra.mxu0 0.0
    %1695 = vmatprep.subr.mxu0 0.0
    %1696 = vmatpush1.msra.mxu0 0.0
    %1697 = vmatprep.subr.mxu0 0.0
    %1698 = vmatpush1.msra.mxu0 0.0
    %1699 = vmatprep.subr.mxu0 0.0
    %1700 = vmatpush1.msra.mxu0 0.0
    %1701 = vmatprep.subr.mxu0 0.0
    %1702 = vmatpush1.msra.mxu0 0.0
    %1703 = vmatprep.subr.mxu0 0.0
    %1704 = vmatpush1.msra.mxu0 0.0
    %1705 = vmatprep.subr.mxu0 0.0
    %1706 = vmatpush1.msra.mxu0 0.0
    %1707 = vmatprep.subr.mxu0 0.0
    %1708 = vmatpush1.msra.mxu0 0.0
    %1709 = vmatprep.subr.mxu0 0.0
    %1710 = vmatpush1.msra.mxu0 0.0
    %1711 = vmatprep.subr.mxu0 0.0
    %1712 = vmatpush1.msra.mxu0 0.0
    %1713 = vmatprep.subr.mxu0 0.0
    %1714 = vmatpush1.msra.mxu0 0.0
    %1715 = vmatprep.subr.mxu0 0.0
    %1716 = vmatpush1.msra.mxu0 0.0
    %1717 = vmatprep.subr.mxu0 0.0
    %1718 = vmatpush1.msra.mxu0 0.0
    %1719 = vmatprep.subr.mxu0 0.0
    %1720 = vmatpush1.msra.mxu0 0.0
    %1721 = vmatprep.subr.mxu0 0.0
    %1722 = vmatpush1.msra.mxu0 0.0
    %1723 = vmatprep.subr.mxu0 0.0
    %1724 = vmatpush1.msra.mxu0 0.0
    %1725 = vmatprep.subr.mxu0 0.0
    %1726 = vmatpush1.msra.mxu0 0.0
    %1727 = vmatprep.subr.mxu0 0.0
    %1728 = vmatpush1.msra.mxu0 0.0
    %1729 = vmatprep.subr.mxu0 0.0
    %1730 = vmatpush1.msra.mxu0 0.0
    %1731 = vmatprep.subr.mxu0 0.0
    %1732 = vmatpush1.msra.mxu0 0.0
    %1733 = vmatprep.subr.mxu0 0.0
    %1734 = vmatpush1.msra.mxu0 0.0
    %1735 = vmatprep.subr.mxu0 0.0
    %1736 = vmatpush1.msra.mxu0 0.0
    %1737 = vmatprep.subr.mxu0 0.0
    %1738 = vmatpush1.msra.mxu0 0.0
    %1739 = vmatprep.subr.mxu0 0.0
    %1740 = vmatpush1.msra.mxu0 0.0
    %1741 = vmatprep.subr.mxu0 0.0
    %1742 = vmatpush1.msra.mxu0 0.0
    %1743 = vmatprep.subr.mxu0 0.0
    %1744 = vmatpush1.msra.mxu0 0.0
    %1745 = vmatprep.subr.mxu0 0.0
    %1746 = vmatpush1.msra.mxu0 0.0
    %1747 = vmatprep.subr.mxu0 0.0
    %1748 = vmatpush1.msra.mxu0 0.0
    %1749 = vmatprep.subr.mxu0 0.0
    %1750 = vmatpush1.msra.mxu0 0.0
    %1751 = vmatprep.mubr.f32.mxu0 0.0
    %1752 = vmatmul.mubr.f32.gmra.mrb[0].mxu0 %v1664
    %v1753 = vpop.f32.mrb[0].mxu0
    %v1754 = vadd.f32 0.0, %v1753
    %v1755 = vpop.f32.mrb[0].mxu0
    %1756 = vmatprep.mubr.f32.mxu0 0.0
    %1757 = vmatmul.mubr.f32.gmra.mrb[0].mxu0 %v1667
    %v1758 = vpop.f32.mrb[0].mxu0
    %v1759 = vadd.f32 0.0, %v1758
    %v1760 = vpop.f32.mrb[0].mxu0
    %1761 = vmatprep.mubr.f32.mxu0 0.0
    %1762 = vmatmul.mubr.f32.gmra.mrb[0].mxu0 %v1670
    %v1763 = vpop.f32.mrb[0].mxu0
    %v1764 = vadd.f32 0.0, %v1763
    %v1765 = vpop.f32.mrb[0].mxu0
    %1766 = vmatprep.mubr.f32.mxu0 0.0
    %1767 = vmatmul.mubr.f32.gmra.mrb[0].mxu0 %v1673
    %v1768 = vpop.f32.mrb[0].mxu0
    %v1769 = vadd.f32 0.0, %v1768
    %v1770 = vpop.f32.mrb[0].mxu0
    %1771 = vmatprep.mubr.f32.mxu0 0.0
    %1772 = vmatmul.mubr.f32.gmra.mrb[0].mxu0 %v1676
    %v1773 = vpop.f32.mrb[0].mxu0
    %v1774 = vadd.f32 0.0, %v1773
    %v1775 = vpop.f32.mrb[0].mxu0
    %1776 = vmatprep.mubr.f32.mxu0 0.0
    %1777 = vmatmul.mubr.f32.gmra.mrb[0].mxu0 %v1679
    %v1778 = vpop.f32.mrb[0].mxu0
    %v1779 = vadd.f32 0.0, %v1778
    %v1780 = vpop.f32.mrb[0].mxu0
    %1781 = vmatprep.mubr.f32.mxu0 0.0
    %1782 = vmatmul.mubr.f32.gmra.mrb[0].mxu0 %v1682
    %v1783 = vpop.f32.mrb[0].mxu0
    %v1784 = vadd.f32 0.0, %v1783
    %v1785 = vpop.f32.mrb[0].mxu0
    %1786 = vmatprep.mubr.f32.mxu0 0.0
    %1787 = vmatmul.mubr.f32.gmra.mrb[0].mxu0 %v1685
    %v1788 = vpop.f32.mrb[0].mxu0
    %v1789 = vadd.f32 0.0, %v1788
    %v1790 = vpop.f32.mrb[0].mxu0
    %1791 = vdwg.mxu0
    %v1792 = vadd.f32 %v183, %v1754
    %v1793 = vadd.f32 %v188, %v1759
    %v1794 = vadd.f32 %v193, %v1764
    %v1795 = vadd.f32 %v198, %v1769
    %v1796 = vadd.f32 %v203, %v1774
    %v1797 = vadd.f32 %v208, %v1779
    %v1798 = vadd.f32 %v213, %v1784
    %v1799 = vadd.f32 %v218, %v1789
    %v1800 = vmul.f32 %v1792, %v287
    %v1801 = vmul.f32 %v1793, %v291
    %v1802 = vmul.f32 %v1794, %v295
    %v1803 = vmul.f32 %v1795, %v299
    %v1804 = vmul.f32 %v1796, %v303
    %v1805 = vmul.f32 %v1797, %v307
    %v1806 = vmul.f32 %v1798, %v311
    %v1807 = vmul.f32 %v1799, %v315
    %v1808 = vadd.f32 %v1800, %v319
    %v1809 = vadd.f32 %v1801, %v323
    %v1810 = vadd.f32 %v1802, %v327
    %v1811 = vadd.f32 %v1803, %v331
    %v1812 = vadd.f32 %v1804, %v335
    %v1813 = vadd.f32 %v1805, %v339
    %v1814 = vadd.f32 %v1806, %v343
    %v1815 = vadd.f32 %v1807, %v347
    %v1816 = vtanh.pop %v1808
    %v1817 = vtanh.pop %v1809
    %v1818 = vtanh.pop %v1810
    %v1819 = vtanh.pop %v1811
    %v1820 = vtanh.pop %v1812
    %v1821 = vtanh.pop %v1813
    %v1822 = vtanh.pop %v1814
    %v1823 = vtanh.pop %v1815
    %v1824 = vmul.f32 %v1816, %v255
    %v1825 = vmul.f32 %v1817, %v259
    %v1826 = vmul.f32 %v1818, %v263
    %v1827 = vmul.f32 %v1819, %v267
    %v1828 = vmul.f32 %v1820, %v271
    %v1829 = vmul.f32 %v1821, %v275
    %v1830 = vmul.f32 %v1822, %v279
    %v1831 = vmul.f32 %v1823, %v283
    %v1832 = vadd.f32 %v1824, %v223
    %v1833 = vadd.f32 %v1825, %v227
    %v1834 = vadd.f32 %v1826, %v231
    %v1835 = vadd.f32 %v1827, %v235
    %v1836 = vadd.f32 %v1828, %v239
    %v1837 = vadd.f32 %v1829, %v243
    %v1838 = vadd.f32 %v1830, %v247
    %v1839 = vadd.f32 %v1831, %v251
    %v1840 = vmul.f32 %v1792, %v1832
    %v1841 = vmul.f32 %v1793, %v1833
    %v1842 = vmul.f32 %v1794, %v1834
    %v1843 = vmul.f32 %v1795, %v1835
    %v1844 = vmul.f32 %v1796, %v1836
    %v1845 = vmul.f32 %v1797, %v1837
    %v1846 = vmul.f32 %v1798, %v1838
    %v1847 = vmul.f32 %v1799, %v1839
    %v1848 = vld [vmem:[%s5] sm:$0xff]
    %v1849 = vld [vmem:[%s5 + $0x8] sm:$0xff]
    %v1851 = vsel %vm565, %v1848, 0
    %v1854 = vsel %vm565, %v1849, 0
    %1856 = vmatprep.subr.mxu0 0.0
    %1857 = vmatpush1.msra.mxu0 %v1840
    %1858 = vmatprep.subr.mxu0 0.0
    %1859 = vmatpush1.msra.mxu0 %v1841
    %1860 = vmatprep.subr.mxu0 0.0
    %1861 = vmatpush1.msra.mxu0 %v1842
    %1862 = vmatprep.subr.mxu0 0.0
    %1863 = vmatpush1.msra.mxu0 %v1843
    %1864 = vmatprep.subr.mxu0 0.0
    %1865 = vmatpush1.msra.mxu0 %v1844
    %1866 = vmatprep.subr.mxu0 0.0
    %1867 = vmatpush1.msra.mxu0 %v1845
    %1868 = vmatprep.subr.mxu0 0.0
    %1869 = vmatpush1.msra.mxu0 %v1846
    %1870 = vmatprep.subr.mxu0 0.0
    %1871 = vmatpush1.msra.mxu0 %v1847
    %1872 = vmatprep.subr.mxu0 0.0
    %1873 = vmatpush1.msra.mxu0 0.0
    %1874 = vmatprep.subr.mxu0 0.0
    %1875 = vmatpush1.msra.mxu0 0.0
    %1876 = vmatprep.subr.mxu0 0.0
    %1877 = vmatpush1.msra.mxu0 0.0
    %1878 = vmatprep.subr.mxu0 0.0
    %1879 = vmatpush1.msra.mxu0 0.0
    %1880 = vmatprep.subr.mxu0 0.0
    %1881 = vmatpush1.msra.mxu0 0.0
    %1882 = vmatprep.subr.mxu0 0.0
    %1883 = vmatpush1.msra.mxu0 0.0
    %1884 = vmatprep.subr.mxu0 0.0
    %1885 = vmatpush1.msra.mxu0 0.0
    %1886 = vmatprep.subr.mxu0 0.0
    %1887 = vmatpush1.msra.mxu0 0.0
    %1888 = vmatprep.subr.mxu0 0.0
    %1889 = vmatpush1.msra.mxu0 0.0
    %1890 = vmatprep.subr.mxu0 0.0
    %1891 = vmatpush1.msra.mxu0 0.0
    %1892 = vmatprep.subr.mxu0 0.0
    %1893 = vmatpush1.msra.mxu0 0.0
    %1894 = vmatprep.subr.mxu0 0.0
    %1895 = vmatpush1.msra.mxu0 0.0
    %1896 = vmatprep.subr.mxu0 0.0
    %1897 = vmatpush1.msra.mxu0 0.0
    %1898 = vmatprep.subr.mxu0 0.0
    %1899 = vmatpush1.msra.mxu0 0.0
    %1900 = vmatprep.subr.mxu0 0.0
    %1901 = vmatpush1.msra.mxu0 0.0
    %1902 = vmatprep.subr.mxu0 0.0
    %1903 = vmatpush1.msra.mxu0 0.0
    %1904 = vmatprep.subr.mxu0 0.0
    %1905 = vmatpush1.msra.mxu0 0.0
    %1906 = vmatprep.subr.mxu0 0.0
    %1907 = vmatpush1.msra.mxu0 0.0
    %1908 = vmatprep.subr.mxu0 0.0
    %1909 = vmatpush1.msra.mxu0 0.0
    %1910 = vmatprep.subr.mxu0 0.0
    %1911 = vmatpush1.msra.mxu0 0.0
    %1912 = vmatprep.subr.mxu0 0.0
    %1913 = vmatpush1.msra.mxu0 0.0
    %1914 = vmatprep.subr.mxu0 0.0
    %1915 = vmatpush1.msra.mxu0 0.0
    %1916 = vmatprep.subr.mxu0 0.0
    %1917 = vmatpush1.msra.mxu0 0.0
    %1918 = vmatprep.subr.mxu0 0.0
    %1919 = vmatpush1.msra.mxu0 0.0
    %1920 = vmatprep.mubr.f32.mxu0 0.0
    %1921 = vmatmul.mubr.f32.gmra.mrb[0].mxu0 %v1851
    %v1922 = vpop.f32.mrb[0].mxu0
    %v1923 = vadd.f32 %v558, %v1922
    %v1924 = vpop.f32.mrb[0].mxu0
    %1925 = vmatprep.mubr.f32.mxu0 0.0
    %1926 = vmatmul.mubr.f32.gmra.mrb[0].mxu0 %v1854
    %v1927 = vpop.f32.mrb[0].mxu0
    %v1928 = vadd.f32 %v563, %v1927
    %v1929 = vpop.f32.mrb[0].mxu0
    %1930 = vdwg.mxu0
    %v1931 = vmul.f32 %v1923, %v649
    %v1932 = vmul.f32 %v1928, %v653
    %v1933 = vadd.f32 %v1931, %v659
    %v1934 = vadd.f32 %v1932, %v663
    %v1935 = vtanh.pop %v1933
    %v1936 = vtanh.pop %v1934
    %v1937 = vmul.f32 %v1935, %v671
    %v1938 = vmul.f32 %v1936, %v675
    %v1939 = vadd.f32 %v1937, %v681
    %v1940 = vadd.f32 %v1938, %v685
    %v1941 = vmul.f32 %v1923, %v1939
    %v1942 = vmul.f32 %v1928, %v1940
    %v1943 = vmul.f32 %v694, %v1941
    %v1944 = vmul.f32 %v699, %v1942
    %v1945 = vadd.f32 %v1943, %v1944
    %v1946 = vrot.slane %v1945, 4
    %v1947 = vadd.f32 %v1945, %v1946
    %v1948 = vrot.slane %v1947, 2
    %v1949 = vadd.f32 %v1947, %v1948
    %v1950 = vrot.slane %v1949, 1
    %v1951 = vadd.f32 %v1949, %v1950
    %v1952 = vadd.f32 %v1951, %v713
    %v1953 = vlaneseq
    %v1954 = vshrl.u32 %v1953, 7
    %v1955 = vsub.s32 0, %v1954
    %v1956 = vrot.slane %v1952, %v1955
    %v1957 = vmul.f32 %v1956, %v1650
    %v1958 = vadd.f32 %v1649, %v1957
    %v1959 = vld [vmem:[%s1 + $0x14] sm:$0xf]
    %1960 = vst [vmem:[%s723] sm:$0xf] %v1959
    %v1961 = vmul.f32 %v30, %v1959
    %1962 = vst [vmem:[%s723 + $0x4] sm:$0xf] %v1961
    %v1963 = vld [vmem:[%s3] sm:$0xff]
    %v1964 = vld [vmem:[%s3 + $0x8] sm:$0xff]
    %v1965 = vld [vmem:[%s3 + $0x10] sm:$0xff]
    %v1966 = vld [vmem:[%s3 + $0x18] sm:$0xff]
    %v1967 = vld [vmem:[%s3 + $0x20] sm:$0xff]
    %v1968 = vld [vmem:[%s3 + $0x28] sm:$0xff]
    %v1969 = vld [vmem:[%s3 + $0x30] sm:$0xff]
    %v1970 = vld [vmem:[%s3 + $0x38] sm:$0xff]
    %v1971 = vld [vmem:[%s723] sm:$0xff]
    %v1973 = vsel %vm367, %v1963, 0
    %v1976 = vsel %vm367, %v1964, 0
    %v1979 = vsel %vm367, %v1965, 0
    %v1982 = vsel %vm367, %v1966, 0
    %v1985 = vsel %vm367, %v1967, 0
    %v1988 = vsel %vm367, %v1968, 0
    %v1991 = vsel %vm367, %v1969, 0
    %v1994 = vsel %vm367, %v1970, 0
    %1996 = vmatprep.subr.mxu0 0.0
    %1997 = vmatpush1.msra.mxu0 %v1971
    %1998 = vmatprep.subr.mxu0 0.0
    %1999 = vmatpush1.msra.mxu0 0.0
    %2000 = vmatprep.subr.mxu0 0.0
    %2001 = vmatpush1.msra.mxu0 0.0
    %2002 = vmatprep.subr.mxu0 0.0
    %2003 = vmatpush1.msra.mxu0 0.0
    %2004 = vmatprep.subr.mxu0 0.0
    %2005 = vmatpush1.msra.mxu0 0.0
    %2006 = vmatprep.subr.mxu0 0.0
    %2007 = vmatpush1.msra.mxu0 0.0
    %2008 = vmatprep.subr.mxu0 0.0
    %2009 = vmatpush1.msra.mxu0 0.0
    %2010 = vmatprep.subr.mxu0 0.0
    %2011 = vmatpush1.msra.mxu0 0.0
    %2012 = vmatprep.subr.mxu0 0.0
    %2013 = vmatpush1.msra.mxu0 0.0
    %2014 = vmatprep.subr.mxu0 0.0
    %2015 = vmatpush1.msra.mxu0 0.0
    %2016 = vmatprep.subr.mxu0 0.0
    %2017 = vmatpush1.msra.mxu0 0.0
    %2018 = vmatprep.subr.mxu0 0.0
    %2019 = vmatpush1.msra.mxu0 0.0
    %2020 = vmatprep.subr.mxu0 0.0
    %2021 = vmatpush1.msra.mxu0 0.0
    %2022 = vmatprep.subr.mxu0 0.0
    %2023 = vmatpush1.msra.mxu0 0.0
    %2024 = vmatprep.subr.mxu0 0.0
    %2025 = vmatpush1.msra.mxu0 0.0
    %2026 = vmatprep.subr.mxu0 0.0
    %2027 = vmatpush1.msra.mxu0 0.0
    %2028 = vmatprep.subr.mxu0 0.0
    %2029 = vmatpush1.msra.mxu0 0.0
    %2030 = vmatprep.subr.mxu0 0.0
    %2031 = vmatpush1.msra.mxu0 0.0
    %2032 = vmatprep.subr.mxu0 0.0
    %2033 = vmatpush1.msra.mxu0 0.0
    %2034 = vmatprep.subr.mxu0 0.0
    %2035 = vmatpush1.msra.mxu0 0.0
    %2036 = vmatprep.subr.mxu0 0.0
    %2037 = vmatpush1.msra.mxu0 0.0
    %2038 = vmatprep.subr.mxu0 0.0
    %2039 = vmatpush1.msra.mxu0 0.0
    %2040 = vmatprep.subr.mxu0 0.0
    %2041 = vmatpush1.msra.mxu0 0.0
    %2042 = vmatprep.subr.mxu0 0.0
    %2043 = vmatpush1.msra.mxu0 0.0
    %2044 = vmatprep.subr.mxu0 0.0
    %2045 = vmatpush1.msra.mxu0 0.0
    %2046 = vmatprep.subr.mxu0 0.0
    %2047 = vmatpush1.msra.mxu0 0.0
    %2048 = vmatprep.subr.mxu0 0.0
    %2049 = vmatpush1.msra.mxu0 0.0
    %2050 = vmatprep.subr.mxu0 0.0
    %2051 = vmatpush1.msra.mxu0 0.0
    %2052 = vmatprep.subr.mxu0 0.0
    %2053 = vmatpush1.msra.mxu0 0.0
    %2054 = vmatprep.subr.mxu0 0.0
    %2055 = vmatpush1.msra.mxu0 0.0
    %2056 = vmatprep.subr.mxu0 0.0
    %2057 = vmatpush1.msra.mxu0 0.0
    %2058 = vmatprep.subr.mxu0 0.0
    %2059 = vmatpush1.msra.mxu0 0.0
    %2060 = vmatprep.mubr.f32.mxu0 0.0
    %2061 = vmatmul.mubr.f32.gmra.mrb[0].mxu0 %v1973
    %v2062 = vpop.f32.mrb[0].mxu0
    %v2063 = vadd.f32 0.0, %v2062
    %v2064 = vpop.f32.mrb[0].mxu0
    %2065 = vmatprep.mubr.f32.mxu0 0.0
    %2066 = vmatmul.mubr.f32.gmra.mrb[0].mxu0 %v1976
    %v2067 = vpop.f32.mrb[0].mxu0
    %v2068 = vadd.f32 0.0, %v2067
    %v2069 = vpop.f32.mrb[0].mxu0
    %2070 = vmatprep.mubr.f32.mxu0 0.0
    %2071 = vmatmul.mubr.f32.gmra.mrb[0].mxu0 %v1979
    %v2072 = vpop.f32.mrb[0].mxu0
    %v2073 = vadd.f32 0.0, %v2072
    %v2074 = vpop.f32.mrb[0].mxu0
    %2075 = vmatprep.mubr.f32.mxu0 0.0
    %2076 = vmatmul.mubr.f32.gmra.mrb[0].mxu0 %v1982
    %v2077 = vpop.f32.mrb[0].mxu0
    %v2078 = vadd.f32 0.0, %v2077
    %v2079 = vpop.f32.mrb[0].mxu0
    %2080 = vmatprep.mubr.f32.mxu0 0.0
    %2081 = vmatmul.mubr.f32.gmra.mrb[0].mxu0 %v1985
    %v2082 = vpop.f32.mrb[0].mxu0
    %v2083 = vadd.f32 0.0, %v2082
    %v2084 = vpop.f32.mrb[0].mxu0
    %2085 = vmatprep.mubr.f32.mxu0 0.0
    %2086 = vmatmul.mubr.f32.gmra.mrb[0].mxu0 %v1988
    %v2087 = vpop.f32.mrb[0].mxu0
    %v2088 = vadd.f32 0.0, %v2087
    %v2089 = vpop.f32.mrb[0].mxu0
    %2090 = vmatprep.mubr.f32.mxu0 0.0
    %2091 = vmatmul.mubr.f32.gmra.mrb[0].mxu0 %v1991
    %v2092 = vpop.f32.mrb[0].mxu0
    %v2093 = vadd.f32 0.0, %v2092
    %v2094 = vpop.f32.mrb[0].mxu0
    %2095 = vmatprep.mubr.f32.mxu0 0.0
    %2096 = vmatmul.mubr.f32.gmra.mrb[0].mxu0 %v1994
    %v2097 = vpop.f32.mrb[0].mxu0
    %v2098 = vadd.f32 0.0, %v2097
    %v2099 = vpop.f32.mrb[0].mxu0
    %2100 = vdwg.mxu0
    %v2101 = vadd.f32 %v183, %v2063
    %v2102 = vadd.f32 %v188, %v2068
    %v2103 = vadd.f32 %v193, %v2073
    %v2104 = vadd.f32 %v198, %v2078
    %v2105 = vadd.f32 %v203, %v2083
    %v2106 = vadd.f32 %v208, %v2088
    %v2107 = vadd.f32 %v213, %v2093
    %v2108 = vadd.f32 %v218, %v2098
    %v2109 = vmul.f32 %v2101, %v287
    %v2110 = vmul.f32 %v2102, %v291
    %v2111 = vmul.f32 %v2103, %v295
    %v2112 = vmul.f32 %v2104, %v299
    %v2113 = vmul.f32 %v2105, %v303
    %v2114 = vmul.f32 %v2106, %v307
    %v2115 = vmul.f32 %v2107, %v311
    %v2116 = vmul.f32 %v2108, %v315
    %v2117 = vadd.f32 %v2109, %v319
    %v2118 = vadd.f32 %v2110, %v323
    %v2119 = vadd.f32 %v2111, %v327
    %v2120 = vadd.f32 %v2112, %v331
    %v2121 = vadd.f32 %v2113, %v335
    %v2122 = vadd.f32 %v2114, %v339
    %v2123 = vadd.f32 %v2115, %v343
    %v2124 = vadd.f32 %v2116, %v347
    %v2125 = vtanh.pop %v2117
    %v2126 = vtanh.pop %v2118
    %v2127 = vtanh.pop %v2119
    %v2128 = vtanh.pop %v2120
    %v2129 = vtanh.pop %v2121
    %v2130 = vtanh.pop %v2122
    %v2131 = vtanh.pop %v2123
    %v2132 = vtanh.pop %v2124
    %v2133 = vmul.f32 %v2125, %v255
    %v2134 = vmul.f32 %v2126, %v259
    %v2135 = vmul.f32 %v2127, %v263
    %v2136 = vmul.f32 %v2128, %v267
    %v2137 = vmul.f32 %v2129, %v271
    %v2138 = vmul.f32 %v2130, %v275
    %v2139 = vmul.f32 %v2131, %v279
    %v2140 = vmul.f32 %v2132, %v283
    %v2141 = vadd.f32 %v2133, %v223
    %v2142 = vadd.f32 %v2134, %v227
    %v2143 = vadd.f32 %v2135, %v231
    %v2144 = vadd.f32 %v2136, %v235
    %v2145 = vadd.f32 %v2137, %v239
    %v2146 = vadd.f32 %v2138, %v243
    %v2147 = vadd.f32 %v2139, %v247
    %v2148 = vadd.f32 %v2140, %v251
    %v2149 = vmul.f32 %v2101, %v2141
    %v2150 = vmul.f32 %v2102, %v2142
    %v2151 = vmul.f32 %v2103, %v2143
    %v2152 = vmul.f32 %v2104, %v2144
    %v2153 = vmul.f32 %v2105, %v2145
    %v2154 = vmul.f32 %v2106, %v2146
    %v2155 = vmul.f32 %v2107, %v2147
    %v2156 = vmul.f32 %v2108, %v2148
    %v2157 = vld [vmem:[%s5] sm:$0xff]
    %v2158 = vld [vmem:[%s5 + $0x8] sm:$0xff]
    %v2160 = vsel %vm565, %v2157, 0
    %v2163 = vsel %vm565, %v2158, 0
    %2165 = vmatprep.subr.mxu0 0.0
    %2166 = vmatpush1.msra.mxu0 %v2149
    %2167 = vmatprep.subr.mxu0 0.0
    %2168 = vmatpush1.msra.mxu0 %v2150
    %2169 = vmatprep.subr.mxu0 0.0
    %2170 = vmatpush1.msra.mxu0 %v2151
    %2171 = vmatprep.subr.mxu0 0.0
    %2172 = vmatpush1.msra.mxu0 %v2152
    %2173 = vmatprep.subr.mxu0 0.0
    %2174 = vmatpush1.msra.mxu0 %v2153
    %2175 = vmatprep.subr.mxu0 0.0
    %2176 = vmatpush1.msra.mxu0 %v2154
    %2177 = vmatprep.subr.mxu0 0.0
    %2178 = vmatpush1.msra.mxu0 %v2155
    %2179 = vmatprep.subr.mxu0 0.0
    %2180 = vmatpush1.msra.mxu0 %v2156
    %2181 = vmatprep.subr.mxu0 0.0
    %2182 = vmatpush1.msra.mxu0 0.0
    %2183 = vmatprep.subr.mxu0 0.0
    %2184 = vmatpush1.msra.mxu0 0.0
    %2185 = vmatprep.subr.mxu0 0.0
    %2186 = vmatpush1.msra.mxu0 0.0
    %2187 = vmatprep.subr.mxu0 0.0
    %2188 = vmatpush1.msra.mxu0 0.0
    %2189 = vmatprep.subr.mxu0 0.0
    %2190 = vmatpush1.msra.mxu0 0.0
    %2191 = vmatprep.subr.mxu0 0.0
    %2192 = vmatpush1.msra.mxu0 0.0
    %2193 = vmatprep.subr.mxu0 0.0
    %2194 = vmatpush1.msra.mxu0 0.0
    %2195 = vmatprep.subr.mxu0 0.0
    %2196 = vmatpush1.msra.mxu0 0.0
    %2197 = vmatprep.subr.mxu0 0.0
    %2198 = vmatpush1.msra.mxu0 0.0
    %2199 = vmatprep.subr.mxu0 0.0
    %2200 = vmatpush1.msra.mxu0 0.0
    %2201 = vmatprep.subr.mxu0 0.0
    %2202 = vmatpush1.msra.mxu0 0.0
    %2203 = vmatprep.subr.mxu0 0.0
    %2204 = vmatpush1.msra.mxu0 0.0
    %2205 = vmatprep.subr.mxu0 0.0
    %2206 = vmatpush1.msra.mxu0 0.0
    %2207 = vmatprep.subr.mxu0 0.0
    %2208 = vmatpush1.msra.mxu0 0.0
    %2209 = vmatprep.subr.mxu0 0.0
    %2210 = vmatpush1.msra.mxu0 0.0
    %2211 = vmatprep.subr.mxu0 0.0
    %2212 = vmatpush1.msra.mxu0 0.0
    %2213 = vmatprep.subr.mxu0 0.0
    %2214 = vmatpush1.msra.mxu0 0.0
    %2215 = vmatprep.subr.mxu0 0.0
    %2216 = vmatpush1.msra.mxu0 0.0
    %2217 = vmatprep.subr.mxu0 0.0
    %2218 = vmatpush1.msra.mxu0 0.0
    %2219 = vmatprep.subr.mxu0 0.0
    %2220 = vmatpush1.msra.mxu0 0.0
    %2221 = vmatprep.subr.mxu0 0.0
    %2222 = vmatpush1.msra.mxu0 0.0
    %2223 = vmatprep.subr.mxu0 0.0
    %2224 = vmatpush1.msra.mxu0 0.0
    %2225 = vmatprep.subr.mxu0 0.0
    %2226 = vmatpush1.msra.mxu0 0.0
    %2227 = vmatprep.subr.mxu0 0.0
    %2228 = vmatpush1.msra.mxu0 0.0
    %2229 = vmatprep.mubr.f32.mxu0 0.0
    %2230 = vmatmul.mubr.f32.gmra.mrb[0].mxu0 %v2160
    %v2231 = vpop.f32.mrb[0].mxu0
    %v2232 = vadd.f32 %v558, %v2231
    %v2233 = vpop.f32.mrb[0].mxu0
    %2234 = vmatprep.mubr.f32.mxu0 0.0
    %2235 = vmatmul.mubr.f32.gmra.mrb[0].mxu0 %v2163
    %v2236 = vpop.f32.mrb[0].mxu0
    %v2237 = vadd.f32 %v563, %v2236
    %v2238 = vpop.f32.mrb[0].mxu0
    %2239 = vdwg.mxu0
    %v2240 = vmul.f32 %v2232, %v649
    %v2241 = vmul.f32 %v2237, %v653
    %v2242 = vadd.f32 %v2240, %v659
    %v2243 = vadd.f32 %v2241, %v663
    %v2244 = vtanh.pop %v2242
    %v2245 = vtanh.pop %v2243
    %v2246 = vmul.f32 %v2244, %v671
    %v2247 = vmul.f32 %v2245, %v675
    %v2248 = vadd.f32 %v2246, %v681
    %v2249 = vadd.f32 %v2247, %v685
    %v2250 = vmul.f32 %v2232, %v2248
    %v2251 = vmul.f32 %v2237, %v2249
    %v2252 = vmul.f32 %v694, %v2250
    %v2253 = vmul.f32 %v699, %v2251
    %v2254 = vadd.f32 %v2252, %v2253
    %v2255 = vrot.slane %v2254, 4
    %v2256 = vadd.f32 %v2254, %v2255
    %v2257 = vrot.slane %v2256, 2
    %v2258 = vadd.f32 %v2256, %v2257
    %v2259 = vrot.slane %v2258, 1
    %v2260 = vadd.f32 %v2258, %v2259
    %v2261 = vadd.f32 %v2260, %v713
    %v2262 = vlaneseq
    %v2263 = vshrl.u32 %v2262, 7
    %v2264 = vsub.s32 0, %v2263
    %v2265 = vrot.slane %v2261, %v2264
    %v2266 = vmul.f32 %v2265, %v1959
    %v2267 = vadd.f32 %v1958, %v2266
    %v2268 = vld [vmem:[%s1 + $0x18] sm:$0xf]
    %2269 = vst [vmem:[#allocation2] sm:$0xf] %v2268
    %v2270 = vmul.f32 %v30, %v2268
    %2271 = vst [vmem:[#allocation2 + $0x4] sm:$0xf] %v2270
    %v2272 = vld [vmem:[%s3] sm:$0xff]
    %v2273 = vld [vmem:[%s3 + $0x8] sm:$0xff]
    %v2274 = vld [vmem:[%s3 + $0x10] sm:$0xff]
    %v2275 = vld [vmem:[%s3 + $0x18] sm:$0xff]
    %v2276 = vld [vmem:[%s3 + $0x20] sm:$0xff]
    %v2277 = vld [vmem:[%s3 + $0x28] sm:$0xff]
    %v2278 = vld [vmem:[%s3 + $0x30] sm:$0xff]
    %v2279 = vld [vmem:[%s3 + $0x38] sm:$0xff]
    %v2280 = vld [vmem:[#allocation2] sm:$0xff]
    %v2282 = vsel %vm367, %v2272, 0
    %v2285 = vsel %vm367, %v2273, 0
    %v2288 = vsel %vm367, %v2274, 0
    %v2291 = vsel %vm367, %v2275, 0
    %v2294 = vsel %vm367, %v2276, 0
    %v2297 = vsel %vm367, %v2277, 0
    %v2300 = vsel %vm367, %v2278, 0
    %v2303 = vsel %vm367, %v2279, 0
    %2305 = vmatprep.subr.mxu0 0.0
    %2306 = vmatpush1.msra.mxu0 %v2280
    %2307 = vmatprep.subr.mxu0 0.0
    %2308 = vmatpush1.msra.mxu0 0.0
    %2309 = vmatprep.subr.mxu0 0.0
    %2310 = vmatpush1.msra.mxu0 0.0
    %2311 = vmatprep.subr.mxu0 0.0
    %2312 = vmatpush1.msra.mxu0 0.0
    %2313 = vmatprep.subr.mxu0 0.0
    %2314 = vmatpush1.msra.mxu0 0.0
    %2315 = vmatprep.subr.mxu0 0.0
    %2316 = vmatpush1.msra.mxu0 0.0
    %2317 = vmatprep.subr.mxu0 0.0
    %2318 = vmatpush1.msra.mxu0 0.0
    %2319 = vmatprep.subr.mxu0 0.0
    %2320 = vmatpush1.msra.mxu0 0.0
    %2321 = vmatprep.subr.mxu0 0.0
    %2322 = vmatpush1.msra.mxu0 0.0
    %2323 = vmatprep.subr.mxu0 0.0
    %2324 = vmatpush1.msra.mxu0 0.0
    %2325 = vmatprep.subr.mxu0 0.0
    %2326 = vmatpush1.msra.mxu0 0.0
    %2327 = vmatprep.subr.mxu0 0.0
    %2328 = vmatpush1.msra.mxu0 0.0
    %2329 = vmatprep.subr.mxu0 0.0
    %2330 = vmatpush1.msra.mxu0 0.0
    %2331 = vmatprep.subr.mxu0 0.0
    %2332 = vmatpush1.msra.mxu0 0.0
    %2333 = vmatprep.subr.mxu0 0.0
    %2334 = vmatpush1.msra.mxu0 0.0
    %2335 = vmatprep.subr.mxu0 0.0
    %2336 = vmatpush1.msra.mxu0 0.0
    %2337 = vmatprep.subr.mxu0 0.0
    %2338 = vmatpush1.msra.mxu0 0.0
    %2339 = vmatprep.subr.mxu0 0.0
    %2340 = vmatpush1.msra.mxu0 0.0
    %2341 = vmatprep.subr.mxu0 0.0
    %2342 = vmatpush1.msra.mxu0 0.0
    %2343 = vmatprep.subr.mxu0 0.0
    %2344 = vmatpush1.msra.mxu0 0.0
    %2345 = vmatprep.subr.mxu0 0.0
    %2346 = vmatpush1.msra.mxu0 0.0
    %2347 = vmatprep.subr.mxu0 0.0
    %2348 = vmatpush1.msra.mxu0 0.0
    %2349 = vmatprep.subr.mxu0 0.0
    %2350 = vmatpush1.msra.mxu0 0.0
    %2351 = vmatprep.subr.mxu0 0.0
    %2352 = vmatpush1.msra.mxu0 0.0
    %2353 = vmatprep.subr.mxu0 0.0
    %2354 = vmatpush1.msra.mxu0 0.0
    %2355 = vmatprep.subr.mxu0 0.0
    %2356 = vmatpush1.msra.mxu0 0.0
    %2357 = vmatprep.subr.mxu0 0.0
    %2358 = vmatpush1.msra.mxu0 0.0
    %2359 = vmatprep.subr.mxu0 0.0
    %2360 = vmatpush1.msra.mxu0 0.0
    %2361 = vmatprep.subr.mxu0 0.0
    %2362 = vmatpush1.msra.mxu0 0.0
    %2363 = vmatprep.subr.mxu0 0.0
    %2364 = vmatpush1.msra.mxu0 0.0
    %2365 = vmatprep.subr.mxu0 0.0
    %2366 = vmatpush1.msra.mxu0 0.0
    %2367 = vmatprep.subr.mxu0 0.0
    %2368 = vmatpush1.msra.mxu0 0.0
    %2369 = vmatprep.mubr.f32.mxu0 0.0
    %2370 = vmatmul.mubr.f32.gmra.mrb[0].mxu0 %v2282
    %v2371 = vpop.f32.mrb[0].mxu0
    %v2372 = vadd.f32 0.0, %v2371
    %v2373 = vpop.f32.mrb[0].mxu0
    %2374 = vmatprep.mubr.f32.mxu0 0.0
    %2375 = vmatmul.mubr.f32.gmra.mrb[0].mxu0 %v2285
    %v2376 = vpop.f32.mrb[0].mxu0
    %v2377 = vadd.f32 0.0, %v2376
    %v2378 = vpop.f32.mrb[0].mxu0
    %2379 = vmatprep.mubr.f32.mxu0 0.0
    %2380 = vmatmul.mubr.f32.gmra.mrb[0].mxu0 %v2288
    %v2381 = vpop.f32.mrb[0].mxu0
    %v2382 = vadd.f32 0.0, %v2381
    %v2383 = vpop.f32.mrb[0].mxu0
    %2384 = vmatprep.mubr.f32.mxu0 0.0
    %2385 = vmatmul.mubr.f32.gmra.mrb[0].mxu0 %v2291
    %v2386 = vpop.f32.mrb[0].mxu0
    %v2387 = vadd.f32 0.0, %v2386
    %v2388 = vpop.f32.mrb[0].mxu0
    %2389 = vmatprep.mubr.f32.mxu0 0.0
    %2390 = vmatmul.mubr.f32.gmra.mrb[0].mxu0 %v2294
    %v2391 = vpop.f32.mrb[0].mxu0
    %v2392 = vadd.f32 0.0, %v2391
    %v2393 = vpop.f32.mrb[0].mxu0
    %2394 = vmatprep.mubr.f32.mxu0 0.0
    %2395 = vmatmul.mubr.f32.gmra.mrb[0].mxu0 %v2297
    %v2396 = vpop.f32.mrb[0].mxu0
    %v2397 = vadd.f32 0.0, %v2396
    %v2398 = vpop.f32.mrb[0].mxu0
    %2399 = vmatprep.mubr.f32.mxu0 0.0
    %2400 = vmatmul.mubr.f32.gmra.mrb[0].mxu0 %v2300
    %v2401 = vpop.f32.mrb[0].mxu0
    %v2402 = vadd.f32 0.0, %v2401
    %v2403 = vpop.f32.mrb[0].mxu0
    %2404 = vmatprep.mubr.f32.mxu0 0.0
    %2405 = vmatmul.mubr.f32.gmra.mrb[0].mxu0 %v2303
    %v2406 = vpop.f32.mrb[0].mxu0
    %v2407 = vadd.f32 0.0, %v2406
    %v2408 = vpop.f32.mrb[0].mxu0
    %2409 = vdwg.mxu0
    %v2410 = vadd.f32 %v183, %v2372
    %v2411 = vadd.f32 %v188, %v2377
    %v2412 = vadd.f32 %v193, %v2382
    %v2413 = vadd.f32 %v198, %v2387
    %v2414 = vadd.f32 %v203, %v2392
    %v2415 = vadd.f32 %v208, %v2397
    %v2416 = vadd.f32 %v213, %v2402
    %v2417 = vadd.f32 %v218, %v2407
    %v2418 = vmul.f32 %v2410, %v287
    %v2419 = vmul.f32 %v2411, %v291
    %v2420 = vmul.f32 %v2412, %v295
    %v2421 = vmul.f32 %v2413, %v299
    %v2422 = vmul.f32 %v2414, %v303
    %v2423 = vmul.f32 %v2415, %v307
    %v2424 = vmul.f32 %v2416, %v311
    %v2425 = vmul.f32 %v2417, %v315
    %v2426 = vadd.f32 %v2418, %v319
    %v2427 = vadd.f32 %v2419, %v323
    %v2428 = vadd.f32 %v2420, %v327
    %v2429 = vadd.f32 %v2421, %v331
    %v2430 = vadd.f32 %v2422, %v335
    %v2431 = vadd.f32 %v2423, %v339
    %v2432 = vadd.f32 %v2424, %v343
    %v2433 = vadd.f32 %v2425, %v347
    %v2434 = vtanh.pop %v2426
    %v2435 = vtanh.pop %v2427
    %v2436 = vtanh.pop %v2428
    %v2437 = vtanh.pop %v2429
    %v2438 = vtanh.pop %v2430
    %v2439 = vtanh.pop %v2431
    %v2440 = vtanh.pop %v2432
    %v2441 = vtanh.pop %v2433
    %v2442 = vmul.f32 %v2434, %v255
    %v2443 = vmul.f32 %v2435, %v259
    %v2444 = vmul.f32 %v2436, %v263
    %v2445 = vmul.f32 %v2437, %v267
    %v2446 = vmul.f32 %v2438, %v271
    %v2447 = vmul.f32 %v2439, %v275
    %v2448 = vmul.f32 %v2440, %v279
    %v2449 = vmul.f32 %v2441, %v283
    %v2450 = vadd.f32 %v2442, %v223
    %v2451 = vadd.f32 %v2443, %v227
    %v2452 = vadd.f32 %v2444, %v231
    %v2453 = vadd.f32 %v2445, %v235
    %v2454 = vadd.f32 %v2446, %v239
    %v2455 = vadd.f32 %v2447, %v243
    %v2456 = vadd.f32 %v2448, %v247
    %v2457 = vadd.f32 %v2449, %v251
    %v2458 = vmul.f32 %v2410, %v2450
    %v2459 = vmul.f32 %v2411, %v2451
    %v2460 = vmul.f32 %v2412, %v2452
    %v2461 = vmul.f32 %v2413, %v2453
    %v2462 = vmul.f32 %v2414, %v2454
    %v2463 = vmul.f32 %v2415, %v2455
    %v2464 = vmul.f32 %v2416, %v2456
    %v2465 = vmul.f32 %v2417, %v2457
    %v2466 = vld [vmem:[%s5] sm:$0xff]
    %v2467 = vld [vmem:[%s5 + $0x8] sm:$0xff]
    %v2469 = vsel %vm565, %v2466, 0
    %v2472 = vsel %vm565, %v2467, 0
    %2474 = vmatprep.subr.mxu0 0.0
    %2475 = vmatpush1.msra.mxu0 %v2458
    %2476 = vmatprep.subr.mxu0 0.0
    %2477 = vmatpush1.msra.mxu0 %v2459
    %2478 = vmatprep.subr.mxu0 0.0
    %2479 = vmatpush1.msra.mxu0 %v2460
    %2480 = vmatprep.subr.mxu0 0.0
    %2481 = vmatpush1.msra.mxu0 %v2461
    %2482 = vmatprep.subr.mxu0 0.0
    %2483 = vmatpush1.msra.mxu0 %v2462
    %2484 = vmatprep.subr.mxu0 0.0
    %2485 = vmatpush1.msra.mxu0 %v2463
    %2486 = vmatprep.subr.mxu0 0.0
    %2487 = vmatpush1.msra.mxu0 %v2464
    %2488 = vmatprep.subr.mxu0 0.0
    %2489 = vmatpush1.msra.mxu0 %v2465
    %2490 = vmatprep.subr.mxu0 0.0
    %2491 = vmatpush1.msra.mxu0 0.0
    %2492 = vmatprep.subr.mxu0 0.0
    %2493 = vmatpush1.msra.mxu0 0.0
    %2494 = vmatprep.subr.mxu0 0.0
    %2495 = vmatpush1.msra.mxu0 0.0
    %2496 = vmatprep.subr.mxu0 0.0
    %2497 = vmatpush1.msra.mxu0 0.0
    %2498 = vmatprep.subr.mxu0 0.0
    %2499 = vmatpush1.msra.mxu0 0.0
    %2500 = vmatprep.subr.mxu0 0.0
    %2501 = vmatpush1.msra.mxu0 0.0
    %2502 = vmatprep.subr.mxu0 0.0
    %2503 = vmatpush1.msra.mxu0 0.0
    %2504 = vmatprep.subr.mxu0 0.0
    %2505 = vmatpush1.msra.mxu0 0.0
    %2506 = vmatprep.subr.mxu0 0.0
    %2507 = vmatpush1.msra.mxu0 0.0
    %2508 = vmatprep.subr.mxu0 0.0
    %2509 = vmatpush1.msra.mxu0 0.0
    %2510 = vmatprep.subr.mxu0 0.0
    %2511 = vmatpush1.msra.mxu0 0.0
    %2512 = vmatprep.subr.mxu0 0.0
    %2513 = vmatpush1.msra.mxu0 0.0
    %2514 = vmatprep.subr.mxu0 0.0
    %2515 = vmatpush1.msra.mxu0 0.0
    %2516 = vmatprep.subr.mxu0 0.0
    %2517 = vmatpush1.msra.mxu0 0.0
    %2518 = vmatprep.subr.mxu0 0.0
    %2519 = vmatpush1.msra.mxu0 0.0
    %2520 = vmatprep.subr.mxu0 0.0
    %2521 = vmatpush1.msra.mxu0 0.0
    %2522 = vmatprep.subr.mxu0 0.0
    %2523 = vmatpush1.msra.mxu0 0.0
    %2524 = vmatprep.subr.mxu0 0.0
    %2525 = vmatpush1.msra.mxu0 0.0
    %2526 = vmatprep.subr.mxu0 0.0
    %2527 = vmatpush1.msra.mxu0 0.0
    %2528 = vmatprep.subr.mxu0 0.0
    %2529 = vmatpush1.msra.mxu0 0.0
    %2530 = vmatprep.subr.mxu0 0.0
    %2531 = vmatpush1.msra.mxu0 0.0
    %2532 = vmatprep.subr.mxu0 0.0
    %2533 = vmatpush1.msra.mxu0 0.0
    %2534 = vmatprep.subr.mxu0 0.0
    %2535 = vmatpush1.msra.mxu0 0.0
    %2536 = vmatprep.subr.mxu0 0.0
    %2537 = vmatpush1.msra.mxu0 0.0
    %2538 = vmatprep.mubr.f32.mxu0 0.0
    %2539 = vmatmul.mubr.f32.gmra.mrb[0].mxu0 %v2469
    %v2540 = vpop.f32.mrb[0].mxu0
    %v2541 = vadd.f32 %v558, %v2540
    %v2542 = vpop.f32.mrb[0].mxu0
    %2543 = vmatprep.mubr.f32.mxu0 0.0
    %2544 = vmatmul.mubr.f32.gmra.mrb[0].mxu0 %v2472
    %v2545 = vpop.f32.mrb[0].mxu0
    %v2546 = vadd.f32 %v563, %v2545
    %v2547 = vpop.f32.mrb[0].mxu0
    %2548 = vdwg.mxu0
    %v2549 = vmul.f32 %v2541, %v649
    %v2550 = vmul.f32 %v2546, %v653
    %v2551 = vadd.f32 %v2549, %v659
    %v2552 = vadd.f32 %v2550, %v663
    %v2553 = vtanh.pop %v2551
    %v2554 = vtanh.pop %v2552
    %v2555 = vmul.f32 %v2553, %v671
    %v2556 = vmul.f32 %v2554, %v675
    %v2557 = vadd.f32 %v2555, %v681
    %v2558 = vadd.f32 %v2556, %v685
    %v2559 = vmul.f32 %v2541, %v2557
    %v2560 = vmul.f32 %v2546, %v2558
    %v2561 = vmul.f32 %v694, %v2559
    %v2562 = vmul.f32 %v699, %v2560
    %v2563 = vadd.f32 %v2561, %v2562
    %v2564 = vrot.slane %v2563, 4
    %v2565 = vadd.f32 %v2563, %v2564
    %v2566 = vrot.slane %v2565, 2
    %v2567 = vadd.f32 %v2565, %v2566
    %v2568 = vrot.slane %v2567, 1
    %v2569 = vadd.f32 %v2567, %v2568
    %v2570 = vadd.f32 %v2569, %v713
    %v2571 = vlaneseq
    %v2572 = vshrl.u32 %v2571, 7
    %v2573 = vsub.s32 0, %v2572
    %v2574 = vrot.slane %v2570, %v2573
    %v2575 = vmul.f32 %v2574, %v2268
    %v2576 = vadd.f32 %v2267, %v2575
    %v2577 = vld [vmem:[%s1 + $0x1c] sm:$0xf]
    %2578 = vst [vmem:[%s723] sm:$0xf] %v2577
    %v2579 = vmul.f32 %v30, %v2577
    %2580 = vst [vmem:[%s723 + $0x4] sm:$0xf] %v2579
    %v2581 = vld [vmem:[%s3] sm:$0xff]
    %v2582 = vld [vmem:[%s3 + $0x8] sm:$0xff]
    %v2583 = vld [vmem:[%s3 + $0x10] sm:$0xff]
    %v2584 = vld [vmem:[%s3 + $0x18] sm:$0xff]
    %v2585 = vld [vmem:[%s3 + $0x20] sm:$0xff]
    %v2586 = vld [vmem:[%s3 + $0x28] sm:$0xff]
    %v2587 = vld [vmem:[%s3 + $0x30] sm:$0xff]
    %v2588 = vld [vmem:[%s3 + $0x38] sm:$0xff]
    %v2589 = vld [vmem:[%s723] sm:$0xff]
    %v2591 = vsel %vm367, %v2581, 0
    %v2594 = vsel %vm367, %v2582, 0
    %v2597 = vsel %vm367, %v2583, 0
    %v2600 = vsel %vm367, %v2584, 0
    %v2603 = vsel %vm367, %v2585, 0
    %v2606 = vsel %vm367, %v2586, 0
    %v2609 = vsel %vm367, %v2587, 0
    %v2612 = vsel %vm367, %v2588, 0
    %2614 = vmatprep.subr.mxu0 0.0
    %2615 = vmatpush1.msra.mxu0 %v2589
    %2616 = vmatprep.subr.mxu0 0.0
    %2617 = vmatpush1.msra.mxu0 0.0
    %2618 = vmatprep.subr.mxu0 0.0
    %2619 = vmatpush1.msra.mxu0 0.0
    %2620 = vmatprep.subr.mxu0 0.0
    %2621 = vmatpush1.msra.mxu0 0.0
    %2622 = vmatprep.subr.mxu0 0.0
    %2623 = vmatpush1.msra.mxu0 0.0
    %2624 = vmatprep.subr.mxu0 0.0
    %2625 = vmatpush1.msra.mxu0 0.0
    %2626 = vmatprep.subr.mxu0 0.0
    %2627 = vmatpush1.msra.mxu0 0.0
    %2628 = vmatprep.subr.mxu0 0.0
    %2629 = vmatpush1.msra.mxu0 0.0
    %2630 = vmatprep.subr.mxu0 0.0
    %2631 = vmatpush1.msra.mxu0 0.0
    %2632 = vmatprep.subr.mxu0 0.0
    %2633 = vmatpush1.msra.mxu0 0.0
    %2634 = vmatprep.subr.mxu0 0.0
    %2635 = vmatpush1.msra.mxu0 0.0
    %2636 = vmatprep.subr.mxu0 0.0
    %2637 = vmatpush1.msra.mxu0 0.0
    %2638 = vmatprep.subr.mxu0 0.0
    %2639 = vmatpush1.msra.mxu0 0.0
    %2640 = vmatprep.subr.mxu0 0.0
    %2641 = vmatpush1.msra.mxu0 0.0
    %2642 = vmatprep.subr.mxu0 0.0
    %2643 = vmatpush1.msra.mxu0 0.0
    %2644 = vmatprep.subr.mxu0 0.0
    %2645 = vmatpush1.msra.mxu0 0.0
    %2646 = vmatprep.subr.mxu0 0.0
    %2647 = vmatpush1.msra.mxu0 0.0
    %2648 = vmatprep.subr.mxu0 0.0
    %2649 = vmatpush1.msra.mxu0 0.0
    %2650 = vmatprep.subr.mxu0 0.0
    %2651 = vmatpush1.msra.mxu0 0.0
    %2652 = vmatprep.subr.mxu0 0.0
    %2653 = vmatpush1.msra.mxu0 0.0
    %2654 = vmatprep.subr.mxu0 0.0
    %2655 = vmatpush1.msra.mxu0 0.0
    %2656 = vmatprep.subr.mxu0 0.0
    %2657 = vmatpush1.msra.mxu0 0.0
    %2658 = vmatprep.subr.mxu0 0.0
    %2659 = vmatpush1.msra.mxu0 0.0
    %2660 = vmatprep.subr.mxu0 0.0
    %2661 = vmatpush1.msra.mxu0 0.0
    %2662 = vmatprep.subr.mxu0 0.0
    %2663 = vmatpush1.msra.mxu0 0.0
    %2664 = vmatprep.subr.mxu0 0.0
    %2665 = vmatpush1.msra.mxu0 0.0
    %2666 = vmatprep.subr.mxu0 0.0
    %2667 = vmatpush1.msra.mxu0 0.0
    %2668 = vmatprep.subr.mxu0 0.0
    %2669 = vmatpush1.msra.mxu0 0.0
    %2670 = vmatprep.subr.mxu0 0.0
    %2671 = vmatpush1.msra.mxu0 0.0
    %2672 = vmatprep.subr.mxu0 0.0
    %2673 = vmatpush1.msra.mxu0 0.0
    %2674 = vmatprep.subr.mxu0 0.0
    %2675 = vmatpush1.msra.mxu0 0.0
    %2676 = vmatprep.subr.mxu0 0.0
    %2677 = vmatpush1.msra.mxu0 0.0
    %2678 = vmatprep.mubr.f32.mxu0 0.0
    %2679 = vmatmul.mubr.f32.gmra.mrb[0].mxu0 %v2591
    %v2680 = vpop.f32.mrb[0].mxu0
    %v2681 = vadd.f32 0.0, %v2680
    %v2682 = vpop.f32.mrb[0].mxu0
    %2683 = vmatprep.mubr.f32.mxu0 0.0
    %2684 = vmatmul.mubr.f32.gmra.mrb[0].mxu0 %v2594
    %v2685 = vpop.f32.mrb[0].mxu0
    %v2686 = vadd.f32 0.0, %v2685
    %v2687 = vpop.f32.mrb[0].mxu0
    %2688 = vmatprep.mubr.f32.mxu0 0.0
    %2689 = vmatmul.mubr.f32.gmra.mrb[0].mxu0 %v2597
    %v2690 = vpop.f32.mrb[0].mxu0
    %v2691 = vadd.f32 0.0, %v2690
    %v2692 = vpop.f32.mrb[0].mxu0
    %2693 = vmatprep.mubr.f32.mxu0 0.0
    %2694 = vmatmul.mubr.f32.gmra.mrb[0].mxu0 %v2600
    %v2695 = vpop.f32.mrb[0].mxu0
    %v2696 = vadd.f32 0.0, %v2695
    %v2697 = vpop.f32.mrb[0].mxu0
    %2698 = vmatprep.mubr.f32.mxu0 0.0
    %2699 = vmatmul.mubr.f32.gmra.mrb[0].mxu0 %v2603
    %v2700 = vpop.f32.mrb[0].mxu0
    %v2701 = vadd.f32 0.0, %v2700
    %v2702 = vpop.f32.mrb[0].mxu0
    %2703 = vmatprep.mubr.f32.mxu0 0.0
    %2704 = vmatmul.mubr.f32.gmra.mrb[0].mxu0 %v2606
    %v2705 = vpop.f32.mrb[0].mxu0
    %v2706 = vadd.f32 0.0, %v2705
    %v2707 = vpop.f32.mrb[0].mxu0
    %2708 = vmatprep.mubr.f32.mxu0 0.0
    %2709 = vmatmul.mubr.f32.gmra.mrb[0].mxu0 %v2609
    %v2710 = vpop.f32.mrb[0].mxu0
    %v2711 = vadd.f32 0.0, %v2710
    %v2712 = vpop.f32.mrb[0].mxu0
    %2713 = vmatprep.mubr.f32.mxu0 0.0
    %2714 = vmatmul.mubr.f32.gmra.mrb[0].mxu0 %v2612
    %v2715 = vpop.f32.mrb[0].mxu0
    %v2716 = vadd.f32 0.0, %v2715
    %v2717 = vpop.f32.mrb[0].mxu0
    %2718 = vdwg.mxu0
    %v2719 = vadd.f32 %v183, %v2681
    %v2720 = vadd.f32 %v188, %v2686
    %v2721 = vadd.f32 %v193, %v2691
    %v2722 = vadd.f32 %v198, %v2696
    %v2723 = vadd.f32 %v203, %v2701
    %v2724 = vadd.f32 %v208, %v2706
    %v2725 = vadd.f32 %v213, %v2711
    %v2726 = vadd.f32 %v218, %v2716
    %v2727 = vmul.f32 %v2719, %v287
    %v2728 = vmul.f32 %v2720, %v291
    %v2729 = vmul.f32 %v2721, %v295
    %v2730 = vmul.f32 %v2722, %v299
    %v2731 = vmul.f32 %v2723, %v303
    %v2732 = vmul.f32 %v2724, %v307
    %v2733 = vmul.f32 %v2725, %v311
    %v2734 = vmul.f32 %v2726, %v315
    %v2735 = vadd.f32 %v2727, %v319
    %v2736 = vadd.f32 %v2728, %v323
    %v2737 = vadd.f32 %v2729, %v327
    %v2738 = vadd.f32 %v2730, %v331
    %v2739 = vadd.f32 %v2731, %v335
    %v2740 = vadd.f32 %v2732, %v339
    %v2741 = vadd.f32 %v2733, %v343
    %v2742 = vadd.f32 %v2734, %v347
    %v2743 = vtanh.pop %v2735
    %v2744 = vtanh.pop %v2736
    %v2745 = vtanh.pop %v2737
    %v2746 = vtanh.pop %v2738
    %v2747 = vtanh.pop %v2739
    %v2748 = vtanh.pop %v2740
    %v2749 = vtanh.pop %v2741
    %v2750 = vtanh.pop %v2742
    %v2751 = vmul.f32 %v2743, %v255
    %v2752 = vmul.f32 %v2744, %v259
    %v2753 = vmul.f32 %v2745, %v263
    %v2754 = vmul.f32 %v2746, %v267
    %v2755 = vmul.f32 %v2747, %v271
    %v2756 = vmul.f32 %v2748, %v275
    %v2757 = vmul.f32 %v2749, %v279
    %v2758 = vmul.f32 %v2750, %v283
    %v2759 = vadd.f32 %v2751, %v223
    %v2760 = vadd.f32 %v2752, %v227
    %v2761 = vadd.f32 %v2753, %v231
    %v2762 = vadd.f32 %v2754, %v235
    %v2763 = vadd.f32 %v2755, %v239
    %v2764 = vadd.f32 %v2756, %v243
    %v2765 = vadd.f32 %v2757, %v247
    %v2766 = vadd.f32 %v2758, %v251
    %v2767 = vmul.f32 %v2719, %v2759
    %v2768 = vmul.f32 %v2720, %v2760
    %v2769 = vmul.f32 %v2721, %v2761
    %v2770 = vmul.f32 %v2722, %v2762
    %v2771 = vmul.f32 %v2723, %v2763
    %v2772 = vmul.f32 %v2724, %v2764
    %v2773 = vmul.f32 %v2725, %v2765
    %v2774 = vmul.f32 %v2726, %v2766
    %v2775 = vld [vmem:[%s5] sm:$0xff]
    %v2776 = vld [vmem:[%s5 + $0x8] sm:$0xff]
    %v2778 = vsel %vm565, %v2775, 0
    %v2781 = vsel %vm565, %v2776, 0
    %2783 = vmatprep.subr.mxu0 0.0
    %2784 = vmatpush1.msra.mxu0 %v2767
    %2785 = vmatprep.subr.mxu0 0.0
    %2786 = vmatpush1.msra.mxu0 %v2768
    %2787 = vmatprep.subr.mxu0 0.0
    %2788 = vmatpush1.msra.mxu0 %v2769
    %2789 = vmatprep.subr.mxu0 0.0
    %2790 = vmatpush1.msra.mxu0 %v2770
    %2791 = vmatprep.subr.mxu0 0.0
    %2792 = vmatpush1.msra.mxu0 %v2771
    %2793 = vmatprep.subr.mxu0 0.0
    %2794 = vmatpush1.msra.mxu0 %v2772
    %2795 = vmatprep.subr.mxu0 0.0
    %2796 = vmatpush1.msra.mxu0 %v2773
    %2797 = vmatprep.subr.mxu0 0.0
    %2798 = vmatpush1.msra.mxu0 %v2774
    %2799 = vmatprep.subr.mxu0 0.0
    %2800 = vmatpush1.msra.mxu0 0.0
    %2801 = vmatprep.subr.mxu0 0.0
    %2802 = vmatpush1.msra.mxu0 0.0
    %2803 = vmatprep.subr.mxu0 0.0
    %2804 = vmatpush1.msra.mxu0 0.0
    %2805 = vmatprep.subr.mxu0 0.0
    %2806 = vmatpush1.msra.mxu0 0.0
    %2807 = vmatprep.subr.mxu0 0.0
    %2808 = vmatpush1.msra.mxu0 0.0
    %2809 = vmatprep.subr.mxu0 0.0
    %2810 = vmatpush1.msra.mxu0 0.0
    %2811 = vmatprep.subr.mxu0 0.0
    %2812 = vmatpush1.msra.mxu0 0.0
    %2813 = vmatprep.subr.mxu0 0.0
    %2814 = vmatpush1.msra.mxu0 0.0
    %2815 = vmatprep.subr.mxu0 0.0
    %2816 = vmatpush1.msra.mxu0 0.0
    %2817 = vmatprep.subr.mxu0 0.0
    %2818 = vmatpush1.msra.mxu0 0.0
    %2819 = vmatprep.subr.mxu0 0.0
    %2820 = vmatpush1.msra.mxu0 0.0
    %2821 = vmatprep.subr.mxu0 0.0
    %2822 = vmatpush1.msra.mxu0 0.0
    %2823 = vmatprep.subr.mxu0 0.0
    %2824 = vmatpush1.msra.mxu0 0.0
    %2825 = vmatprep.subr.mxu0 0.0
    %2826 = vmatpush1.msra.mxu0 0.0
    %2827 = vmatprep.subr.mxu0 0.0
    %2828 = vmatpush1.msra.mxu0 0.0
    %2829 = vmatprep.subr.mxu0 0.0
    %2830 = vmatpush1.msra.mxu0 0.0
    %2831 = vmatprep.subr.mxu0 0.0
    %2832 = vmatpush1.msra.mxu0 0.0
    %2833 = vmatprep.subr.mxu0 0.0
    %2834 = vmatpush1.msra.mxu0 0.0
    %2835 = vmatprep.subr.mxu0 0.0
    %2836 = vmatpush1.msra.mxu0 0.0
    %2837 = vmatprep.subr.mxu0 0.0
    %2838 = vmatpush1.msra.mxu0 0.0
    %2839 = vmatprep.subr.mxu0 0.0
    %2840 = vmatpush1.msra.mxu0 0.0
    %2841 = vmatprep.subr.mxu0 0.0
    %2842 = vmatpush1.msra.mxu0 0.0
    %2843 = vmatprep.subr.mxu0 0.0
    %2844 = vmatpush1.msra.mxu0 0.0
    %2845 = vmatprep.subr.mxu0 0.0
    %2846 = vmatpush1.msra.mxu0 0.0
    %2847 = vmatprep.mubr.f32.mxu0 0.0
    %2848 = vmatmul.mubr.f32.gmra.mrb[0].mxu0 %v2778
    %v2849 = vpop.f32.mrb[0].mxu0
    %v2850 = vadd.f32 %v558, %v2849
    %v2851 = vpop.f32.mrb[0].mxu0
    %2852 = vmatprep.mubr.f32.mxu0 0.0
    %2853 = vmatmul.mubr.f32.gmra.mrb[0].mxu0 %v2781
    %v2854 = vpop.f32.mrb[0].mxu0
    %v2855 = vadd.f32 %v563, %v2854
    %v2856 = vpop.f32.mrb[0].mxu0
    %2857 = vdwg.mxu0
    %v2858 = vmul.f32 %v2850, %v649
    %v2859 = vmul.f32 %v2855, %v653
    %v2860 = vadd.f32 %v2858, %v659
    %v2861 = vadd.f32 %v2859, %v663
    %v2862 = vtanh.pop %v2860
    %v2863 = vtanh.pop %v2861
    %v2864 = vmul.f32 %v2862, %v671
    %v2865 = vmul.f32 %v2863, %v675
    %v2866 = vadd.f32 %v2864, %v681
    %v2867 = vadd.f32 %v2865, %v685
    %v2868 = vmul.f32 %v2850, %v2866
    %v2869 = vmul.f32 %v2855, %v2867
    %v2870 = vmul.f32 %v694, %v2868
    %v2871 = vmul.f32 %v699, %v2869
    %v2872 = vadd.f32 %v2870, %v2871
    %v2873 = vrot.slane %v2872, 4
    %v2874 = vadd.f32 %v2872, %v2873
    %v2875 = vrot.slane %v2874, 2
    %v2876 = vadd.f32 %v2874, %v2875
    %v2877 = vrot.slane %v2876, 1
    %v2878 = vadd.f32 %v2876, %v2877
    %v2879 = vadd.f32 %v2878, %v713
    %v2880 = vlaneseq
    %v2881 = vshrl.u32 %v2880, 7
    %v2882 = vsub.s32 0, %v2881
    %v2883 = vrot.slane %v2879, %v2882
    %v2884 = vmul.f32 %v2883, %v2577
    %v2885 = vadd.f32 %v2576, %v2884
    %2886 = vst [vmem:[#allocation3] sm:$0xf] %v2885
    // Predicated region
    $region34: #{tpu_custom_call.1} parent=1 // pred_check
      _
    $region35: #{tpu_custom_call.1} parent=1 // pred_check_branch
      %2888 = sbr.rel (0) target = $region37
    $region36: #{tpu_custom_call.1} parent=1 // pred_region
      %s2890 = ssub.s32 64, 64
      %2891 = vsyncadd [#allocation4], %s2890
      %s2893 = sshll.u32 [#allocation3], 4
      %s2894 = int_to_ptr.vmem [resolvable:$true] %s2893
      %2896 = dma.vmem_to_hbm [thread:$0]  %s2894, 64, %s8, [#allocation4]
    $region37: #{tpu_custom_call.1} parent=1 // pred_fallthru
      _
    // Predicated region
    $region38: #{tpu_custom_call.1} parent=1 // pred_check
      _
    $region39: #{tpu_custom_call.1} parent=1 // pred_check_branch
      %2898 = sbr.rel (0) target = $region41
    $region40: #{tpu_custom_call.1} parent=1 // pred_region
      %2899 = dma.done [#allocation4], 64
    $region41: #{tpu_custom_call.1} parent=1 // pred_fallthru
      _
    %2900 = vsyncpa [#allocation4], 1

</llo_original>
